<compile_context>
chip_gen: v7x
topology: tpu7x:2x2x1
jax: 0.10.0
libtpu: 0.0.40
codegen_flags: <defaults>
</compile_context>

<pallas_src>
import jax
import jax.numpy as jnp
import numpy as np
from jax.experimental import pallas as pl
from jax.experimental.pallas import tpu as pltpu

EMBD = 256
HEAD = 4
HEAD_DIM = EMBD // HEAD        # 64
LN_EPS = 1e-5                  # torch.nn.LayerNorm default


def _layernorm(x, g, b):
    mu = jnp.mean(x, axis=-1, keepdims=True)
    var = jnp.mean((x - mu) ** 2, axis=-1, keepdims=True)   # biased, like torch
    return (x - mu) * jax.lax.rsqrt(var + LN_EPS) * g + b


def encoder_block_kernel(x_ref,
                         ln1_g, ln1_b, wqkv, bqkv, wo, bo,
                         ln2_g, ln2_b, fc_w, fc_b, pr_w, pr_b,
                         o_ref):
    B, S, E = x_ref.shape
    M = B * S

    # Flatten (B, S) -> M for all dense layers (leading-dim merge: layout-free).
    x = x_ref[...].astype(jnp.float32).reshape(M, E)

    # --- ln_1 + fused QKV: one lane-dense (M,256)@(256,768) MXU pass. ---
    # The 1/sqrt(HEAD_DIM) attention scale is pre-folded into the Q columns.
    x1 = _layernorm(x, ln1_g[...], ln1_b[...]).astype(jnp.bfloat16)
    qkv = jnp.dot(x1, wqkv[...], preferred_element_type=jnp.float32) + bqkv[...]
    qkv = qkv.reshape(B, S, 3 * E)          # leading-dim split: layout-free

    # --- multi-head attention (is_causal=False -> no mask). Heads are static
    # 64-wide lane slices of the fused QKV result; scores/softmax stay f32. ---
    ctx_heads = []
    for h in range(HEAD):
        q_h = qkv[:, :, 0 * E + h * HEAD_DIM: 0 * E + (h + 1) * HEAD_DIM]
        k_h = qkv[:, :, 1 * E + h * HEAD_DIM: 1 * E + (h + 1) * HEAD_DIM]
        v_h = qkv[:, :, 2 * E + h * HEAD_DIM: 2 * E + (h + 1) * HEAD_DIM]
        s_h = jnp.einsum('bqd,bkd->bqk',
                         q_h.astype(jnp.bfloat16), k_h.astype(jnp.bfloat16),
                         preferred_element_type=jnp.float32)      # (B, S, S)
        s_h = s_h - jnp.max(s_h, axis=-1, keepdims=True)          # stable softmax
        p_h = jnp.exp(s_h)
        p_h = p_h * pl.reciprocal(jnp.sum(p_h, axis=-1, keepdims=True),
                                  approx=True)
        ctx_heads.append(jnp.einsum('bqk,bkd->bqd',
                                    p_h.astype(jnp.bfloat16),
                                    v_h.astype(jnp.bfloat16),
                                    preferred_element_type=jnp.float32))

    # Lane-concat heads -> (M, 256); out_proj is one (M,256)@(256,256) pass.
    ctx = jnp.concatenate(ctx_heads, axis=-1).reshape(M, E).astype(jnp.bfloat16)
    attn_out = jnp.dot(ctx, wo[...], preferred_element_type=jnp.float32) + bo[...]
    x = x + attn_out                                              # residual 1

    # --- ln_2 + feed-forward (bf16 matmuls, f32 accumulation). ---
    x2 = _layernorm(x, ln2_g[...], ln2_b[...]).astype(jnp.bfloat16)
    h1 = jnp.dot(x2, fc_w[...], preferred_element_type=jnp.float32) + fc_b[...]
    h1 = jnp.maximum(h1, 0.0).astype(jnp.bfloat16)                # ReLU
    h2 = jnp.dot(h1, pr_w[...], preferred_element_type=jnp.float32) + pr_b[...]
    # TODO(synk): Dropout(p=0.1) is stochastic in training; treated as identity
    # (eval-mode semantics) here.
    o_ref[...] = (x + h2).reshape(B, S, E).astype(o_ref.dtype)    # residual 2


def _prep_params(params):
    """Cast params to kernel-friendly form: bf16 matmul weights, f32 biases,
    with the 1/sqrt(HEAD_DIM) scale folded into the Q columns (exact: 1/8)."""
    (ln1_g, ln1_b, qkv_w, qkv_b, wo, bo,
     ln2_g, ln2_b, fc_w, fc_b, pr_w, pr_b) = params

    scale = 1.0 / np.sqrt(np.float32(HEAD_DIM))                    # 1/8, exact
    col_scale = jnp.concatenate([jnp.full((EMBD,), scale, jnp.float32),
                                 jnp.ones((2 * EMBD,), jnp.float32)])

    wqkv = (qkv_w * col_scale[None, :]).astype(jnp.bfloat16)       # (E, 3E)
    bqkv = (qkv_b.reshape(1, -1) * col_scale[None, :]).astype(jnp.float32)

    return (ln1_g.astype(jnp.float32), ln1_b.astype(jnp.float32),
            wqkv, bqkv,
            wo.astype(jnp.bfloat16), bo.reshape(1, -1).astype(jnp.float32),
            ln2_g.astype(jnp.float32), ln2_b.astype(jnp.float32),
            fc_w.astype(jnp.bfloat16), fc_b.reshape(1, -1).astype(jnp.float32),
            pr_w.astype(jnp.bfloat16), pr_b.reshape(1, -1).astype(jnp.float32))


def encoder_block(x, params):
    B, S, E = x.shape
    assert E == EMBD

    kparams = _prep_params(params)
    n_in = 1 + len(kparams)

    vmem_spec = pl.BlockSpec(memory_space=pltpu.MemorySpace.VMEM)

    # Single grid step: weights stream into VMEM exactly once (~1.5 MiB bf16),
    # the whole batch is one set of lane-dense matmuls.
    return pl.pallas_call(
        encoder_block_kernel,
        out_shape=jax.ShapeDtypeStruct((B, S, E), x.dtype),
        in_specs=[vmem_spec] * n_in,
        out_specs=vmem_spec,
        compiler_params=pltpu.CompilerParams(
            vmem_limit_bytes=32 << 20,   # actual footprint is a few MiB; stays
                                         # well under v7x's 64 MiB physical VMEM
        ),
    )(x, *kparams)


def encoder_block_ref(x, params):
    """Pure-JAX f32 reference mirroring the PyTorch forward (eval mode)."""
    (ln1_g, ln1_b, qkv_w, qkv_b, wo, bo,
     ln2_g, ln2_b, fc_w, fc_b, pr_w, pr_b) = params
    B, S, E = x.shape
    x1 = _layernorm(x, ln1_g, ln1_b)
    qkv = x1 @ qkv_w + qkv_b
    q, k, v = jnp.split(qkv, 3, axis=-1)
    q = q.reshape(B, S, HEAD, HEAD_DIM).transpose(0, 2, 1, 3)
    k = k.reshape(B, S, HEAD, HEAD_DIM).transpose(0, 2, 1, 3)
    v = v.reshape(B, S, HEAD, HEAD_DIM).transpose(0, 2, 1, 3)
    att = (q @ jnp.swapaxes(k, -1, -2)) / jnp.sqrt(jnp.float32(HEAD_DIM))
    att = jax.nn.softmax(att, axis=-1)
    out = (att @ v).transpose(0, 2, 1, 3).reshape(B, S, E)
    x = x + (out @ wo + bo)
    x2 = _layernorm(x, ln2_g, ln2_b)
    h = jnp.maximum(x2 @ fc_w + fc_b, 0.0)
    return x + (h @ pr_w + pr_b)


def init_params(key):
    ks = jax.random.split(key, 12)
    s = 0.02
    ln1_g = 1.0 + s * jax.random.normal(ks[0], (1, EMBD), jnp.float32)
    ln1_b = s * jax.random.normal(ks[1], (1, EMBD), jnp.float32)
    qkv_w = s * jax.random.normal(ks[2], (EMBD, 3 * EMBD), jnp.float32)
    qkv_b = s * jax.random.normal(ks[3], (1, 3 * EMBD), jnp.float32)
    wo = s * jax.random.normal(ks[4], (EMBD, EMBD), jnp.float32)
    bo = s * jax.random.normal(ks[5], (1, EMBD), jnp.float32)
    ln2_g = 1.0 + s * jax.random.normal(ks[6], (1, EMBD), jnp.float32)
    ln2_b = s * jax.random.normal(ks[7], (1, EMBD), jnp.float32)
    fc_w = s * jax.random.normal(ks[8], (EMBD, 4 * EMBD), jnp.float32)
    fc_b = s * jax.random.normal(ks[9], (1, 4 * EMBD), jnp.float32)
    pr_w = s * jax.random.normal(ks[10], (4 * EMBD, EMBD), jnp.float32)
    pr_b = s * jax.random.normal(ks[11], (1, EMBD), jnp.float32)
    return (ln1_g, ln1_b, qkv_w, qkv_b, wo, bo,
            ln2_g, ln2_b, fc_w, fc_b, pr_w, pr_b)


if __name__ == "__main__":
    key = jax.random.PRNGKey(0)
    k_x, k_p = jax.random.split(key)

    B, S = 2, 8                                # small shapes; EMBD fixed at 256
    x = jax.random.normal(k_x, (B, S, EMBD), jnp.float32)
    params = init_params(k_p)

    out = encoder_block(x, params)
    out = jax.block_until_ready(out)

    ref = jax.block_until_ready(encoder_block_ref(x, params))
    # bf16 matmul operands + approximate softmax reciprocal vs. pure-f32 ref.
    np.testing.assert_allclose(np.asarray(out), np.asarray(ref),
                               rtol=1e-2, atol=1e-2)
    print("KERNEL_OK")
</pallas_src>

<mosaic_0001>
module attributes {stable_mosaic.version = 11 : i64} {
  func.func @encoder_block_kernel(%arg0: memref<2x8x256xf32, #tpu.memory_space<vmem>>, %arg1: memref<1x256xf32, #tpu.memory_space<vmem>>, %arg2: memref<1x256xf32, #tpu.memory_space<vmem>>, %arg3: memref<256x768xbf16, #tpu.memory_space<vmem>>, %arg4: memref<1x768xf32, #tpu.memory_space<vmem>>, %arg5: memref<256x256xbf16, #tpu.memory_space<vmem>>, %arg6: memref<1x256xf32, #tpu.memory_space<vmem>>, %arg7: memref<1x256xf32, #tpu.memory_space<vmem>>, %arg8: memref<1x256xf32, #tpu.memory_space<vmem>>, %arg9: memref<256x1024xbf16, #tpu.memory_space<vmem>>, %arg10: memref<1x1024xf32, #tpu.memory_space<vmem>>, %arg11: memref<1024x256xbf16, #tpu.memory_space<vmem>>, %arg12: memref<1x256xf32, #tpu.memory_space<vmem>>, %arg13: memref<2x8x256xf32, #tpu.memory_space<vmem>>) attributes {dimension_semantics = [], scalar_prefetch = 0 : i64, scratch_operands = 0 : i64, tpu.core_type = #tpu.core_type<tc>} {
    %c0 = arith.constant 0 : index
    %c0_0 = arith.constant 0 : index
    %c0_1 = arith.constant 0 : index
    %0 = vector.load %arg0[%c0, %c0_0, %c0_1] : memref<2x8x256xf32, #tpu.memory_space<vmem>>, vector<2x8x256xf32>
    %1 = vector.shape_cast %0 : vector<2x8x256xf32> to vector<16x256xf32>
    %c0_2 = arith.constant 0 : index
    %c0_3 = arith.constant 0 : index
    %2 = vector.load %arg1[%c0_2, %c0_3] : memref<1x256xf32, #tpu.memory_space<vmem>>, vector<1x256xf32>
    %c0_4 = arith.constant 0 : index
    %c0_5 = arith.constant 0 : index
    %3 = vector.load %arg2[%c0_4, %c0_5] : memref<1x256xf32, #tpu.memory_space<vmem>>, vector<1x256xf32>
    %cst = arith.constant dense<0.000000e+00> : vector<16xf32>
    %4 = vector.multi_reduction <add>, %1, %cst [1] : vector<16x256xf32> to vector<16xf32>
    %5 = vector.shape_cast %4 : vector<16xf32> to vector<16x1xf32>
    %cst_6 = arith.constant 2.560000e+02 : f32
    %6 = vector.broadcast %cst_6 : f32 to vector<16x1xf32>
    %7 = arith.divf %5, %6 : vector<16x1xf32>
    %8 = vector.broadcast %7 : vector<16x1xf32> to vector<16x256xf32>
    %9 = arith.subf %1, %8 : vector<16x256xf32>
    %10 = arith.mulf %9, %9 : vector<16x256xf32>
    %cst_7 = arith.constant dense<0.000000e+00> : vector<16xf32>
    %11 = vector.multi_reduction <add>, %10, %cst_7 [1] : vector<16x256xf32> to vector<16xf32>
    %12 = vector.shape_cast %11 : vector<16xf32> to vector<16x1xf32>
    %cst_8 = arith.constant 2.560000e+02 : f32
    %13 = vector.broadcast %cst_8 : f32 to vector<16x1xf32>
    %14 = arith.divf %12, %13 : vector<16x1xf32>
    %15 = vector.broadcast %7 : vector<16x1xf32> to vector<16x256xf32>
    %16 = arith.subf %1, %15 : vector<16x256xf32>
    %cst_9 = arith.constant 9.99999974E-6 : f32
    %17 = vector.broadcast %cst_9 : f32 to vector<16x1xf32>
    %18 = arith.addf %14, %17 : vector<16x1xf32>
    %19 = math.rsqrt %18 : vector<16x1xf32>
    %20 = vector.broadcast %19 : vector<16x1xf32> to vector<16x256xf32>
    %21 = arith.mulf %16, %20 : vector<16x256xf32>
    %22 = vector.broadcast %2 : vector<1x256xf32> to vector<16x256xf32>
    %23 = arith.mulf %21, %22 : vector<16x256xf32>
    %24 = vector.broadcast %3 : vector<1x256xf32> to vector<16x256xf32>
    %25 = arith.addf %23, %24 : vector<16x256xf32>
    %26 = arith.truncf %25 : vector<16x256xf32> to vector<16x256xbf16>
    %c0_10 = arith.constant 0 : index
    %c0_11 = arith.constant 0 : index
    %27 = vector.load %arg3[%c0_10, %c0_11] : memref<256x768xbf16, #tpu.memory_space<vmem>>, vector<256x768xbf16>
    %cst_12 = arith.constant dense<0.000000e+00> : vector<16x768xf32>
    %28 = tpu.matmul %26, %27, %cst_12 {dimension_numbers = #tpu.dot_dimension_numbers<[1], [0], [0], [1], [0, 0, 1, 1], [], []>} : vector<16x256xbf16>, vector<256x768xbf16>, vector<16x768xf32> -> vector<16x768xf32>
    %c0_13 = arith.constant 0 : index
    %c0_14 = arith.constant 0 : index
    %29 = vector.load %arg4[%c0_13, %c0_14] : memref<1x768xf32, #tpu.memory_space<vmem>>, vector<1x768xf32>
    %30 = vector.broadcast %29 : vector<1x768xf32> to vector<16x768xf32>
    %31 = arith.addf %28, %30 : vector<16x768xf32>
    %32 = vector.shape_cast %31 : vector<16x768xf32> to vector<2x8x768xf32>
    %33 = vector.extract_strided_slice %32 {offsets = [0, 0, 0], sizes = [2, 8, 64], strides = [1, 1, 1]} : vector<2x8x768xf32> to vector<2x8x64xf32>
    %34 = vector.extract_strided_slice %32 {offsets = [0, 0, 256], sizes = [2, 8, 64], strides = [1, 1, 1]} : vector<2x8x768xf32> to vector<2x8x64xf32>
    %35 = vector.extract_strided_slice %32 {offsets = [0, 0, 512], sizes = [2, 8, 64], strides = [1, 1, 1]} : vector<2x8x768xf32> to vector<2x8x64xf32>
    %36 = arith.truncf %33 : vector<2x8x64xf32> to vector<2x8x64xbf16>
    %37 = arith.truncf %34 : vector<2x8x64xf32> to vector<2x8x64xbf16>
    "tpu.trace_start"() <{level = 10 : i32, message = "bqd,bkd->bqk"}> : () -> ()
    %cst_15 = arith.constant dense<0.000000e+00> : vector<2x8x8xf32>
    %38 = tpu.matmul %36, %37, %cst_15 {dimension_numbers = #tpu.dot_dimension_numbers<[2], [2], [1], [1], [0, 0, 0, 1, 1, 1], [0], [0]>} : vector<2x8x64xbf16>, vector<2x8x64xbf16>, vector<2x8x8xf32> -> vector<2x8x8xf32>
    "tpu.trace_stop"() : () -> ()
    %cst_16 = arith.constant dense<0xFF800000> : vector<2x8xf32>
    %39 = vector.multi_reduction <maximumf>, %38, %cst_16 [2] : vector<2x8x8xf32> to vector<2x8xf32>
    %40 = vector.shape_cast %39 : vector<2x8xf32> to vector<2x8x1xf32>
    %41 = vector.broadcast %40 : vector<2x8x1xf32> to vector<2x8x8xf32>
    %42 = arith.subf %38, %41 : vector<2x8x8xf32>
    %43 = math.exp %42 : vector<2x8x8xf32>
    %cst_17 = arith.constant dense<0.000000e+00> : vector<2x8xf32>
    %44 = vector.multi_reduction <add>, %43, %cst_17 [2] : vector<2x8x8xf32> to vector<2x8xf32>
    %45 = vector.shape_cast %44 : vector<2x8xf32> to vector<2x8x1xf32>
    %46 = tpu.reciprocal %45 {approx = true} : vector<2x8x1xf32> -> vector<2x8x1xf32>
    %47 = vector.broadcast %46 : vector<2x8x1xf32> to vector<2x8x8xf32>
    %48 = arith.mulf %43, %47 : vector<2x8x8xf32>
    %49 = arith.truncf %48 : vector<2x8x8xf32> to vector<2x8x8xbf16>
    %50 = arith.truncf %35 : vector<2x8x64xf32> to vector<2x8x64xbf16>
    "tpu.trace_start"() <{level = 10 : i32, message = "bqk,bkd->bqd"}> : () -> ()
    %cst_18 = arith.constant dense<0.000000e+00> : vector<2x8x64xf32>
    %51 = tpu.matmul %49, %50, %cst_18 {dimension_numbers = #tpu.dot_dimension_numbers<[2], [1], [1], [2], [0, 0, 0, 1, 1, 2], [0], [0]>} : vector<2x8x8xbf16>, vector<2x8x64xbf16>, vector<2x8x64xf32> -> vector<2x8x64xf32>
    "tpu.trace_stop"() : () -> ()
    %52 = vector.extract_strided_slice %32 {offsets = [0, 0, 64], sizes = [2, 8, 64], strides = [1, 1, 1]} : vector<2x8x768xf32> to vector<2x8x64xf32>
    %53 = vector.extract_strided_slice %32 {offsets = [0, 0, 320], sizes = [2, 8, 64], strides = [1, 1, 1]} : vector<2x8x768xf32> to vector<2x8x64xf32>
    %54 = vector.extract_strided_slice %32 {offsets = [0, 0, 576], sizes = [2, 8, 64], strides = [1, 1, 1]} : vector<2x8x768xf32> to vector<2x8x64xf32>
    %55 = arith.truncf %52 : vector<2x8x64xf32> to vector<2x8x64xbf16>
    %56 = arith.truncf %53 : vector<2x8x64xf32> to vector<2x8x64xbf16>
    "tpu.trace_start"() <{level = 10 : i32, message = "bqd,bkd->bqk"}> : () -> ()
    %cst_19 = arith.constant dense<0.000000e+00> : vector<2x8x8xf32>
    %57 = tpu.matmul %55, %56, %cst_19 {dimension_numbers = #tpu.dot_dimension_numbers<[2], [2], [1], [1], [0, 0, 0, 1, 1, 1], [0], [0]>} : vector<2x8x64xbf16>, vector<2x8x64xbf16>, vector<2x8x8xf32> -> vector<2x8x8xf32>
    "tpu.trace_stop"() : () -> ()
    %cst_20 = arith.constant dense<0xFF800000> : vector<2x8xf32>
    %58 = vector.multi_reduction <maximumf>, %57, %cst_20 [2] : vector<2x8x8xf32> to vector<2x8xf32>
    %59 = vector.shape_cast %58 : vector<2x8xf32> to vector<2x8x1xf32>
    %60 = vector.broadcast %59 : vector<2x8x1xf32> to vector<2x8x8xf32>
    %61 = arith.subf %57, %60 : vector<2x8x8xf32>
    %62 = math.exp %61 : vector<2x8x8xf32>
    %cst_21 = arith.constant dense<0.000000e+00> : vector<2x8xf32>
    %63 = vector.multi_reduction <add>, %62, %cst_21 [2] : vector<2x8x8xf32> to vector<2x8xf32>
    %64 = vector.shape_cast %63 : vector<2x8xf32> to vector<2x8x1xf32>
    %65 = tpu.reciprocal %64 {approx = true} : vector<2x8x1xf32> -> vector<2x8x1xf32>
    %66 = vector.broadcast %65 : vector<2x8x1xf32> to vector<2x8x8xf32>
    %67 = arith.mulf %62, %66 : vector<2x8x8xf32>
    %68 = arith.truncf %67 : vector<2x8x8xf32> to vector<2x8x8xbf16>
    %69 = arith.truncf %54 : vector<2x8x64xf32> to vector<2x8x64xbf16>
    "tpu.trace_start"() <{level = 10 : i32, message = "bqk,bkd->bqd"}> : () -> ()
    %cst_22 = arith.constant dense<0.000000e+00> : vector<2x8x64xf32>
    %70 = tpu.matmul %68, %69, %cst_22 {dimension_numbers = #tpu.dot_dimension_numbers<[2], [1], [1], [2], [0, 0, 0, 1, 1, 2], [0], [0]>} : vector<2x8x8xbf16>, vector<2x8x64xbf16>, vector<2x8x64xf32> -> vector<2x8x64xf32>
    "tpu.trace_stop"() : () -> ()
    %71 = vector.extract_strided_slice %32 {offsets = [0, 0, 128], sizes = [2, 8, 64], strides = [1, 1, 1]} : vector<2x8x768xf32> to vector<2x8x64xf32>
    %72 = vector.extract_strided_slice %32 {offsets = [0, 0, 384], sizes = [2, 8, 64], strides = [1, 1, 1]} : vector<2x8x768xf32> to vector<2x8x64xf32>
    %73 = vector.extract_strided_slice %32 {offsets = [0, 0, 640], sizes = [2, 8, 64], strides = [1, 1, 1]} : vector<2x8x768xf32> to vector<2x8x64xf32>
    %74 = arith.truncf %71 : vector<2x8x64xf32> to vector<2x8x64xbf16>
    %75 = arith.truncf %72 : vector<2x8x64xf32> to vector<2x8x64xbf16>
    "tpu.trace_start"() <{level = 10 : i32, message = "bqd,bkd->bqk"}> : () -> ()
    %cst_23 = arith.constant dense<0.000000e+00> : vector<2x8x8xf32>
    %76 = tpu.matmul %74, %75, %cst_23 {dimension_numbers = #tpu.dot_dimension_numbers<[2], [2], [1], [1], [0, 0, 0, 1, 1, 1], [0], [0]>} : vector<2x8x64xbf16>, vector<2x8x64xbf16>, vector<2x8x8xf32> -> vector<2x8x8xf32>
    "tpu.trace_stop"() : () -> ()
    %cst_24 = arith.constant dense<0xFF800000> : vector<2x8xf32>
    %77 = vector.multi_reduction <maximumf>, %76, %cst_24 [2] : vector<2x8x8xf32> to vector<2x8xf32>
    %78 = vector.shape_cast %77 : vector<2x8xf32> to vector<2x8x1xf32>
    %79 = vector.broadcast %78 : vector<2x8x1xf32> to vector<2x8x8xf32>
    %80 = arith.subf %76, %79 : vector<2x8x8xf32>
    %81 = math.exp %80 : vector<2x8x8xf32>
    %cst_25 = arith.constant dense<0.000000e+00> : vector<2x8xf32>
    %82 = vector.multi_reduction <add>, %81, %cst_25 [2] : vector<2x8x8xf32> to vector<2x8xf32>
    %83 = vector.shape_cast %82 : vector<2x8xf32> to vector<2x8x1xf32>
    %84 = tpu.reciprocal %83 {approx = true} : vector<2x8x1xf32> -> vector<2x8x1xf32>
    %85 = vector.broadcast %84 : vector<2x8x1xf32> to vector<2x8x8xf32>
    %86 = arith.mulf %81, %85 : vector<2x8x8xf32>
    %87 = arith.truncf %86 : vector<2x8x8xf32> to vector<2x8x8xbf16>
    %88 = arith.truncf %73 : vector<2x8x64xf32> to vector<2x8x64xbf16>
    "tpu.trace_start"() <{level = 10 : i32, message = "bqk,bkd->bqd"}> : () -> ()
    %cst_26 = arith.constant dense<0.000000e+00> : vector<2x8x64xf32>
    %89 = tpu.matmul %87, %88, %cst_26 {dimension_numbers = #tpu.dot_dimension_numbers<[2], [1], [1], [2], [0, 0, 0, 1, 1, 2], [0], [0]>} : vector<2x8x8xbf16>, vector<2x8x64xbf16>, vector<2x8x64xf32> -> vector<2x8x64xf32>
    "tpu.trace_stop"() : () -> ()
    %90 = vector.extract_strided_slice %32 {offsets = [0, 0, 192], sizes = [2, 8, 64], strides = [1, 1, 1]} : vector<2x8x768xf32> to vector<2x8x64xf32>
    %91 = vector.extract_strided_slice %32 {offsets = [0, 0, 448], sizes = [2, 8, 64], strides = [1, 1, 1]} : vector<2x8x768xf32> to vector<2x8x64xf32>
    %92 = vector.extract_strided_slice %32 {offsets = [0, 0, 704], sizes = [2, 8, 64], strides = [1, 1, 1]} : vector<2x8x768xf32> to vector<2x8x64xf32>
    %93 = arith.truncf %90 : vector<2x8x64xf32> to vector<2x8x64xbf16>
    %94 = arith.truncf %91 : vector<2x8x64xf32> to vector<2x8x64xbf16>
    "tpu.trace_start"() <{level = 10 : i32, message = "bqd,bkd->bqk"}> : () -> ()
    %cst_27 = arith.constant dense<0.000000e+00> : vector<2x8x8xf32>
    %95 = tpu.matmul %93, %94, %cst_27 {dimension_numbers = #tpu.dot_dimension_numbers<[2], [2], [1], [1], [0, 0, 0, 1, 1, 1], [0], [0]>} : vector<2x8x64xbf16>, vector<2x8x64xbf16>, vector<2x8x8xf32> -> vector<2x8x8xf32>
    "tpu.trace_stop"() : () -> ()
    %cst_28 = arith.constant dense<0xFF800000> : vector<2x8xf32>
    %96 = vector.multi_reduction <maximumf>, %95, %cst_28 [2] : vector<2x8x8xf32> to vector<2x8xf32>
    %97 = vector.shape_cast %96 : vector<2x8xf32> to vector<2x8x1xf32>
    %98 = vector.broadcast %97 : vector<2x8x1xf32> to vector<2x8x8xf32>
    %99 = arith.subf %95, %98 : vector<2x8x8xf32>
    %100 = math.exp %99 : vector<2x8x8xf32>
    %cst_29 = arith.constant dense<0.000000e+00> : vector<2x8xf32>
    %101 = vector.multi_reduction <add>, %100, %cst_29 [2] : vector<2x8x8xf32> to vector<2x8xf32>
    %102 = vector.shape_cast %101 : vector<2x8xf32> to vector<2x8x1xf32>
    %103 = tpu.reciprocal %102 {approx = true} : vector<2x8x1xf32> -> vector<2x8x1xf32>
    %104 = vector.broadcast %103 : vector<2x8x1xf32> to vector<2x8x8xf32>
    %105 = arith.mulf %100, %104 : vector<2x8x8xf32>
    %106 = arith.truncf %105 : vector<2x8x8xf32> to vector<2x8x8xbf16>
    %107 = arith.truncf %92 : vector<2x8x64xf32> to vector<2x8x64xbf16>
    "tpu.trace_start"() <{level = 10 : i32, message = "bqk,bkd->bqd"}> : () -> ()
    %cst_30 = arith.constant dense<0.000000e+00> : vector<2x8x64xf32>
    %108 = tpu.matmul %106, %107, %cst_30 {dimension_numbers = #tpu.dot_dimension_numbers<[2], [1], [1], [2], [0, 0, 0, 1, 1, 2], [0], [0]>} : vector<2x8x8xbf16>, vector<2x8x64xbf16>, vector<2x8x64xf32> -> vector<2x8x64xf32>
    "tpu.trace_stop"() : () -> ()
    %109 = tpu.concatenate %51, %70, %89, %108 in 2 : vector<2x8x64xf32>, vector<2x8x64xf32>, vector<2x8x64xf32>, vector<2x8x64xf32> -> vector<2x8x256xf32>
    %110 = vector.shape_cast %109 : vector<2x8x256xf32> to vector<16x256xf32>
    %111 = arith.truncf %110 : vector<16x256xf32> to vector<16x256xbf16>
    %c0_31 = arith.constant 0 : index
    %c0_32 = arith.constant 0 : index
    %112 = vector.load %arg5[%c0_31, %c0_32] : memref<256x256xbf16, #tpu.memory_space<vmem>>, vector<256x256xbf16>
    %cst_33 = arith.constant dense<0.000000e+00> : vector<16x256xf32>
    %113 = tpu.matmul %111, %112, %cst_33 {dimension_numbers = #tpu.dot_dimension_numbers<[1], [0], [0], [1], [0, 0, 1, 1], [], []>} : vector<16x256xbf16>, vector<256x256xbf16>, vector<16x256xf32> -> vector<16x256xf32>
    %c0_34 = arith.constant 0 : index
    %c0_35 = arith.constant 0 : index
    %114 = vector.load %arg6[%c0_34, %c0_35] : memref<1x256xf32, #tpu.memory_space<vmem>>, vector<1x256xf32>
    %115 = vector.broadcast %114 : vector<1x256xf32> to vector<16x256xf32>
    %116 = arith.addf %113, %115 : vector<16x256xf32>
    %117 = arith.addf %1, %116 : vector<16x256xf32>
    %c0_36 = arith.constant 0 : index
    %c0_37 = arith.constant 0 : index
    %118 = vector.load %arg7[%c0_36, %c0_37] : memref<1x256xf32, #tpu.memory_space<vmem>>, vector<1x256xf32>
    %c0_38 = arith.constant 0 : index
    %c0_39 = arith.constant 0 : index
    %119 = vector.load %arg8[%c0_38, %c0_39] : memref<1x256xf32, #tpu.memory_space<vmem>>, vector<1x256xf32>
    %cst_40 = arith.constant dense<0.000000e+00> : vector<16xf32>
    %120 = vector.multi_reduction <add>, %117, %cst_40 [1] : vector<16x256xf32> to vector<16xf32>
    %121 = vector.shape_cast %120 : vector<16xf32> to vector<16x1xf32>
    %cst_41 = arith.constant 2.560000e+02 : f32
    %122 = vector.broadcast %cst_41 : f32 to vector<16x1xf32>
    %123 = arith.divf %121, %122 : vector<16x1xf32>
    %124 = vector.broadcast %123 : vector<16x1xf32> to vector<16x256xf32>
    %125 = arith.subf %117, %124 : vector<16x256xf32>
    %126 = arith.mulf %125, %125 : vector<16x256xf32>
    %cst_42 = arith.constant dense<0.000000e+00> : vector<16xf32>
    %127 = vector.multi_reduction <add>, %126, %cst_42 [1] : vector<16x256xf32> to vector<16xf32>
    %128 = vector.shape_cast %127 : vector<16xf32> to vector<16x1xf32>
    %cst_43 = arith.constant 2.560000e+02 : f32
    %129 = vector.broadcast %cst_43 : f32 to vector<16x1xf32>
    %130 = arith.divf %128, %129 : vector<16x1xf32>
    %131 = vector.broadcast %123 : vector<16x1xf32> to vector<16x256xf32>
    %132 = arith.subf %117, %131 : vector<16x256xf32>
    %cst_44 = arith.constant 9.99999974E-6 : f32
    %133 = vector.broadcast %cst_44 : f32 to vector<16x1xf32>
    %134 = arith.addf %130, %133 : vector<16x1xf32>
    %135 = math.rsqrt %134 : vector<16x1xf32>
    %136 = vector.broadcast %135 : vector<16x1xf32> to vector<16x256xf32>
    %137 = arith.mulf %132, %136 : vector<16x256xf32>
    %138 = vector.broadcast %118 : vector<1x256xf32> to vector<16x256xf32>
    %139 = arith.mulf %137, %138 : vector<16x256xf32>
    %140 = vector.broadcast %119 : vector<1x256xf32> to vector<16x256xf32>
    %141 = arith.addf %139, %140 : vector<16x256xf32>
    %142 = arith.truncf %141 : vector<16x256xf32> to vector<16x256xbf16>
    %c0_45 = arith.constant 0 : index
    %c0_46 = arith.constant 0 : index
    %143 = vector.load %arg9[%c0_45, %c0_46] : memref<256x1024xbf16, #tpu.memory_space<vmem>>, vector<256x1024xbf16>
    %cst_47 = arith.constant dense<0.000000e+00> : vector<16x1024xf32>
    %144 = tpu.matmul %142, %143, %cst_47 {dimension_numbers = #tpu.dot_dimension_numbers<[1], [0], [0], [1], [0, 0, 1, 1], [], []>} : vector<16x256xbf16>, vector<256x1024xbf16>, vector<16x1024xf32> -> vector<16x1024xf32>
    %c0_48 = arith.constant 0 : index
    %c0_49 = arith.constant 0 : index
    %145 = vector.load %arg10[%c0_48, %c0_49] : memref<1x1024xf32, #tpu.memory_space<vmem>>, vector<1x1024xf32>
    %146 = vector.broadcast %145 : vector<1x1024xf32> to vector<16x1024xf32>
    %147 = arith.addf %144, %146 : vector<16x1024xf32>
    %cst_50 = arith.constant 0.000000e+00 : f32
    %148 = vector.broadcast %cst_50 : f32 to vector<16x1024xf32>
    %149 = arith.maximumf %147, %148 : vector<16x1024xf32>
    %150 = arith.truncf %149 : vector<16x1024xf32> to vector<16x1024xbf16>
    %c0_51 = arith.constant 0 : index
    %c0_52 = arith.constant 0 : index
    %151 = vector.load %arg11[%c0_51, %c0_52] : memref<1024x256xbf16, #tpu.memory_space<vmem>>, vector<1024x256xbf16>
    %cst_53 = arith.constant dense<0.000000e+00> : vector<16x256xf32>
    %152 = tpu.matmul %150, %151, %cst_53 {dimension_numbers = #tpu.dot_dimension_numbers<[1], [0], [0], [1], [0, 0, 1, 1], [], []>} : vector<16x1024xbf16>, vector<1024x256xbf16>, vector<16x256xf32> -> vector<16x256xf32>
    %c0_54 = arith.constant 0 : index
    %c0_55 = arith.constant 0 : index
    %153 = vector.load %arg12[%c0_54, %c0_55] : memref<1x256xf32, #tpu.memory_space<vmem>>, vector<1x256xf32>
    %154 = vector.broadcast %153 : vector<1x256xf32> to vector<16x256xf32>
    %155 = arith.addf %152, %154 : vector<16x256xf32>
    %156 = arith.addf %117, %155 : vector<16x256xf32>
    %157 = vector.shape_cast %156 : vector<16x256xf32> to vector<2x8x256xf32>
    %c0_56 = arith.constant 0 : index
    %c0_57 = arith.constant 0 : index
    %c0_58 = arith.constant 0 : index
    %158 = vector.load %arg13[%c0_56, %c0_57, %c0_58] : memref<2x8x256xf32, #tpu.memory_space<vmem>>, vector<2x8x256xf32>
    tpu.vector_store %arg13[%c0_56, %c0_57, %c0_58], %157 {strides = array<i32>} : memref<2x8x256xf32, #tpu.memory_space<vmem>>, vector<2x8x256xf32>,
    return
  }
}

</mosaic_0001>

<llo_original>
// kernel: tpu_custom_call.1
$region0: #{tpu_custom_call.1}
  #allocation0 [shape = 'u32[]', space=smem, size = 0x4, offset = 0x4, fixed_abs, tag = 'smem constant byte address 0x4 - core index']
  #allocation1 [shape = 'u32[144,128]{1,0:T(1,128)}', space=vmem, size = 0x12000, scoped, tag = 'internal scratch']
  %s0 = inlined_call_operand.hbm [shape: f32[2,8,256], index: 0, kind: input, shape index: {}]
  %s1 = inlined_call_operand.hbm [shape: f32[1,256], index: 1, kind: input, shape index: {}]
  %s2 = inlined_call_operand.hbm [shape: f32[1,256], index: 2, kind: input, shape index: {}]
  %s3 = inlined_call_operand.hbm [shape: bf16[256,768], index: 3, kind: input, shape index: {}]
  %s4 = inlined_call_operand.vmem [shape: f32[1,768], index: 4, kind: input, shape index: {}]
  %s5 = inlined_call_operand.hbm [shape: bf16[256,256], index: 5, kind: input, shape index: {}]
  %s6 = inlined_call_operand.vmem [shape: f32[1,256], index: 6, kind: input, shape index: {}]
  %s7 = inlined_call_operand.vmem [shape: f32[1,256], index: 7, kind: input, shape index: {}]
  %s8 = inlined_call_operand.vmem [shape: f32[1,256], index: 8, kind: input, shape index: {}]
  %s9 = inlined_call_operand.hbm [shape: bf16[256,1024], index: 9, kind: input, shape index: {}]
  %s10 = inlined_call_operand.vmem [shape: f32[1,1024], index: 10, kind: input, shape index: {}]
  %s11 = inlined_call_operand.hbm [shape: bf16[1024,256], index: 11, kind: input, shape index: {}]
  %s12 = inlined_call_operand.vmem [shape: f32[1,256], index: 12, kind: input, shape index: {}]
  %s13 = inlined_call_operand.hbm [shape: f32[2,8,256], index: 13, kind: output, shape index: {}]
  %s14 = sld [smem:[#allocation0]]
  $region90: #{tpu_custom_call.1} parent=0
    _
  %s16 = ssub.s32 1, %s14
  %s17 = scalar_select 0, %s16, %s14
  $region1: #{tpu_custom_call.1} parent=0
    #allocation2 [shape = 'u8[16384]{0}', space=vmem, size = 0x4000, scoped, tag = 'input window, operand 0, single buffered']
    #allocation3 [shape = 's32[1]{0}', space=sflag, size = 0x4, scoped, tag = 'scoped memory for tpu_custom_call.1']
    #allocation4 [shape = 's32[1]{0}', space=sflag, size = 0x4, scoped, tag = 'scoped memory for tpu_custom_call.1']
    #allocation5 [shape = 'u8[1024]{0}', space=vmem, size = 0x400, scoped, tag = 'input window, operand 1, single buffered']
    #allocation6 [shape = 's32[1]{0}', space=sflag, size = 0x4, scoped, tag = 'scoped memory for tpu_custom_call.1']
    #allocation7 [shape = 'u8[1024]{0}', space=vmem, size = 0x400, scoped, tag = 'input window, operand 2, single buffered']
    #allocation8 [shape = 'u8[393216]{0}', space=vmem, size = 0x60000, scoped, tag = 'input window, operand 3, single buffered']
    #allocation9 [shape = 's32[1]{0}', space=sflag, size = 0x4, scoped, tag = 'scoped memory for tpu_custom_call.1']
    #allocation10 [shape = 'u8[131072]{0}', space=vmem, size = 0x20000, scoped, tag = 'input window, operand 5, single buffered']
    #allocation11 [shape = 'u8[524288]{0}', space=vmem, size = 0x80000, scoped, tag = 'input window, operand 9, single buffered']
    #allocation12 [shape = 's32[1]{0}', space=sflag, size = 0x4, scoped, tag = 'scoped memory for tpu_custom_call.1']
    #allocation13 [shape = 'u8[524288]{0}', space=vmem, size = 0x80000, scoped, tag = 'input window, operand 11, single buffered']
    #allocation14 [shape = 'u8[16384]{0}', space=vmem, size = 0x4000, scoped, tag = 'output window, operand 0, single buffered']
    %18 = vsyncpa [#allocation3], 0
    %19 = vsyncpa [#allocation6], 0
    %20 = vsyncpa [#allocation9], 0
    %21 = vsyncpa [#allocation12], 0
    %22 = vsyncpa [#allocation4], 0
    // Predicated region
    $region2: #{tpu_custom_call.1} parent=1 // pred_check
      _
    $region3: #{tpu_custom_call.1} parent=1 // pred_check_branch
      %24 = sbr.rel (0) target = $region5
    $region4: #{tpu_custom_call.1} parent=1 // pred_region
      %s26 = ssub.s32 512, 512
      %27 = vsyncadd [#allocation3], %s26
      %s28 = sshll.u32 [#allocation2], 4
      %s29 = int_to_ptr.vmem [resolvable:$true] %s28
      %34 = dma.hbm_to_vmem [thread:$0]  %s0, 512, %s29, [#allocation3], 256, 256, 16
    $region5: #{tpu_custom_call.1} parent=1 // pred_fallthru
      _
    // Predicated region
    $region6: #{tpu_custom_call.1} parent=1 // pred_check
      _
    $region7: #{tpu_custom_call.1} parent=1 // pred_check_branch
      %36 = sbr.rel (0) target = $region9
    $region8: #{tpu_custom_call.1} parent=1 // pred_region
      %s38 = ssub.s32 32, 32
      %39 = vsyncadd [#allocation6], %s38
      %s41 = sshll.u32 [#allocation5], 4
      %s42 = int_to_ptr.vmem [resolvable:$true] %s41
      %44 = dma.hbm_to_vmem [thread:$0]  %s1, 32, %s42, [#allocation6]
    $region9: #{tpu_custom_call.1} parent=1 // pred_fallthru
      _
    // Predicated region
    $region10: #{tpu_custom_call.1} parent=1 // pred_check
      _
    $region11: #{tpu_custom_call.1} parent=1 // pred_check_branch
      %46 = sbr.rel (0) target = $region13
    $region12: #{tpu_custom_call.1} parent=1 // pred_region
      %s48 = ssub.s32 32, 32
      %49 = vsyncadd [#allocation6], %s48
      %s51 = sshll.u32 [#allocation7], 4
      %s52 = int_to_ptr.vmem [resolvable:$true] %s51
      %54 = dma.hbm_to_vmem [thread:$0]  %s2, 32, %s52, [#allocation6]
    $region13: #{tpu_custom_call.1} parent=1 // pred_fallthru
      _
    // Predicated region
    $region14: #{tpu_custom_call.1} parent=1 // pred_check
      _
    $region15: #{tpu_custom_call.1} parent=1 // pred_check_branch
      %56 = sbr.rel (0) target = $region17
    $region16: #{tpu_custom_call.1} parent=1 // pred_region
      %s58 = ssub.s32 12288, 12288
      %59 = vsyncadd [#allocation9], %s58
      %s60 = sshll.u32 [#allocation8], 4
      %s61 = int_to_ptr.vmem [resolvable:$true] %s60
      %66 = dma.hbm_to_vmem [thread:$0]  %s3, 12288, %s61, [#allocation9], 384, 384, 24
    $region17: #{tpu_custom_call.1} parent=1 // pred_fallthru
      _
    // Predicated region
    $region18: #{tpu_custom_call.1} parent=1 // pred_check
      _
    $region19: #{tpu_custom_call.1} parent=1 // pred_check_branch
      %68 = sbr.rel (0) target = $region21
    $region20: #{tpu_custom_call.1} parent=1 // pred_region
      _
    $region21: #{tpu_custom_call.1} parent=1 // pred_fallthru
      _
    // Predicated region
    $region22: #{tpu_custom_call.1} parent=1 // pred_check
      _
    $region23: #{tpu_custom_call.1} parent=1 // pred_check_branch
      %70 = sbr.rel (0) target = $region25
    $region24: #{tpu_custom_call.1} parent=1 // pred_region
      %s72 = ssub.s32 4096, 4096
      %73 = vsyncadd [#allocation9], %s72
      %s74 = sshll.u32 [#allocation10], 4
      %s75 = int_to_ptr.vmem [resolvable:$true] %s74
      %80 = dma.hbm_to_vmem [thread:$0]  %s5, 4096, %s75, [#allocation9], 128, 128, 8
    $region25: #{tpu_custom_call.1} parent=1 // pred_fallthru
      _
    // Predicated region
    $region26: #{tpu_custom_call.1} parent=1 // pred_check
      _
    $region27: #{tpu_custom_call.1} parent=1 // pred_check_branch
      %82 = sbr.rel (0) target = $region29
    $region28: #{tpu_custom_call.1} parent=1 // pred_region
      _
    $region29: #{tpu_custom_call.1} parent=1 // pred_fallthru
      _
    // Predicated region
    $region30: #{tpu_custom_call.1} parent=1 // pred_check
      _
    $region31: #{tpu_custom_call.1} parent=1 // pred_check_branch
      %84 = sbr.rel (0) target = $region33
    $region32: #{tpu_custom_call.1} parent=1 // pred_region
      _
    $region33: #{tpu_custom_call.1} parent=1 // pred_fallthru
      _
    // Predicated region
    $region34: #{tpu_custom_call.1} parent=1 // pred_check
      _
    $region35: #{tpu_custom_call.1} parent=1 // pred_check_branch
      %86 = sbr.rel (0) target = $region37
    $region36: #{tpu_custom_call.1} parent=1 // pred_region
      _
    $region37: #{tpu_custom_call.1} parent=1 // pred_fallthru
      _
    // Predicated region
    $region38: #{tpu_custom_call.1} parent=1 // pred_check
      _
    $region39: #{tpu_custom_call.1} parent=1 // pred_check_branch
      %88 = sbr.rel (0) target = $region41
    $region40: #{tpu_custom_call.1} parent=1 // pred_region
      %s90 = ssub.s32 16384, 16384
      %91 = vsyncadd [#allocation12], %s90
      %s92 = sshll.u32 [#allocation11], 4
      %s93 = int_to_ptr.vmem [resolvable:$true] %s92
      %98 = dma.hbm_to_vmem [thread:$0]  %s9, 16384, %s93, [#allocation12], 512, 512, 32
    $region41: #{tpu_custom_call.1} parent=1 // pred_fallthru
      _
    // Predicated region
    $region42: #{tpu_custom_call.1} parent=1 // pred_check
      _
    $region43: #{tpu_custom_call.1} parent=1 // pred_check_branch
      %100 = sbr.rel (0) target = $region45
    $region44: #{tpu_custom_call.1} parent=1 // pred_region
      _
    $region45: #{tpu_custom_call.1} parent=1 // pred_fallthru
      _
    // Predicated region
    $region46: #{tpu_custom_call.1} parent=1 // pred_check
      _
    $region47: #{tpu_custom_call.1} parent=1 // pred_check_branch
      %102 = sbr.rel (0) target = $region49
    $region48: #{tpu_custom_call.1} parent=1 // pred_region
      %s104 = ssub.s32 16384, 16384
      %105 = vsyncadd [#allocation12], %s104
      %s106 = sshll.u32 [#allocation13], 4
      %s107 = int_to_ptr.vmem [resolvable:$true] %s106
      %112 = dma.hbm_to_vmem [thread:$0]  %s11, 16384, %s107, [#allocation12], 128, 128, 8
    $region49: #{tpu_custom_call.1} parent=1 // pred_fallthru
      _
    // Predicated region
    $region50: #{tpu_custom_call.1} parent=1 // pred_check
      _
    $region51: #{tpu_custom_call.1} parent=1 // pred_check_branch
      %114 = sbr.rel (0) target = $region53
    $region52: #{tpu_custom_call.1} parent=1 // pred_region
      _
    $region53: #{tpu_custom_call.1} parent=1 // pred_fallthru
      _
    // Predicated region
    $region54: #{tpu_custom_call.1} parent=1 // pred_check
      _
    $region55: #{tpu_custom_call.1} parent=1 // pred_check_branch
      %116 = sbr.rel (0) target = $region57
    $region56: #{tpu_custom_call.1} parent=1 // pred_region
      %117 = dma.done [#allocation3], 512
    $region57: #{tpu_custom_call.1} parent=1 // pred_fallthru
      _
    // Predicated region
    $region58: #{tpu_custom_call.1} parent=1 // pred_check
      _
    $region59: #{tpu_custom_call.1} parent=1 // pred_check_branch
      %119 = sbr.rel (0) target = $region61
    $region60: #{tpu_custom_call.1} parent=1 // pred_region
      %120 = dma.done [#allocation6], 32
    $region61: #{tpu_custom_call.1} parent=1 // pred_fallthru
      _
    // Predicated region
    $region62: #{tpu_custom_call.1} parent=1 // pred_check
      _
    $region63: #{tpu_custom_call.1} parent=1 // pred_check_branch
      %122 = sbr.rel (0) target = $region65
    $region64: #{tpu_custom_call.1} parent=1 // pred_region
      %123 = dma.done [#allocation6], 32
    $region65: #{tpu_custom_call.1} parent=1 // pred_fallthru
      _
    // Predicated region
    $region66: #{tpu_custom_call.1} parent=1 // pred_check
      _
    $region67: #{tpu_custom_call.1} parent=1 // pred_check_branch
      %125 = sbr.rel (0) target = $region69
    $region68: #{tpu_custom_call.1} parent=1 // pred_region
      %126 = dma.done [#allocation9], 12288
    $region69: #{tpu_custom_call.1} parent=1 // pred_fallthru
      _
    // Predicated region
    $region70: #{tpu_custom_call.1} parent=1 // pred_check
      _
    $region71: #{tpu_custom_call.1} parent=1 // pred_check_branch
      %128 = sbr.rel (0) target = $region73
    $region72: #{tpu_custom_call.1} parent=1 // pred_region
      %129 = dma.done [#allocation9], 4096
    $region73: #{tpu_custom_call.1} parent=1 // pred_fallthru
      _
    // Predicated region
    $region74: #{tpu_custom_call.1} parent=1 // pred_check
      _
    $region75: #{tpu_custom_call.1} parent=1 // pred_check_branch
      %131 = sbr.rel (0) target = $region77
    $region76: #{tpu_custom_call.1} parent=1 // pred_region
      %132 = dma.done [#allocation12], 16384
    $region77: #{tpu_custom_call.1} parent=1 // pred_fallthru
      _
    // Predicated region
    $region78: #{tpu_custom_call.1} parent=1 // pred_check
      _
    $region79: #{tpu_custom_call.1} parent=1 // pred_check_branch
      %134 = sbr.rel (0) target = $region81
    $region80: #{tpu_custom_call.1} parent=1 // pred_region
      %135 = dma.done [#allocation12], 16384
    $region81: #{tpu_custom_call.1} parent=1 // pred_fallthru
      _
    %v137 = vld [vmem:[#allocation2] sm:$0xff]
    %v138 = vld [vmem:[#allocation2 + $0x8] sm:$0xff]
    %v139 = vld [vmem:[#allocation2 + $0x10] sm:$0xff]
    %v140 = vld [vmem:[#allocation2 + $0x18] sm:$0xff]
    %v141 = vld [vmem:[#allocation5] sm:$0x3]
    %v142 = vld [vmem:[#allocation7] sm:$0x3]
    %v143 = vadd.f32 %v137, %v138
    %144 = vadd.xlane.f32.xlu0 %v143
    %v145 = vpop.xlane.xlu0 %144
    %v146 = vadd.f32 %v139, %v140
    %147 = vadd.xlane.f32.xlu0 %v146
    %v148 = vpop.xlane.xlu0 %147
    %v149 = vrcp.pop 256.0
    %v150 = vmul.f32 %v145, %v149
    %v151 = vmul.f32 %v148, %v149
    %v152 = vsub.f32 %v137, %v150
    %v153 = vsub.f32 %v138, %v150
    %v154 = vsub.f32 %v139, %v151
    %v155 = vsub.f32 %v140, %v151
    %v156 = vmul.f32 %v152, %v152
    %v157 = vmul.f32 %v153, %v153
    %v158 = vmul.f32 %v154, %v154
    %v159 = vmul.f32 %v155, %v155
    %v160 = vadd.f32 %v156, %v157
    %161 = vadd.xlane.f32.xlu0 %v160
    %v162 = vpop.xlane.xlu0 %161
    %v163 = vadd.f32 %v158, %v159
    %164 = vadd.xlane.f32.xlu0 %v163
    %v165 = vpop.xlane.xlu0 %164
    %v166 = vmul.f32 %v162, %v149
    %v167 = vmul.f32 %v165, %v149
    %v168 = vadd.f32 %v166, 1e-05
    %v169 = vadd.f32 %v167, 1e-05
    %v170 = vrsqrt.pop %v168
    %v171 = vrsqrt.pop %v169
    %v172 = vmul.f32 %v152, %v170
    %v173 = vmul.f32 %v153, %v170
    %v174 = vmul.f32 %v154, %v171
    %v175 = vmul.f32 %v155, %v171
    %v177 = vlaneseq
    %v178 = vshrl.u32 %v177, 7
    %v179 = vsub.s32 0, %v178
    %v180 = vrot.slane %v141, %v179
    %v181 = vlaneseq
    %v182 = vshrl.u32 %v181, 7
    %v183 = vsub.s32 1, %v182
    %v184 = vrot.slane %v141, %v183
    %v187 = vmul.f32 %v172, %v180
    %v188 = vmul.f32 %v173, %v184
    %v189 = vmul.f32 %v174, %v180
    %v190 = vmul.f32 %v175, %v184
    %v192 = vlaneseq
    %v193 = vshrl.u32 %v192, 7
    %v194 = vsub.s32 0, %v193
    %v195 = vrot.slane %v142, %v194
    %v196 = vlaneseq
    %v197 = vshrl.u32 %v196, 7
    %v198 = vsub.s32 1, %v197
    %v199 = vrot.slane %v142, %v198
    %v202 = vadd.f32 %v187, %v195
    %v203 = vadd.f32 %v188, %v199
    %v204 = vadd.f32 %v189, %v195
    %v205 = vadd.f32 %v190, %v199
    %v206 = vpack.c.bf16 %v204, %v202
    %v207 = vpack.c.bf16 %v205, %v203
    %v208 = vld [vmem:[#allocation8] sm:$0xff]
    %v209 = vld [vmem:[#allocation8 + $0x8] sm:$0xff]
    %v210 = vld [vmem:[#allocation8 + $0x10] sm:$0xff]
    %v211 = vld [vmem:[#allocation8 + $0x18] sm:$0xff]
    %v212 = vld [vmem:[#allocation8 + $0x20] sm:$0xff]
    %v213 = vld [vmem:[#allocation8 + $0x28] sm:$0xff]
    %v214 = vld [vmem:[#allocation8 + $0x30] sm:$0xff]
    %v215 = vld [vmem:[#allocation8 + $0x38] sm:$0xff]
    %v216 = vld [vmem:[#allocation8 + $0x40] sm:$0xff]
    %v217 = vld [vmem:[#allocation8 + $0x48] sm:$0xff]
    %v218 = vld [vmem:[#allocation8 + $0x50] sm:$0xff]
    %v219 = vld [vmem:[#allocation8 + $0x58] sm:$0xff]
    %v220 = vld [vmem:[#allocation8 + $0x60] sm:$0xff]
    %v221 = vld [vmem:[#allocation8 + $0x68] sm:$0xff]
    %v222 = vld [vmem:[#allocation8 + $0x70] sm:$0xff]
    %v223 = vld [vmem:[#allocation8 + $0x78] sm:$0xff]
    %v224 = vld [vmem:[#allocation8 + $0x80] sm:$0xff]
    %v225 = vld [vmem:[#allocation8 + $0x88] sm:$0xff]
    %v226 = vld [vmem:[#allocation8 + $0x90] sm:$0xff]
    %v227 = vld [vmem:[#allocation8 + $0x98] sm:$0xff]
    %v228 = vld [vmem:[#allocation8 + $0xa0] sm:$0xff]
    %v229 = vld [vmem:[#allocation8 + $0xa8] sm:$0xff]
    %v230 = vld [vmem:[#allocation8 + $0xb0] sm:$0xff]
    %v231 = vld [vmem:[#allocation8 + $0xb8] sm:$0xff]
    %v232 = vld [vmem:[#allocation8 + $0xc0] sm:$0xff]
    %v233 = vld [vmem:[#allocation8 + $0xc8] sm:$0xff]
    %v234 = vld [vmem:[#allocation8 + $0xd0] sm:$0xff]
    %v235 = vld [vmem:[#allocation8 + $0xd8] sm:$0xff]
    %v236 = vld [vmem:[#allocation8 + $0xe0] sm:$0xff]
    %v237 = vld [vmem:[#allocation8 + $0xe8] sm:$0xff]
    %v238 = vld [vmem:[#allocation8 + $0xf0] sm:$0xff]
    %v239 = vld [vmem:[#allocation8 + $0xf8] sm:$0xff]
    %v240 = vld [vmem:[#allocation8 + $0x100] sm:$0xff]
    %v241 = vld [vmem:[#allocation8 + $0x108] sm:$0xff]
    %v242 = vld [vmem:[#allocation8 + $0x110] sm:$0xff]
    %v243 = vld [vmem:[#allocation8 + $0x118] sm:$0xff]
    %v244 = vld [vmem:[#allocation8 + $0x120] sm:$0xff]
    %v245 = vld [vmem:[#allocation8 + $0x128] sm:$0xff]
    %v246 = vld [vmem:[#allocation8 + $0x130] sm:$0xff]
    %v247 = vld [vmem:[#allocation8 + $0x138] sm:$0xff]
    %v248 = vld [vmem:[#allocation8 + $0x140] sm:$0xff]
    %v249 = vld [vmem:[#allocation8 + $0x148] sm:$0xff]
    %v250 = vld [vmem:[#allocation8 + $0x150] sm:$0xff]
    %v251 = vld [vmem:[#allocation8 + $0x158] sm:$0xff]
    %v252 = vld [vmem:[#allocation8 + $0x160] sm:$0xff]
    %v253 = vld [vmem:[#allocation8 + $0x168] sm:$0xff]
    %v254 = vld [vmem:[#allocation8 + $0x170] sm:$0xff]
    %v255 = vld [vmem:[#allocation8 + $0x178] sm:$0xff]
    %v256 = vld [vmem:[#allocation8 + $0x180] sm:$0xff]
    %v257 = vld [vmem:[#allocation8 + $0x188] sm:$0xff]
    %v258 = vld [vmem:[#allocation8 + $0x190] sm:$0xff]
    %v259 = vld [vmem:[#allocation8 + $0x198] sm:$0xff]
    %v260 = vld [vmem:[#allocation8 + $0x1a0] sm:$0xff]
    %v261 = vld [vmem:[#allocation8 + $0x1a8] sm:$0xff]
    %v262 = vld [vmem:[#allocation8 + $0x1b0] sm:$0xff]
    %v263 = vld [vmem:[#allocation8 + $0x1b8] sm:$0xff]
    %v264 = vld [vmem:[#allocation8 + $0x1c0] sm:$0xff]
    %v265 = vld [vmem:[#allocation8 + $0x1c8] sm:$0xff]
    %v266 = vld [vmem:[#allocation8 + $0x1d0] sm:$0xff]
    %v267 = vld [vmem:[#allocation8 + $0x1d8] sm:$0xff]
    %v268 = vld [vmem:[#allocation8 + $0x1e0] sm:$0xff]
    %v269 = vld [vmem:[#allocation8 + $0x1e8] sm:$0xff]
    %v270 = vld [vmem:[#allocation8 + $0x1f0] sm:$0xff]
    %v271 = vld [vmem:[#allocation8 + $0x1f8] sm:$0xff]
    %v272 = vld [vmem:[#allocation8 + $0x200] sm:$0xff]
    %v273 = vld [vmem:[#allocation8 + $0x208] sm:$0xff]
    %v274 = vld [vmem:[#allocation8 + $0x210] sm:$0xff]
    %v275 = vld [vmem:[#allocation8 + $0x218] sm:$0xff]
    %v276 = vld [vmem:[#allocation8 + $0x220] sm:$0xff]
    %v277 = vld [vmem:[#allocation8 + $0x228] sm:$0xff]
    %v278 = vld [vmem:[#allocation8 + $0x230] sm:$0xff]
    %v279 = vld [vmem:[#allocation8 + $0x238] sm:$0xff]
    %v280 = vld [vmem:[#allocation8 + $0x240] sm:$0xff]
    %v281 = vld [vmem:[#allocation8 + $0x248] sm:$0xff]
    %v282 = vld [vmem:[#allocation8 + $0x250] sm:$0xff]
    %v283 = vld [vmem:[#allocation8 + $0x258] sm:$0xff]
    %v284 = vld [vmem:[#allocation8 + $0x260] sm:$0xff]
    %v285 = vld [vmem:[#allocation8 + $0x268] sm:$0xff]
    %v286 = vld [vmem:[#allocation8 + $0x270] sm:$0xff]
    %v287 = vld [vmem:[#allocation8 + $0x278] sm:$0xff]
    %v288 = vld [vmem:[#allocation8 + $0x280] sm:$0xff]
    %v289 = vld [vmem:[#allocation8 + $0x288] sm:$0xff]
    %v290 = vld [vmem:[#allocation8 + $0x290] sm:$0xff]
    %v291 = vld [vmem:[#allocation8 + $0x298] sm:$0xff]
    %v292 = vld [vmem:[#allocation8 + $0x2a0] sm:$0xff]
    %v293 = vld [vmem:[#allocation8 + $0x2a8] sm:$0xff]
    %v294 = vld [vmem:[#allocation8 + $0x2b0] sm:$0xff]
    %v295 = vld [vmem:[#allocation8 + $0x2b8] sm:$0xff]
    %v296 = vld [vmem:[#allocation8 + $0x2c0] sm:$0xff]
    %v297 = vld [vmem:[#allocation8 + $0x2c8] sm:$0xff]
    %v298 = vld [vmem:[#allocation8 + $0x2d0] sm:$0xff]
    %v299 = vld [vmem:[#allocation8 + $0x2d8] sm:$0xff]
    %v300 = vld [vmem:[#allocation8 + $0x2e0] sm:$0xff]
    %v301 = vld [vmem:[#allocation8 + $0x2e8] sm:$0xff]
    %v302 = vld [vmem:[#allocation8 + $0x2f0] sm:$0xff]
    %v303 = vld [vmem:[#allocation8 + $0x2f8] sm:$0xff]
    %v304 = vld [vmem:[%s4] sm:$0x3f]
    %v306 = vlaneseq
    %v307 = vshrl.u32 %v306, 7
    %v308 = vsub.s32 0, %v307
    %v309 = vrot.slane %v304, %v308
    %v310 = vlaneseq
    %v311 = vshrl.u32 %v310, 7
    %v312 = vsub.s32 1, %v311
    %v313 = vrot.slane %v304, %v312
    %v314 = vlaneseq
    %v315 = vshrl.u32 %v314, 7
    %v316 = vsub.s32 2, %v315
    %v317 = vrot.slane %v304, %v316
    %v318 = vlaneseq
    %v319 = vshrl.u32 %v318, 7
    %v320 = vsub.s32 3, %v319
    %v321 = vrot.slane %v304, %v320
    %v322 = vlaneseq
    %v323 = vshrl.u32 %v322, 7
    %v324 = vsub.s32 4, %v323
    %v325 = vrot.slane %v304, %v324
    %v326 = vlaneseq
    %v327 = vshrl.u32 %v326, 7
    %v328 = vsub.s32 5, %v327
    %v329 = vrot.slane %v304, %v328
    %v432 = vunpack.c.l.b16 %v208
    %v433 = vunpack.c.h.b16 %v208
    %v434 = vunpack.c.l.b16 %v209
    %v435 = vunpack.c.h.b16 %v209
    %v436 = vunpack.c.l.b16 %v210
    %v437 = vunpack.c.h.b16 %v210
    %v438 = vunpack.c.l.b16 %v211
    %v439 = vunpack.c.h.b16 %v211
    %v440 = vunpack.c.l.b16 %v212
    %v441 = vunpack.c.h.b16 %v212
    %v442 = vunpack.c.l.b16 %v213
    %v443 = vunpack.c.h.b16 %v213
    %v444 = vunpack.c.l.b16 %v214
    %v445 = vunpack.c.h.b16 %v214
    %v446 = vunpack.c.l.b16 %v215
    %v447 = vunpack.c.h.b16 %v215
    %v448 = vunpack.c.l.b16 %v216
    %v449 = vunpack.c.h.b16 %v216
    %v450 = vunpack.c.l.b16 %v217
    %v451 = vunpack.c.h.b16 %v217
    %v452 = vunpack.c.l.b16 %v218
    %v453 = vunpack.c.h.b16 %v218
    %v454 = vunpack.c.l.b16 %v219
    %v455 = vunpack.c.h.b16 %v219
    %v456 = vunpack.c.l.b16 %v220
    %v457 = vunpack.c.h.b16 %v220
    %v458 = vunpack.c.l.b16 %v221
    %v459 = vunpack.c.h.b16 %v221
    %v460 = vunpack.c.l.b16 %v222
    %v461 = vunpack.c.h.b16 %v222
    %v462 = vunpack.c.l.b16 %v223
    %v463 = vunpack.c.h.b16 %v223
    %v464 = vunpack.c.l.b16 %v224
    %v465 = vunpack.c.h.b16 %v224
    %v466 = vunpack.c.l.b16 %v225
    %v467 = vunpack.c.h.b16 %v225
    %v468 = vunpack.c.l.b16 %v226
    %v469 = vunpack.c.h.b16 %v226
    %v470 = vunpack.c.l.b16 %v227
    %v471 = vunpack.c.h.b16 %v227
    %v472 = vunpack.c.l.b16 %v228
    %v473 = vunpack.c.h.b16 %v228
    %v474 = vunpack.c.l.b16 %v229
    %v475 = vunpack.c.h.b16 %v229
    %v476 = vunpack.c.l.b16 %v230
    %v477 = vunpack.c.h.b16 %v230
    %v478 = vunpack.c.l.b16 %v231
    %v479 = vunpack.c.h.b16 %v231
    %v480 = vunpack.c.l.b16 %v232
    %v481 = vunpack.c.h.b16 %v232
    %v482 = vunpack.c.l.b16 %v233
    %v483 = vunpack.c.h.b16 %v233
    %v484 = vunpack.c.l.b16 %v234
    %v485 = vunpack.c.h.b16 %v234
    %v486 = vunpack.c.l.b16 %v235
    %v487 = vunpack.c.h.b16 %v235
    %v488 = vunpack.c.l.b16 %v236
    %v489 = vunpack.c.h.b16 %v236
    %v490 = vunpack.c.l.b16 %v237
    %v491 = vunpack.c.h.b16 %v237
    %v492 = vunpack.c.l.b16 %v238
    %v493 = vunpack.c.h.b16 %v238
    %v494 = vunpack.c.l.b16 %v239
    %v495 = vunpack.c.h.b16 %v239
    %v496 = vunpack.c.l.b16 %v240
    %v497 = vunpack.c.h.b16 %v240
    %v498 = vunpack.c.l.b16 %v241
    %v499 = vunpack.c.h.b16 %v241
    %v500 = vunpack.c.l.b16 %v242
    %v501 = vunpack.c.h.b16 %v242
    %v502 = vunpack.c.l.b16 %v243
    %v503 = vunpack.c.h.b16 %v243
    %v504 = vunpack.c.l.b16 %v244
    %v505 = vunpack.c.h.b16 %v244
    %v506 = vunpack.c.l.b16 %v245
    %v507 = vunpack.c.h.b16 %v245
    %v508 = vunpack.c.l.b16 %v246
    %v509 = vunpack.c.h.b16 %v246
    %v510 = vunpack.c.l.b16 %v247
    %v511 = vunpack.c.h.b16 %v247
    %v512 = vunpack.c.l.b16 %v248
    %v513 = vunpack.c.h.b16 %v248
    %v514 = vunpack.c.l.b16 %v249
    %v515 = vunpack.c.h.b16 %v249
    %v516 = vunpack.c.l.b16 %v250
    %v517 = vunpack.c.h.b16 %v250
    %v518 = vunpack.c.l.b16 %v251
    %v519 = vunpack.c.h.b16 %v251
    %v520 = vunpack.c.l.b16 %v252
    %v521 = vunpack.c.h.b16 %v252
    %v522 = vunpack.c.l.b16 %v253
    %v523 = vunpack.c.h.b16 %v253
    %v524 = vunpack.c.l.b16 %v254
    %v525 = vunpack.c.h.b16 %v254
    %v526 = vunpack.c.l.b16 %v255
    %v527 = vunpack.c.h.b16 %v255
    %v528 = vunpack.c.l.b16 %v256
    %v529 = vunpack.c.h.b16 %v256
    %v530 = vunpack.c.l.b16 %v257
    %v531 = vunpack.c.h.b16 %v257
    %v532 = vunpack.c.l.b16 %v258
    %v533 = vunpack.c.h.b16 %v258
    %v534 = vunpack.c.l.b16 %v259
    %v535 = vunpack.c.h.b16 %v259
    %v536 = vunpack.c.l.b16 %v260
    %v537 = vunpack.c.h.b16 %v260
    %v538 = vunpack.c.l.b16 %v261
    %v539 = vunpack.c.h.b16 %v261
    %v540 = vunpack.c.l.b16 %v262
    %v541 = vunpack.c.h.b16 %v262
    %v542 = vunpack.c.l.b16 %v263
    %v543 = vunpack.c.h.b16 %v263
    %v544 = vunpack.c.l.b16 %v264
    %v545 = vunpack.c.h.b16 %v264
    %v546 = vunpack.c.l.b16 %v265
    %v547 = vunpack.c.h.b16 %v265
    %v548 = vunpack.c.l.b16 %v266
    %v549 = vunpack.c.h.b16 %v266
    %v550 = vunpack.c.l.b16 %v267
    %v551 = vunpack.c.h.b16 %v267
    %v552 = vunpack.c.l.b16 %v268
    %v553 = vunpack.c.h.b16 %v268
    %v554 = vunpack.c.l.b16 %v269
    %v555 = vunpack.c.h.b16 %v269
    %v556 = vunpack.c.l.b16 %v270
    %v557 = vunpack.c.h.b16 %v270
    %v558 = vunpack.c.l.b16 %v271
    %v559 = vunpack.c.h.b16 %v271
    %v560 = vunpack.c.l.b16 %v272
    %v561 = vunpack.c.h.b16 %v272
    %v562 = vunpack.c.l.b16 %v273
    %v563 = vunpack.c.h.b16 %v273
    %v564 = vunpack.c.l.b16 %v274
    %v565 = vunpack.c.h.b16 %v274
    %v566 = vunpack.c.l.b16 %v275
    %v567 = vunpack.c.h.b16 %v275
    %v568 = vunpack.c.l.b16 %v276
    %v569 = vunpack.c.h.b16 %v276
    %v570 = vunpack.c.l.b16 %v277
    %v571 = vunpack.c.h.b16 %v277
    %v572 = vunpack.c.l.b16 %v278
    %v573 = vunpack.c.h.b16 %v278
    %v574 = vunpack.c.l.b16 %v279
    %v575 = vunpack.c.h.b16 %v279
    %v576 = vunpack.c.l.b16 %v280
    %v577 = vunpack.c.h.b16 %v280
    %v578 = vunpack.c.l.b16 %v281
    %v579 = vunpack.c.h.b16 %v281
    %v580 = vunpack.c.l.b16 %v282
    %v581 = vunpack.c.h.b16 %v282
    %v582 = vunpack.c.l.b16 %v283
    %v583 = vunpack.c.h.b16 %v283
    %v584 = vunpack.c.l.b16 %v284
    %v585 = vunpack.c.h.b16 %v284
    %v586 = vunpack.c.l.b16 %v285
    %v587 = vunpack.c.h.b16 %v285
    %v588 = vunpack.c.l.b16 %v286
    %v589 = vunpack.c.h.b16 %v286
    %v590 = vunpack.c.l.b16 %v287
    %v591 = vunpack.c.h.b16 %v287
    %v592 = vunpack.c.l.b16 %v288
    %v593 = vunpack.c.h.b16 %v288
    %v594 = vunpack.c.l.b16 %v289
    %v595 = vunpack.c.h.b16 %v289
    %v596 = vunpack.c.l.b16 %v290
    %v597 = vunpack.c.h.b16 %v290
    %v598 = vunpack.c.l.b16 %v291
    %v599 = vunpack.c.h.b16 %v291
    %v600 = vunpack.c.l.b16 %v292
    %v601 = vunpack.c.h.b16 %v292
    %v602 = vunpack.c.l.b16 %v293
    %v603 = vunpack.c.h.b16 %v293
    %v604 = vunpack.c.l.b16 %v294
    %v605 = vunpack.c.h.b16 %v294
    %v606 = vunpack.c.l.b16 %v295
    %v607 = vunpack.c.h.b16 %v295
    %v608 = vunpack.c.l.b16 %v296
    %v609 = vunpack.c.h.b16 %v296
    %v610 = vunpack.c.l.b16 %v297
    %v611 = vunpack.c.h.b16 %v297
    %v612 = vunpack.c.l.b16 %v298
    %v613 = vunpack.c.h.b16 %v298
    %v614 = vunpack.c.l.b16 %v299
    %v615 = vunpack.c.h.b16 %v299
    %v616 = vunpack.c.l.b16 %v300
    %v617 = vunpack.c.h.b16 %v300
    %v618 = vunpack.c.l.b16 %v301
    %v619 = vunpack.c.h.b16 %v301
    %v620 = vunpack.c.l.b16 %v302
    %v621 = vunpack.c.h.b16 %v302
    %v622 = vunpack.c.l.b16 %v303
    %v623 = vunpack.c.h.b16 %v303
    %v624 = vpack.c.b16 %v438, %v432
    %v625 = vpack.c.b16 %v439, %v433
    %v626 = vpack.c.b16 %v440, %v434
    %v627 = vpack.c.b16 %v441, %v435
    %v628 = vpack.c.b16 %v442, %v436
    %v629 = vpack.c.b16 %v443, %v437
    %v630 = vpack.c.b16 %v450, %v444
    %v631 = vpack.c.b16 %v451, %v445
    %v632 = vpack.c.b16 %v452, %v446
    %v633 = vpack.c.b16 %v453, %v447
    %v634 = vpack.c.b16 %v454, %v448
    %v635 = vpack.c.b16 %v455, %v449
    %v636 = vpack.c.b16 %v462, %v456
    %v637 = vpack.c.b16 %v463, %v457
    %v638 = vpack.c.b16 %v464, %v458
    %v639 = vpack.c.b16 %v465, %v459
    %v640 = vpack.c.b16 %v466, %v460
    %v641 = vpack.c.b16 %v467, %v461
    %v642 = vpack.c.b16 %v474, %v468
    %v643 = vpack.c.b16 %v475, %v469
    %v644 = vpack.c.b16 %v476, %v470
    %v645 = vpack.c.b16 %v477, %v471
    %v646 = vpack.c.b16 %v478, %v472
    %v647 = vpack.c.b16 %v479, %v473
    %v648 = vpack.c.b16 %v486, %v480
    %v649 = vpack.c.b16 %v487, %v481
    %v650 = vpack.c.b16 %v488, %v482
    %v651 = vpack.c.b16 %v489, %v483
    %v652 = vpack.c.b16 %v490, %v484
    %v653 = vpack.c.b16 %v491, %v485
    %v654 = vpack.c.b16 %v498, %v492
    %v655 = vpack.c.b16 %v499, %v493
    %v656 = vpack.c.b16 %v500, %v494
    %v657 = vpack.c.b16 %v501, %v495
    %v658 = vpack.c.b16 %v502, %v496
    %v659 = vpack.c.b16 %v503, %v497
    %v660 = vpack.c.b16 %v510, %v504
    %v661 = vpack.c.b16 %v511, %v505
    %v662 = vpack.c.b16 %v512, %v506
    %v663 = vpack.c.b16 %v513, %v507
    %v664 = vpack.c.b16 %v514, %v508
    %v665 = vpack.c.b16 %v515, %v509
    %v666 = vpack.c.b16 %v522, %v516
    %v667 = vpack.c.b16 %v523, %v517
    %v668 = vpack.c.b16 %v524, %v518
    %v669 = vpack.c.b16 %v525, %v519
    %v670 = vpack.c.b16 %v526, %v520
    %v671 = vpack.c.b16 %v527, %v521
    %v672 = vpack.c.b16 %v534, %v528
    %v673 = vpack.c.b16 %v535, %v529
    %v674 = vpack.c.b16 %v536, %v530
    %v675 = vpack.c.b16 %v537, %v531
    %v676 = vpack.c.b16 %v538, %v532
    %v677 = vpack.c.b16 %v539, %v533
    %v678 = vpack.c.b16 %v546, %v540
    %v679 = vpack.c.b16 %v547, %v541
    %v680 = vpack.c.b16 %v548, %v542
    %v681 = vpack.c.b16 %v549, %v543
    %v682 = vpack.c.b16 %v550, %v544
    %v683 = vpack.c.b16 %v551, %v545
    %v684 = vpack.c.b16 %v558, %v552
    %v685 = vpack.c.b16 %v559, %v553
    %v686 = vpack.c.b16 %v560, %v554
    %v687 = vpack.c.b16 %v561, %v555
    %v688 = vpack.c.b16 %v562, %v556
    %v689 = vpack.c.b16 %v563, %v557
    %v690 = vpack.c.b16 %v570, %v564
    %v691 = vpack.c.b16 %v571, %v565
    %v692 = vpack.c.b16 %v572, %v566
    %v693 = vpack.c.b16 %v573, %v567
    %v694 = vpack.c.b16 %v574, %v568
    %v695 = vpack.c.b16 %v575, %v569
    %v696 = vpack.c.b16 %v582, %v576
    %v697 = vpack.c.b16 %v583, %v577
    %v698 = vpack.c.b16 %v584, %v578
    %v699 = vpack.c.b16 %v585, %v579
    %v700 = vpack.c.b16 %v586, %v580
    %v701 = vpack.c.b16 %v587, %v581
    %v702 = vpack.c.b16 %v594, %v588
    %v703 = vpack.c.b16 %v595, %v589
    %v704 = vpack.c.b16 %v596, %v590
    %v705 = vpack.c.b16 %v597, %v591
    %v706 = vpack.c.b16 %v598, %v592
    %v707 = vpack.c.b16 %v599, %v593
    %v708 = vpack.c.b16 %v606, %v600
    %v709 = vpack.c.b16 %v607, %v601
    %v710 = vpack.c.b16 %v608, %v602
    %v711 = vpack.c.b16 %v609, %v603
    %v712 = vpack.c.b16 %v610, %v604
    %v713 = vpack.c.b16 %v611, %v605
    %v714 = vpack.c.b16 %v618, %v612
    %v715 = vpack.c.b16 %v619, %v613
    %v716 = vpack.c.b16 %v620, %v614
    %v717 = vpack.c.b16 %v621, %v615
    %v718 = vpack.c.b16 %v622, %v616
    %v719 = vpack.c.b16 %v623, %v617
    %816 = vmatprep.subr.bf16.mxu0 %v625
    %817 = vmatpush1.bf16.msra.mxu0 %v624
    %818 = vmatprep.subr.bf16.mxu0 %v631
    %819 = vmatpush1.bf16.msra.mxu0 %v630
    %820 = vmatprep.subr.bf16.mxu0 %v637
    %821 = vmatpush1.bf16.msra.mxu0 %v636
    %822 = vmatprep.subr.bf16.mxu0 %v643
    %823 = vmatpush1.bf16.msra.mxu0 %v642
    %824 = vmatprep.subr.bf16.mxu0 %v649
    %825 = vmatpush1.bf16.msra.mxu0 %v648
    %826 = vmatprep.subr.bf16.mxu0 %v655
    %827 = vmatpush1.bf16.msra.mxu0 %v654
    %828 = vmatprep.subr.bf16.mxu0 %v661
    %829 = vmatpush1.bf16.msra.mxu0 %v660
    %830 = vmatprep.subr.bf16.mxu0 %v667
    %831 = vmatpush1.bf16.msra.mxu0 %v666
    %832 = vmatprep.subr.bf16.mxu0 %v673
    %833 = vmatpush1.bf16.msra.mxu0 %v672
    %834 = vmatprep.subr.bf16.mxu0 %v679
    %835 = vmatpush1.bf16.msra.mxu0 %v678
    %836 = vmatprep.subr.bf16.mxu0 %v685
    %837 = vmatpush1.bf16.msra.mxu0 %v684
    %838 = vmatprep.subr.bf16.mxu0 %v691
    %839 = vmatpush1.bf16.msra.mxu0 %v690
    %840 = vmatprep.subr.bf16.mxu0 %v697
    %841 = vmatpush1.bf16.msra.mxu0 %v696
    %842 = vmatprep.subr.bf16.mxu0 %v703
    %843 = vmatpush1.bf16.msra.mxu0 %v702
    %844 = vmatprep.subr.bf16.mxu0 %v709
    %845 = vmatpush1.bf16.msra.mxu0 %v708
    %846 = vmatprep.subr.bf16.mxu0 %v715
    %847 = vmatpush1.bf16.msra.mxu0 %v714
    %848 = vmatprep.mubr.bf16.mxu0 %v207
    %849 = vmatmul.mubr.bf16.gmra.mrb[0].mxu0 %v206
    %v850 = vpop.f32.mrb[0].mxu0
    %v851 = vadd.f32 %v309, %v850
    %v852 = vpop.f32.mrb[0].mxu0
    %v853 = vadd.f32 %v313, %v852
    %v854 = vpop.f32.mrb[0].mxu0
    %v855 = vadd.f32 %v309, %v854
    %v856 = vpop.f32.mrb[0].mxu0
    %v857 = vadd.f32 %v313, %v856
    %858 = vdwg.mxu0
    %859 = vmatprep.subr.bf16.mxu0 %v627
    %860 = vmatpush1.bf16.msra.mxu0 %v626
    %861 = vmatprep.subr.bf16.mxu0 %v633
    %862 = vmatpush1.bf16.msra.mxu0 %v632
    %863 = vmatprep.subr.bf16.mxu0 %v639
    %864 = vmatpush1.bf16.msra.mxu0 %v638
    %865 = vmatprep.subr.bf16.mxu0 %v645
    %866 = vmatpush1.bf16.msra.mxu0 %v644
    %867 = vmatprep.subr.bf16.mxu0 %v651
    %868 = vmatpush1.bf16.msra.mxu0 %v650
    %869 = vmatprep.subr.bf16.mxu0 %v657
    %870 = vmatpush1.bf16.msra.mxu0 %v656
    %871 = vmatprep.subr.bf16.mxu0 %v663
    %872 = vmatpush1.bf16.msra.mxu0 %v662
    %873 = vmatprep.subr.bf16.mxu0 %v669
    %874 = vmatpush1.bf16.msra.mxu0 %v668
    %875 = vmatprep.subr.bf16.mxu0 %v675
    %876 = vmatpush1.bf16.msra.mxu0 %v674
    %877 = vmatprep.subr.bf16.mxu0 %v681
    %878 = vmatpush1.bf16.msra.mxu0 %v680
    %879 = vmatprep.subr.bf16.mxu0 %v687
    %880 = vmatpush1.bf16.msra.mxu0 %v686
    %881 = vmatprep.subr.bf16.mxu0 %v693
    %882 = vmatpush1.bf16.msra.mxu0 %v692
    %883 = vmatprep.subr.bf16.mxu0 %v699
    %884 = vmatpush1.bf16.msra.mxu0 %v698
    %885 = vmatprep.subr.bf16.mxu0 %v705
    %886 = vmatpush1.bf16.msra.mxu0 %v704
    %887 = vmatprep.subr.bf16.mxu0 %v711
    %888 = vmatpush1.bf16.msra.mxu0 %v710
    %889 = vmatprep.subr.bf16.mxu0 %v717
    %890 = vmatpush1.bf16.msra.mxu0 %v716
    %891 = vmatprep.mubr.bf16.mxu0 %v207
    %892 = vmatmul.mubr.bf16.gmra.mrb[0].mxu0 %v206
    %v893 = vpop.f32.mrb[0].mxu0
    %v894 = vadd.f32 %v317, %v893
    %v895 = vpop.f32.mrb[0].mxu0
    %v896 = vadd.f32 %v321, %v895
    %v897 = vpop.f32.mrb[0].mxu0
    %v898 = vadd.f32 %v317, %v897
    %v899 = vpop.f32.mrb[0].mxu0
    %v900 = vadd.f32 %v321, %v899
    %901 = vdwg.mxu0
    %902 = vmatprep.subr.bf16.mxu0 %v629
    %903 = vmatpush1.bf16.msra.mxu0 %v628
    %904 = vmatprep.subr.bf16.mxu0 %v635
    %905 = vmatpush1.bf16.msra.mxu0 %v634
    %906 = vmatprep.subr.bf16.mxu0 %v641
    %907 = vmatpush1.bf16.msra.mxu0 %v640
    %908 = vmatprep.subr.bf16.mxu0 %v647
    %909 = vmatpush1.bf16.msra.mxu0 %v646
    %910 = vmatprep.subr.bf16.mxu0 %v653
    %911 = vmatpush1.bf16.msra.mxu0 %v652
    %912 = vmatprep.subr.bf16.mxu0 %v659
    %913 = vmatpush1.bf16.msra.mxu0 %v658
    %914 = vmatprep.subr.bf16.mxu0 %v665
    %915 = vmatpush1.bf16.msra.mxu0 %v664
    %916 = vmatprep.subr.bf16.mxu0 %v671
    %917 = vmatpush1.bf16.msra.mxu0 %v670
    %918 = vmatprep.subr.bf16.mxu0 %v677
    %919 = vmatpush1.bf16.msra.mxu0 %v676
    %920 = vmatprep.subr.bf16.mxu0 %v683
    %921 = vmatpush1.bf16.msra.mxu0 %v682
    %922 = vmatprep.subr.bf16.mxu0 %v689
    %923 = vmatpush1.bf16.msra.mxu0 %v688
    %924 = vmatprep.subr.bf16.mxu0 %v695
    %925 = vmatpush1.bf16.msra.mxu0 %v694
    %926 = vmatprep.subr.bf16.mxu0 %v701
    %927 = vmatpush1.bf16.msra.mxu0 %v700
    %928 = vmatprep.subr.bf16.mxu0 %v707
    %929 = vmatpush1.bf16.msra.mxu0 %v706
    %930 = vmatprep.subr.bf16.mxu0 %v713
    %931 = vmatpush1.bf16.msra.mxu0 %v712
    %932 = vmatprep.subr.bf16.mxu0 %v719
    %933 = vmatpush1.bf16.msra.mxu0 %v718
    %934 = vmatprep.mubr.bf16.mxu0 %v207
    %935 = vmatmul.mubr.bf16.gmra.mrb[0].mxu0 %v206
    %v936 = vpop.f32.mrb[0].mxu0
    %v937 = vadd.f32 %v325, %v936
    %v938 = vpop.f32.mrb[0].mxu0
    %v939 = vadd.f32 %v329, %v938
    %v940 = vpop.f32.mrb[0].mxu0
    %v941 = vadd.f32 %v325, %v940
    %v942 = vpop.f32.mrb[0].mxu0
    %v943 = vadd.f32 %v329, %v942
    %944 = vdwg.mxu0
    %v945 = vpack.c.bf16 %v851, %v851
    %v946 = vpack.c.bf16 %v855, %v855
    %v947 = vpack.c.bf16 %v894, %v894
    %v948 = vpack.c.bf16 %v898, %v898
    %vm949 = vcmask 523264
    %v951 = vsel %vm949, %v945, 0
    %v954 = vsel %vm949, %v947, 0
    %956 = vmatprep.subr.bf16.mxu0 0
    %957 = vmatpush1.bf16.xpose.msra.mxu0 %v954
    %958 = vmatprep.subr.bf16.mxu0 0
    %959 = vmatpush1.bf16.xpose.msra.mxu0 0
    %960 = vmatprep.subr.bf16.mxu0 0
    %961 = vmatpush1.bf16.xpose.msra.mxu0 0
    %962 = vmatprep.subr.bf16.mxu0 0
    %963 = vmatpush1.bf16.xpose.msra.mxu0 0
    %964 = vmatprep.subr.bf16.mxu0 0
    %965 = vmatpush1.bf16.xpose.msra.mxu0 0
    %966 = vmatprep.subr.bf16.mxu0 0
    %967 = vmatpush1.bf16.xpose.msra.mxu0 0
    %968 = vmatprep.subr.bf16.mxu0 0
    %969 = vmatpush1.bf16.xpose.msra.mxu0 0
    %970 = vmatprep.subr.bf16.mxu0 0
    %971 = vmatpush1.bf16.xpose.msra.mxu0 0
    %972 = vmatprep.subr.bf16.mxu0 0
    %973 = vmatpush1.bf16.xpose.msra.mxu0 0
    %974 = vmatprep.subr.bf16.mxu0 0
    %975 = vmatpush1.bf16.xpose.msra.mxu0 0
    %976 = vmatprep.subr.bf16.mxu0 0
    %977 = vmatpush1.bf16.xpose.msra.mxu0 0
    %978 = vmatprep.subr.bf16.mxu0 0
    %979 = vmatpush1.bf16.xpose.msra.mxu0 0
    %980 = vmatprep.subr.bf16.mxu0 0
    %981 = vmatpush1.bf16.xpose.msra.mxu0 0
    %982 = vmatprep.subr.bf16.mxu0 0
    %983 = vmatpush1.bf16.xpose.msra.mxu0 0
    %984 = vmatprep.subr.bf16.mxu0 0
    %985 = vmatpush1.bf16.xpose.msra.mxu0 0
    %986 = vmatprep.subr.bf16.mxu0 0
    %987 = vmatpush1.bf16.xpose.msra.mxu0 0
    %988 = vmatprep.mubr.bf16.mxu0 0
    %989 = vmatmul.mubr.bf16.gmra.mrb[0].mxu0 %v951
    %v990 = vpop.f32.mrb[0].mxu0
    %v991 = vadd.f32 0.0, %v990
    %v992 = vpop.f32.mrb[0].mxu0
    %v993 = vpop.f32.mrb[0].mxu0
    %v994 = vpop.f32.mrb[0].mxu0
    %995 = vdwg.mxu0
    %v997 = vsel %vm949, %v946, 0
    %v1000 = vsel %vm949, %v948, 0
    %1002 = vmatprep.subr.bf16.mxu0 0
    %1003 = vmatpush1.bf16.xpose.msra.mxu0 %v1000
    %1004 = vmatprep.subr.bf16.mxu0 0
    %1005 = vmatpush1.bf16.xpose.msra.mxu0 0
    %1006 = vmatprep.subr.bf16.mxu0 0
    %1007 = vmatpush1.bf16.xpose.msra.mxu0 0
    %1008 = vmatprep.subr.bf16.mxu0 0
    %1009 = vmatpush1.bf16.xpose.msra.mxu0 0
    %1010 = vmatprep.subr.bf16.mxu0 0
    %1011 = vmatpush1.bf16.xpose.msra.mxu0 0
    %1012 = vmatprep.subr.bf16.mxu0 0
    %1013 = vmatpush1.bf16.xpose.msra.mxu0 0
    %1014 = vmatprep.subr.bf16.mxu0 0
    %1015 = vmatpush1.bf16.xpose.msra.mxu0 0
    %1016 = vmatprep.subr.bf16.mxu0 0
    %1017 = vmatpush1.bf16.xpose.msra.mxu0 0
    %1018 = vmatprep.subr.bf16.mxu0 0
    %1019 = vmatpush1.bf16.xpose.msra.mxu0 0
    %1020 = vmatprep.subr.bf16.mxu0 0
    %1021 = vmatpush1.bf16.xpose.msra.mxu0 0
    %1022 = vmatprep.subr.bf16.mxu0 0
    %1023 = vmatpush1.bf16.xpose.msra.mxu0 0
    %1024 = vmatprep.subr.bf16.mxu0 0
    %1025 = vmatpush1.bf16.xpose.msra.mxu0 0
    %1026 = vmatprep.subr.bf16.mxu0 0
    %1027 = vmatpush1.bf16.xpose.msra.mxu0 0
    %1028 = vmatprep.subr.bf16.mxu0 0
    %1029 = vmatpush1.bf16.xpose.msra.mxu0 0
    %1030 = vmatprep.subr.bf16.mxu0 0
    %1031 = vmatpush1.bf16.xpose.msra.mxu0 0
    %1032 = vmatprep.subr.bf16.mxu0 0
    %1033 = vmatpush1.bf16.xpose.msra.mxu0 0
    %1034 = vmatprep.mubr.bf16.mxu0 0
    %1035 = vmatmul.mubr.bf16.gmra.mrb[0].mxu0 %v997
    %v1036 = vpop.f32.mrb[0].mxu0
    %v1037 = vadd.f32 0.0, %v1036
    %v1038 = vpop.f32.mrb[0].mxu0
    %v1039 = vpop.f32.mrb[0].mxu0
    %v1040 = vpop.f32.mrb[0].mxu0
    %1041 = vdwg.mxu0
    %vm1042 = vcmask 64512
    %v1043 = vsel %vm1042, %v991, -inf
    %1044 = vmax.xlane.f32.xlu0 %v1043
    %v1045 = vpop.xlane.xlu0 %1044
    %v1046 = vsel %vm1042, %v1037, -inf
    %1047 = vmax.xlane.f32.xlu0 %v1046
    %v1048 = vpop.xlane.xlu0 %1047
    %v1049 = vsub.f32 %v991, %v1045
    %v1050 = vsub.f32 %v1037, %v1048
    %v1051 = vmul.f32 %v1049, 1.442695
    %v1052 = vpow.pop %v1051
    %v1053 = vmul.f32 %v1050, 1.442695
    %v1054 = vpow.pop %v1053
    %v1055 = vsel %vm1042, %v1052, 0.0
    %1056 = vadd.xlane.f32.xlu0 %v1055
    %v1057 = vpop.xlane.xlu0 %1056
    %v1058 = vsel %vm1042, %v1054, 0.0
    %1059 = vadd.xlane.f32.xlu0 %v1058
    %v1060 = vpop.xlane.xlu0 %1059
    %v1061 = vrcp.pop %v1057
    %v1062 = vrcp.pop %v1060
    %v1063 = vmul.f32 %v1052, %v1061
    %v1064 = vmul.f32 %v1054, %v1062
    %v1065 = vpack.c.bf16 %v1063, %v1063
    %v1066 = vpack.c.bf16 %v1064, %v1064
    %v1067 = vpack.c.bf16 %v937, %v937
    %v1068 = vpack.c.bf16 %v941, %v941
    %v1070 = vsel %vm1042, %v1065, 0
    %vm1072 = vcmask 1043456
    %v1074 = vsel %vm1072, %v1067, 0
    %1076 = vmatprep.subr.bf16.mxu0 0
    %1077 = vmatpush1.bf16.msra.mxu0 %v1074
    %1078 = vmatprep.subr.bf16.mxu0 0
    %1079 = vmatpush1.bf16.msra.mxu0 0
    %1080 = vmatprep.subr.bf16.mxu0 0
    %1081 = vmatpush1.bf16.msra.mxu0 0
    %1082 = vmatprep.subr.bf16.mxu0 0
    %1083 = vmatpush1.bf16.msra.mxu0 0
    %1084 = vmatprep.subr.bf16.mxu0 0
    %1085 = vmatpush1.bf16.msra.mxu0 0
    %1086 = vmatprep.subr.bf16.mxu0 0
    %1087 = vmatpush1.bf16.msra.mxu0 0
    %1088 = vmatprep.subr.bf16.mxu0 0
    %1089 = vmatpush1.bf16.msra.mxu0 0
    %1090 = vmatprep.subr.bf16.mxu0 0
    %1091 = vmatpush1.bf16.msra.mxu0 0
    %1092 = vmatprep.subr.bf16.mxu0 0
    %1093 = vmatpush1.bf16.msra.mxu0 0
    %1094 = vmatprep.subr.bf16.mxu0 0
    %1095 = vmatpush1.bf16.msra.mxu0 0
    %1096 = vmatprep.subr.bf16.mxu0 0
    %1097 = vmatpush1.bf16.msra.mxu0 0
    %1098 = vmatprep.subr.bf16.mxu0 0
    %1099 = vmatpush1.bf16.msra.mxu0 0
    %1100 = vmatprep.subr.bf16.mxu0 0
    %1101 = vmatpush1.bf16.msra.mxu0 0
    %1102 = vmatprep.subr.bf16.mxu0 0
    %1103 = vmatpush1.bf16.msra.mxu0 0
    %1104 = vmatprep.subr.bf16.mxu0 0
    %1105 = vmatpush1.bf16.msra.mxu0 0
    %1106 = vmatprep.subr.bf16.mxu0 0
    %1107 = vmatpush1.bf16.msra.mxu0 0
    %1108 = vmatprep.mubr.bf16.mxu0 0
    %1109 = vmatmul.mubr.bf16.gmra.mrb[0].mxu0 %v1070
    %v1110 = vpop.f32.mrb[0].mxu0
    %v1111 = vadd.f32 0.0, %v1110
    %v1112 = vpop.f32.mrb[0].mxu0
    %v1113 = vpop.f32.mrb[0].mxu0
    %v1114 = vpop.f32.mrb[0].mxu0
    %1115 = vdwg.mxu0
    %v1117 = vsel %vm1042, %v1066, 0
    %v1120 = vsel %vm1072, %v1068, 0
    %1122 = vmatprep.subr.bf16.mxu0 0
    %1123 = vmatpush1.bf16.msra.mxu0 %v1120
    %1124 = vmatprep.subr.bf16.mxu0 0
    %1125 = vmatpush1.bf16.msra.mxu0 0
    %1126 = vmatprep.subr.bf16.mxu0 0
    %1127 = vmatpush1.bf16.msra.mxu0 0
    %1128 = vmatprep.subr.bf16.mxu0 0
    %1129 = vmatpush1.bf16.msra.mxu0 0
    %1130 = vmatprep.subr.bf16.mxu0 0
    %1131 = vmatpush1.bf16.msra.mxu0 0
    %1132 = vmatprep.subr.bf16.mxu0 0
    %1133 = vmatpush1.bf16.msra.mxu0 0
    %1134 = vmatprep.subr.bf16.mxu0 0
    %1135 = vmatpush1.bf16.msra.mxu0 0
    %1136 = vmatprep.subr.bf16.mxu0 0
    %1137 = vmatpush1.bf16.msra.mxu0 0
    %1138 = vmatprep.subr.bf16.mxu0 0
    %1139 = vmatpush1.bf16.msra.mxu0 0
    %1140 = vmatprep.subr.bf16.mxu0 0
    %1141 = vmatpush1.bf16.msra.mxu0 0
    %1142 = vmatprep.subr.bf16.mxu0 0
    %1143 = vmatpush1.bf16.msra.mxu0 0
    %1144 = vmatprep.subr.bf16.mxu0 0
    %1145 = vmatpush1.bf16.msra.mxu0 0
    %1146 = vmatprep.subr.bf16.mxu0 0
    %1147 = vmatpush1.bf16.msra.mxu0 0
    %1148 = vmatprep.subr.bf16.mxu0 0
    %1149 = vmatpush1.bf16.msra.mxu0 0
    %1150 = vmatprep.subr.bf16.mxu0 0
    %1151 = vmatpush1.bf16.msra.mxu0 0
    %1152 = vmatprep.subr.bf16.mxu0 0
    %1153 = vmatpush1.bf16.msra.mxu0 0
    %1154 = vmatprep.mubr.bf16.mxu0 0
    %1155 = vmatmul.mubr.bf16.gmra.mrb[0].mxu0 %v1117
    %v1156 = vpop.f32.mrb[0].mxu0
    %v1157 = vadd.f32 0.0, %v1156
    %v1158 = vpop.f32.mrb[0].mxu0
    %v1159 = vpop.f32.mrb[0].mxu0
    %v1160 = vpop.f32.mrb[0].mxu0
    %1161 = vdwg.mxu0
    %1163 = vrot.lane.b32.xlu0 %v945, 64
    %v1164 = vpop.permute.xlu0 %1163
    %1166 = vrot.lane.b32.xlu0 %v947, 64
    %v1167 = vpop.permute.xlu0 %1166
    %v1169 = vsel %vm949, %v1164, 0
    %v1172 = vsel %vm949, %v1167, 0
    %1174 = vmatprep.subr.bf16.mxu0 0
    %1175 = vmatpush1.bf16.xpose.msra.mxu0 %v1172
    %1176 = vmatprep.subr.bf16.mxu0 0
    %1177 = vmatpush1.bf16.xpose.msra.mxu0 0
    %1178 = vmatprep.subr.bf16.mxu0 0
    %1179 = vmatpush1.bf16.xpose.msra.mxu0 0
    %1180 = vmatprep.subr.bf16.mxu0 0
    %1181 = vmatpush1.bf16.xpose.msra.mxu0 0
    %1182 = vmatprep.subr.bf16.mxu0 0
    %1183 = vmatpush1.bf16.xpose.msra.mxu0 0
    %1184 = vmatprep.subr.bf16.mxu0 0
    %1185 = vmatpush1.bf16.xpose.msra.mxu0 0
    %1186 = vmatprep.subr.bf16.mxu0 0
    %1187 = vmatpush1.bf16.xpose.msra.mxu0 0
    %1188 = vmatprep.subr.bf16.mxu0 0
    %1189 = vmatpush1.bf16.xpose.msra.mxu0 0
    %1190 = vmatprep.subr.bf16.mxu0 0
    %1191 = vmatpush1.bf16.xpose.msra.mxu0 0
    %1192 = vmatprep.subr.bf16.mxu0 0
    %1193 = vmatpush1.bf16.xpose.msra.mxu0 0
    %1194 = vmatprep.subr.bf16.mxu0 0
    %1195 = vmatpush1.bf16.xpose.msra.mxu0 0
    %1196 = vmatprep.subr.bf16.mxu0 0
    %1197 = vmatpush1.bf16.xpose.msra.mxu0 0
    %1198 = vmatprep.subr.bf16.mxu0 0
    %1199 = vmatpush1.bf16.xpose.msra.mxu0 0
    %1200 = vmatprep.subr.bf16.mxu0 0
    %1201 = vmatpush1.bf16.xpose.msra.mxu0 0
    %1202 = vmatprep.subr.bf16.mxu0 0
    %1203 = vmatpush1.bf16.xpose.msra.mxu0 0
    %1204 = vmatprep.subr.bf16.mxu0 0
    %1205 = vmatpush1.bf16.xpose.msra.mxu0 0
    %1206 = vmatprep.mubr.bf16.mxu0 0
    %1207 = vmatmul.mubr.bf16.gmra.mrb[0].mxu0 %v1169
    %v1208 = vpop.f32.mrb[0].mxu0
    %v1209 = vadd.f32 0.0, %v1208
    %v1210 = vpop.f32.mrb[0].mxu0
    %v1211 = vpop.f32.mrb[0].mxu0
    %v1212 = vpop.f32.mrb[0].mxu0
    %1213 = vdwg.mxu0
    %1215 = vrot.lane.b32.xlu0 %v946, 64
    %v1216 = vpop.permute.xlu0 %1215
    %1218 = vrot.lane.b32.xlu0 %v948, 64
    %v1219 = vpop.permute.xlu0 %1218
    %v1221 = vsel %vm949, %v1216, 0
    %v1224 = vsel %vm949, %v1219, 0
    %1226 = vmatprep.subr.bf16.mxu0 0
    %1227 = vmatpush1.bf16.xpose.msra.mxu0 %v1224
    %1228 = vmatprep.subr.bf16.mxu0 0
    %1229 = vmatpush1.bf16.xpose.msra.mxu0 0
    %1230 = vmatprep.subr.bf16.mxu0 0
    %1231 = vmatpush1.bf16.xpose.msra.mxu0 0
    %1232 = vmatprep.subr.bf16.mxu0 0
    %1233 = vmatpush1.bf16.xpose.msra.mxu0 0
    %1234 = vmatprep.subr.bf16.mxu0 0
    %1235 = vmatpush1.bf16.xpose.msra.mxu0 0
    %1236 = vmatprep.subr.bf16.mxu0 0
    %1237 = vmatpush1.bf16.xpose.msra.mxu0 0
    %1238 = vmatprep.subr.bf16.mxu0 0
    %1239 = vmatpush1.bf16.xpose.msra.mxu0 0
    %1240 = vmatprep.subr.bf16.mxu0 0
    %1241 = vmatpush1.bf16.xpose.msra.mxu0 0
    %1242 = vmatprep.subr.bf16.mxu0 0
    %1243 = vmatpush1.bf16.xpose.msra.mxu0 0
    %1244 = vmatprep.subr.bf16.mxu0 0
    %1245 = vmatpush1.bf16.xpose.msra.mxu0 0
    %1246 = vmatprep.subr.bf16.mxu0 0
    %1247 = vmatpush1.bf16.xpose.msra.mxu0 0
    %1248 = vmatprep.subr.bf16.mxu0 0
    %1249 = vmatpush1.bf16.xpose.msra.mxu0 0
    %1250 = vmatprep.subr.bf16.mxu0 0
    %1251 = vmatpush1.bf16.xpose.msra.mxu0 0
    %1252 = vmatprep.subr.bf16.mxu0 0
    %1253 = vmatpush1.bf16.xpose.msra.mxu0 0
    %1254 = vmatprep.subr.bf16.mxu0 0
    %1255 = vmatpush1.bf16.xpose.msra.mxu0 0
    %1256 = vmatprep.subr.bf16.mxu0 0
    %1257 = vmatpush1.bf16.xpose.msra.mxu0 0
    %1258 = vmatprep.mubr.bf16.mxu0 0
    %1259 = vmatmul.mubr.bf16.gmra.mrb[0].mxu0 %v1221
    %v1260 = vpop.f32.mrb[0].mxu0
    %v1261 = vadd.f32 0.0, %v1260
    %v1262 = vpop.f32.mrb[0].mxu0
    %v1263 = vpop.f32.mrb[0].mxu0
    %v1264 = vpop.f32.mrb[0].mxu0
    %1265 = vdwg.mxu0
    %v1266 = vsel %vm1042, %v1209, -inf
    %1267 = vmax.xlane.f32.xlu0 %v1266
    %v1268 = vpop.xlane.xlu0 %1267
    %v1269 = vsel %vm1042, %v1261, -inf
    %1270 = vmax.xlane.f32.xlu0 %v1269
    %v1271 = vpop.xlane.xlu0 %1270
    %v1272 = vsub.f32 %v1209, %v1268
    %v1273 = vsub.f32 %v1261, %v1271
    %v1274 = vmul.f32 %v1272, 1.442695
    %v1275 = vpow.pop %v1274
    %v1276 = vmul.f32 %v1273, 1.442695
    %v1277 = vpow.pop %v1276
    %v1278 = vsel %vm1042, %v1275, 0.0
    %1279 = vadd.xlane.f32.xlu0 %v1278
    %v1280 = vpop.xlane.xlu0 %1279
    %v1281 = vsel %vm1042, %v1277, 0.0
    %1282 = vadd.xlane.f32.xlu0 %v1281
    %v1283 = vpop.xlane.xlu0 %1282
    %v1284 = vrcp.pop %v1280
    %v1285 = vrcp.pop %v1283
    %v1286 = vmul.f32 %v1275, %v1284
    %v1287 = vmul.f32 %v1277, %v1285
    %v1288 = vpack.c.bf16 %v1286, %v1286
    %v1289 = vpack.c.bf16 %v1287, %v1287
    %1291 = vrot.lane.b32.xlu0 %v1067, 64
    %v1292 = vpop.permute.xlu0 %1291
    %v1294 = vsel %vm1042, %v1288, 0
    %v1297 = vsel %vm1072, %v1292, 0
    %1299 = vmatprep.subr.bf16.mxu0 0
    %1300 = vmatpush1.bf16.msra.mxu0 %v1297
    %1301 = vmatprep.subr.bf16.mxu0 0
    %1302 = vmatpush1.bf16.msra.mxu0 0
    %1303 = vmatprep.subr.bf16.mxu0 0
    %1304 = vmatpush1.bf16.msra.mxu0 0
    %1305 = vmatprep.subr.bf16.mxu0 0
    %1306 = vmatpush1.bf16.msra.mxu0 0
    %1307 = vmatprep.subr.bf16.mxu0 0
    %1308 = vmatpush1.bf16.msra.mxu0 0
    %1309 = vmatprep.subr.bf16.mxu0 0
    %1310 = vmatpush1.bf16.msra.mxu0 0
    %1311 = vmatprep.subr.bf16.mxu0 0
    %1312 = vmatpush1.bf16.msra.mxu0 0
    %1313 = vmatprep.subr.bf16.mxu0 0
    %1314 = vmatpush1.bf16.msra.mxu0 0
    %1315 = vmatprep.subr.bf16.mxu0 0
    %1316 = vmatpush1.bf16.msra.mxu0 0
    %1317 = vmatprep.subr.bf16.mxu0 0
    %1318 = vmatpush1.bf16.msra.mxu0 0
    %1319 = vmatprep.subr.bf16.mxu0 0
    %1320 = vmatpush1.bf16.msra.mxu0 0
    %1321 = vmatprep.subr.bf16.mxu0 0
    %1322 = vmatpush1.bf16.msra.mxu0 0
    %1323 = vmatprep.subr.bf16.mxu0 0
    %1324 = vmatpush1.bf16.msra.mxu0 0
    %1325 = vmatprep.subr.bf16.mxu0 0
    %1326 = vmatpush1.bf16.msra.mxu0 0
    %1327 = vmatprep.subr.bf16.mxu0 0
    %1328 = vmatpush1.bf16.msra.mxu0 0
    %1329 = vmatprep.subr.bf16.mxu0 0
    %1330 = vmatpush1.bf16.msra.mxu0 0
    %1331 = vmatprep.mubr.bf16.mxu0 0
    %1332 = vmatmul.mubr.bf16.gmra.mrb[0].mxu0 %v1294
    %v1333 = vpop.f32.mrb[0].mxu0
    %v1334 = vadd.f32 0.0, %v1333
    %v1335 = vpop.f32.mrb[0].mxu0
    %v1336 = vpop.f32.mrb[0].mxu0
    %v1337 = vpop.f32.mrb[0].mxu0
    %1338 = vdwg.mxu0
    %1340 = vrot.lane.b32.xlu0 %v1068, 64
    %v1341 = vpop.permute.xlu0 %1340
    %v1343 = vsel %vm1042, %v1289, 0
    %v1346 = vsel %vm1072, %v1341, 0
    %1348 = vmatprep.subr.bf16.mxu0 0
    %1349 = vmatpush1.bf16.msra.mxu0 %v1346
    %1350 = vmatprep.subr.bf16.mxu0 0
    %1351 = vmatpush1.bf16.msra.mxu0 0
    %1352 = vmatprep.subr.bf16.mxu0 0
    %1353 = vmatpush1.bf16.msra.mxu0 0
    %1354 = vmatprep.subr.bf16.mxu0 0
    %1355 = vmatpush1.bf16.msra.mxu0 0
    %1356 = vmatprep.subr.bf16.mxu0 0
    %1357 = vmatpush1.bf16.msra.mxu0 0
    %1358 = vmatprep.subr.bf16.mxu0 0
    %1359 = vmatpush1.bf16.msra.mxu0 0
    %1360 = vmatprep.subr.bf16.mxu0 0
    %1361 = vmatpush1.bf16.msra.mxu0 0
    %1362 = vmatprep.subr.bf16.mxu0 0
    %1363 = vmatpush1.bf16.msra.mxu0 0
    %1364 = vmatprep.subr.bf16.mxu0 0
    %1365 = vmatpush1.bf16.msra.mxu0 0
    %1366 = vmatprep.subr.bf16.mxu0 0
    %1367 = vmatpush1.bf16.msra.mxu0 0
    %1368 = vmatprep.subr.bf16.mxu0 0
    %1369 = vmatpush1.bf16.msra.mxu0 0
    %1370 = vmatprep.subr.bf16.mxu0 0
    %1371 = vmatpush1.bf16.msra.mxu0 0
    %1372 = vmatprep.subr.bf16.mxu0 0
    %1373 = vmatpush1.bf16.msra.mxu0 0
    %1374 = vmatprep.subr.bf16.mxu0 0
    %1375 = vmatpush1.bf16.msra.mxu0 0
    %1376 = vmatprep.subr.bf16.mxu0 0
    %1377 = vmatpush1.bf16.msra.mxu0 0
    %1378 = vmatprep.subr.bf16.mxu0 0
    %1379 = vmatpush1.bf16.msra.mxu0 0
    %1380 = vmatprep.mubr.bf16.mxu0 0
    %1381 = vmatmul.mubr.bf16.gmra.mrb[0].mxu0 %v1343
    %v1382 = vpop.f32.mrb[0].mxu0
    %v1383 = vadd.f32 0.0, %v1382
    %v1384 = vpop.f32.mrb[0].mxu0
    %v1385 = vpop.f32.mrb[0].mxu0
    %v1386 = vpop.f32.mrb[0].mxu0
    %1387 = vdwg.mxu0
    %v1388 = vpack.c.bf16 %v853, %v853
    %v1389 = vpack.c.bf16 %v857, %v857
    %v1390 = vpack.c.bf16 %v896, %v896
    %v1391 = vpack.c.bf16 %v900, %v900
    %v1393 = vsel %vm949, %v1388, 0
    %v1396 = vsel %vm949, %v1390, 0
    %1398 = vmatprep.subr.bf16.mxu0 0
    %1399 = vmatpush1.bf16.xpose.msra.mxu0 %v1396
    %1400 = vmatprep.subr.bf16.mxu0 0
    %1401 = vmatpush1.bf16.xpose.msra.mxu0 0
    %1402 = vmatprep.subr.bf16.mxu0 0
    %1403 = vmatpush1.bf16.xpose.msra.mxu0 0
    %1404 = vmatprep.subr.bf16.mxu0 0
    %1405 = vmatpush1.bf16.xpose.msra.mxu0 0
    %1406 = vmatprep.subr.bf16.mxu0 0
    %1407 = vmatpush1.bf16.xpose.msra.mxu0 0
    %1408 = vmatprep.subr.bf16.mxu0 0
    %1409 = vmatpush1.bf16.xpose.msra.mxu0 0
    %1410 = vmatprep.subr.bf16.mxu0 0
    %1411 = vmatpush1.bf16.xpose.msra.mxu0 0
    %1412 = vmatprep.subr.bf16.mxu0 0
    %1413 = vmatpush1.bf16.xpose.msra.mxu0 0
    %1414 = vmatprep.subr.bf16.mxu0 0
    %1415 = vmatpush1.bf16.xpose.msra.mxu0 0
    %1416 = vmatprep.subr.bf16.mxu0 0
    %1417 = vmatpush1.bf16.xpose.msra.mxu0 0
    %1418 = vmatprep.subr.bf16.mxu0 0
    %1419 = vmatpush1.bf16.xpose.msra.mxu0 0
    %1420 = vmatprep.subr.bf16.mxu0 0
    %1421 = vmatpush1.bf16.xpose.msra.mxu0 0
    %1422 = vmatprep.subr.bf16.mxu0 0
    %1423 = vmatpush1.bf16.xpose.msra.mxu0 0
    %1424 = vmatprep.subr.bf16.mxu0 0
    %1425 = vmatpush1.bf16.xpose.msra.mxu0 0
    %1426 = vmatprep.subr.bf16.mxu0 0
    %1427 = vmatpush1.bf16.xpose.msra.mxu0 0
    %1428 = vmatprep.subr.bf16.mxu0 0
    %1429 = vmatpush1.bf16.xpose.msra.mxu0 0
    %1430 = vmatprep.mubr.bf16.mxu0 0
    %1431 = vmatmul.mubr.bf16.gmra.mrb[0].mxu0 %v1393
    %v1432 = vpop.f32.mrb[0].mxu0
    %v1433 = vadd.f32 0.0, %v1432
    %v1434 = vpop.f32.mrb[0].mxu0
    %v1435 = vpop.f32.mrb[0].mxu0
    %v1436 = vpop.f32.mrb[0].mxu0
    %1437 = vdwg.mxu0
    %v1439 = vsel %vm949, %v1389, 0
    %v1442 = vsel %vm949, %v1391, 0
    %1444 = vmatprep.subr.bf16.mxu0 0
    %1445 = vmatpush1.bf16.xpose.msra.mxu0 %v1442
    %1446 = vmatprep.subr.bf16.mxu0 0
    %1447 = vmatpush1.bf16.xpose.msra.mxu0 0
    %1448 = vmatprep.subr.bf16.mxu0 0
    %1449 = vmatpush1.bf16.xpose.msra.mxu0 0
    %1450 = vmatprep.subr.bf16.mxu0 0
    %1451 = vmatpush1.bf16.xpose.msra.mxu0 0
    %1452 = vmatprep.subr.bf16.mxu0 0
    %1453 = vmatpush1.bf16.xpose.msra.mxu0 0
    %1454 = vmatprep.subr.bf16.mxu0 0
    %1455 = vmatpush1.bf16.xpose.msra.mxu0 0
    %1456 = vmatprep.subr.bf16.mxu0 0
    %1457 = vmatpush1.bf16.xpose.msra.mxu0 0
    %1458 = vmatprep.subr.bf16.mxu0 0
    %1459 = vmatpush1.bf16.xpose.msra.mxu0 0
    %1460 = vmatprep.subr.bf16.mxu0 0
    %1461 = vmatpush1.bf16.xpose.msra.mxu0 0
    %1462 = vmatprep.subr.bf16.mxu0 0
    %1463 = vmatpush1.bf16.xpose.msra.mxu0 0
    %1464 = vmatprep.subr.bf16.mxu0 0
    %1465 = vmatpush1.bf16.xpose.msra.mxu0 0
    %1466 = vmatprep.subr.bf16.mxu0 0
    %1467 = vmatpush1.bf16.xpose.msra.mxu0 0
    %1468 = vmatprep.subr.bf16.mxu0 0
    %1469 = vmatpush1.bf16.xpose.msra.mxu0 0
    %1470 = vmatprep.subr.bf16.mxu0 0
    %1471 = vmatpush1.bf16.xpose.msra.mxu0 0
    %1472 = vmatprep.subr.bf16.mxu0 0
    %1473 = vmatpush1.bf16.xpose.msra.mxu0 0
    %1474 = vmatprep.subr.bf16.mxu0 0
    %1475 = vmatpush1.bf16.xpose.msra.mxu0 0
    %1476 = vmatprep.mubr.bf16.mxu0 0
    %1477 = vmatmul.mubr.bf16.gmra.mrb[0].mxu0 %v1439
    %v1478 = vpop.f32.mrb[0].mxu0
    %v1479 = vadd.f32 0.0, %v1478
    %v1480 = vpop.f32.mrb[0].mxu0
    %v1481 = vpop.f32.mrb[0].mxu0
    %v1482 = vpop.f32.mrb[0].mxu0
    %1483 = vdwg.mxu0
    %v1484 = vsel %vm1042, %v1433, -inf
    %1485 = vmax.xlane.f32.xlu0 %v1484
    %v1486 = vpop.xlane.xlu0 %1485
    %v1487 = vsel %vm1042, %v1479, -inf
    %1488 = vmax.xlane.f32.xlu0 %v1487
    %v1489 = vpop.xlane.xlu0 %1488
    %v1490 = vsub.f32 %v1433, %v1486
    %v1491 = vsub.f32 %v1479, %v1489
    %v1492 = vmul.f32 %v1490, 1.442695
    %v1493 = vpow.pop %v1492
    %v1494 = vmul.f32 %v1491, 1.442695
    %v1495 = vpow.pop %v1494
    %v1496 = vsel %vm1042, %v1493, 0.0
    %1497 = vadd.xlane.f32.xlu0 %v1496
    %v1498 = vpop.xlane.xlu0 %1497
    %v1499 = vsel %vm1042, %v1495, 0.0
    %1500 = vadd.xlane.f32.xlu0 %v1499
    %v1501 = vpop.xlane.xlu0 %1500
    %v1502 = vrcp.pop %v1498
    %v1503 = vrcp.pop %v1501
    %v1504 = vmul.f32 %v1493, %v1502
    %v1505 = vmul.f32 %v1495, %v1503
    %v1506 = vpack.c.bf16 %v1504, %v1504
    %v1507 = vpack.c.bf16 %v1505, %v1505
    %v1508 = vpack.c.bf16 %v939, %v939
    %v1509 = vpack.c.bf16 %v943, %v943
    %v1511 = vsel %vm1042, %v1506, 0
    %v1514 = vsel %vm1072, %v1508, 0
    %1516 = vmatprep.subr.bf16.mxu0 0
    %1517 = vmatpush1.bf16.msra.mxu0 %v1514
    %1518 = vmatprep.subr.bf16.mxu0 0
    %1519 = vmatpush1.bf16.msra.mxu0 0
    %1520 = vmatprep.subr.bf16.mxu0 0
    %1521 = vmatpush1.bf16.msra.mxu0 0
    %1522 = vmatprep.subr.bf16.mxu0 0
    %1523 = vmatpush1.bf16.msra.mxu0 0
    %1524 = vmatprep.subr.bf16.mxu0 0
    %1525 = vmatpush1.bf16.msra.mxu0 0
    %1526 = vmatprep.subr.bf16.mxu0 0
    %1527 = vmatpush1.bf16.msra.mxu0 0
    %1528 = vmatprep.subr.bf16.mxu0 0
    %1529 = vmatpush1.bf16.msra.mxu0 0
    %1530 = vmatprep.subr.bf16.mxu0 0
    %1531 = vmatpush1.bf16.msra.mxu0 0
    %1532 = vmatprep.subr.bf16.mxu0 0
    %1533 = vmatpush1.bf16.msra.mxu0 0
    %1534 = vmatprep.subr.bf16.mxu0 0
    %1535 = vmatpush1.bf16.msra.mxu0 0
    %1536 = vmatprep.subr.bf16.mxu0 0
    %1537 = vmatpush1.bf16.msra.mxu0 0
    %1538 = vmatprep.subr.bf16.mxu0 0
    %1539 = vmatpush1.bf16.msra.mxu0 0
    %1540 = vmatprep.subr.bf16.mxu0 0
    %1541 = vmatpush1.bf16.msra.mxu0 0
    %1542 = vmatprep.subr.bf16.mxu0 0
    %1543 = vmatpush1.bf16.msra.mxu0 0
    %1544 = vmatprep.subr.bf16.mxu0 0
    %1545 = vmatpush1.bf16.msra.mxu0 0
    %1546 = vmatprep.subr.bf16.mxu0 0
    %1547 = vmatpush1.bf16.msra.mxu0 0
    %1548 = vmatprep.mubr.bf16.mxu0 0
    %1549 = vmatmul.mubr.bf16.gmra.mrb[0].mxu0 %v1511
    %v1550 = vpop.f32.mrb[0].mxu0
    %v1551 = vadd.f32 0.0, %v1550
    %v1552 = vpop.f32.mrb[0].mxu0
    %v1553 = vpop.f32.mrb[0].mxu0
    %v1554 = vpop.f32.mrb[0].mxu0
    %1555 = vdwg.mxu0
    %v1557 = vsel %vm1042, %v1507, 0
    %v1560 = vsel %vm1072, %v1509, 0
    %1562 = vmatprep.subr.bf16.mxu0 0
    %1563 = vmatpush1.bf16.msra.mxu0 %v1560
    %1564 = vmatprep.subr.bf16.mxu0 0
    %1565 = vmatpush1.bf16.msra.mxu0 0
    %1566 = vmatprep.subr.bf16.mxu0 0
    %1567 = vmatpush1.bf16.msra.mxu0 0
    %1568 = vmatprep.subr.bf16.mxu0 0
    %1569 = vmatpush1.bf16.msra.mxu0 0
    %1570 = vmatprep.subr.bf16.mxu0 0
    %1571 = vmatpush1.bf16.msra.mxu0 0
    %1572 = vmatprep.subr.bf16.mxu0 0
    %1573 = vmatpush1.bf16.msra.mxu0 0
    %1574 = vmatprep.subr.bf16.mxu0 0
    %1575 = vmatpush1.bf16.msra.mxu0 0
    %1576 = vmatprep.subr.bf16.mxu0 0
    %1577 = vmatpush1.bf16.msra.mxu0 0
    %1578 = vmatprep.subr.bf16.mxu0 0
    %1579 = vmatpush1.bf16.msra.mxu0 0
    %1580 = vmatprep.subr.bf16.mxu0 0
    %1581 = vmatpush1.bf16.msra.mxu0 0
    %1582 = vmatprep.subr.bf16.mxu0 0
    %1583 = vmatpush1.bf16.msra.mxu0 0
    %1584 = vmatprep.subr.bf16.mxu0 0
    %1585 = vmatpush1.bf16.msra.mxu0 0
    %1586 = vmatprep.subr.bf16.mxu0 0
    %1587 = vmatpush1.bf16.msra.mxu0 0
    %1588 = vmatprep.subr.bf16.mxu0 0
    %1589 = vmatpush1.bf16.msra.mxu0 0
    %1590 = vmatprep.subr.bf16.mxu0 0
    %1591 = vmatpush1.bf16.msra.mxu0 0
    %1592 = vmatprep.subr.bf16.mxu0 0
    %1593 = vmatpush1.bf16.msra.mxu0 0
    %1594 = vmatprep.mubr.bf16.mxu0 0
    %1595 = vmatmul.mubr.bf16.gmra.mrb[0].mxu0 %v1557
    %v1596 = vpop.f32.mrb[0].mxu0
    %v1597 = vadd.f32 0.0, %v1596
    %v1598 = vpop.f32.mrb[0].mxu0
    %v1599 = vpop.f32.mrb[0].mxu0
    %v1600 = vpop.f32.mrb[0].mxu0
    %1601 = vdwg.mxu0
    %1603 = vrot.lane.b32.xlu0 %v1388, 64
    %v1604 = vpop.permute.xlu0 %1603
    %1606 = vrot.lane.b32.xlu0 %v1390, 64
    %v1607 = vpop.permute.xlu0 %1606
    %v1609 = vsel %vm949, %v1604, 0
    %v1612 = vsel %vm949, %v1607, 0
    %1614 = vmatprep.subr.bf16.mxu0 0
    %1615 = vmatpush1.bf16.xpose.msra.mxu0 %v1612
    %1616 = vmatprep.subr.bf16.mxu0 0
    %1617 = vmatpush1.bf16.xpose.msra.mxu0 0
    %1618 = vmatprep.subr.bf16.mxu0 0
    %1619 = vmatpush1.bf16.xpose.msra.mxu0 0
    %1620 = vmatprep.subr.bf16.mxu0 0
    %1621 = vmatpush1.bf16.xpose.msra.mxu0 0
    %1622 = vmatprep.subr.bf16.mxu0 0
    %1623 = vmatpush1.bf16.xpose.msra.mxu0 0
    %1624 = vmatprep.subr.bf16.mxu0 0
    %1625 = vmatpush1.bf16.xpose.msra.mxu0 0
    %1626 = vmatprep.subr.bf16.mxu0 0
    %1627 = vmatpush1.bf16.xpose.msra.mxu0 0
    %1628 = vmatprep.subr.bf16.mxu0 0
    %1629 = vmatpush1.bf16.xpose.msra.mxu0 0
    %1630 = vmatprep.subr.bf16.mxu0 0
    %1631 = vmatpush1.bf16.xpose.msra.mxu0 0
    %1632 = vmatprep.subr.bf16.mxu0 0
    %1633 = vmatpush1.bf16.xpose.msra.mxu0 0
    %1634 = vmatprep.subr.bf16.mxu0 0
    %1635 = vmatpush1.bf16.xpose.msra.mxu0 0
    %1636 = vmatprep.subr.bf16.mxu0 0
    %1637 = vmatpush1.bf16.xpose.msra.mxu0 0
    %1638 = vmatprep.subr.bf16.mxu0 0
    %1639 = vmatpush1.bf16.xpose.msra.mxu0 0
    %1640 = vmatprep.subr.bf16.mxu0 0
    %1641 = vmatpush1.bf16.xpose.msra.mxu0 0
    %1642 = vmatprep.subr.bf16.mxu0 0
    %1643 = vmatpush1.bf16.xpose.msra.mxu0 0
    %1644 = vmatprep.subr.bf16.mxu0 0
    %1645 = vmatpush1.bf16.xpose.msra.mxu0 0
    %1646 = vmatprep.mubr.bf16.mxu0 0
    %1647 = vmatmul.mubr.bf16.gmra.mrb[0].mxu0 %v1609
    %v1648 = vpop.f32.mrb[0].mxu0
    %v1649 = vadd.f32 0.0, %v1648
    %v1650 = vpop.f32.mrb[0].mxu0
    %v1651 = vpop.f32.mrb[0].mxu0
    %v1652 = vpop.f32.mrb[0].mxu0
    %1653 = vdwg.mxu0
    %1655 = vrot.lane.b32.xlu0 %v1389, 64
    %v1656 = vpop.permute.xlu0 %1655
    %1658 = vrot.lane.b32.xlu0 %v1391, 64
    %v1659 = vpop.permute.xlu0 %1658
    %v1661 = vsel %vm949, %v1656, 0
    %v1664 = vsel %vm949, %v1659, 0
    %1666 = vmatprep.subr.bf16.mxu0 0
    %1667 = vmatpush1.bf16.xpose.msra.mxu0 %v1664
    %1668 = vmatprep.subr.bf16.mxu0 0
    %1669 = vmatpush1.bf16.xpose.msra.mxu0 0
    %1670 = vmatprep.subr.bf16.mxu0 0
    %1671 = vmatpush1.bf16.xpose.msra.mxu0 0
    %1672 = vmatprep.subr.bf16.mxu0 0
    %1673 = vmatpush1.bf16.xpose.msra.mxu0 0
    %1674 = vmatprep.subr.bf16.mxu0 0
    %1675 = vmatpush1.bf16.xpose.msra.mxu0 0
    %1676 = vmatprep.subr.bf16.mxu0 0
    %1677 = vmatpush1.bf16.xpose.msra.mxu0 0
    %1678 = vmatprep.subr.bf16.mxu0 0
    %1679 = vmatpush1.bf16.xpose.msra.mxu0 0
    %1680 = vmatprep.subr.bf16.mxu0 0
    %1681 = vmatpush1.bf16.xpose.msra.mxu0 0
    %1682 = vmatprep.subr.bf16.mxu0 0
    %1683 = vmatpush1.bf16.xpose.msra.mxu0 0
    %1684 = vmatprep.subr.bf16.mxu0 0
    %1685 = vmatpush1.bf16.xpose.msra.mxu0 0
    %1686 = vmatprep.subr.bf16.mxu0 0
    %1687 = vmatpush1.bf16.xpose.msra.mxu0 0
    %1688 = vmatprep.subr.bf16.mxu0 0
    %1689 = vmatpush1.bf16.xpose.msra.mxu0 0
    %1690 = vmatprep.subr.bf16.mxu0 0
    %1691 = vmatpush1.bf16.xpose.msra.mxu0 0
    %1692 = vmatprep.subr.bf16.mxu0 0
    %1693 = vmatpush1.bf16.xpose.msra.mxu0 0
    %1694 = vmatprep.subr.bf16.mxu0 0
    %1695 = vmatpush1.bf16.xpose.msra.mxu0 0
    %1696 = vmatprep.subr.bf16.mxu0 0
    %1697 = vmatpush1.bf16.xpose.msra.mxu0 0
    %1698 = vmatprep.mubr.bf16.mxu0 0
    %1699 = vmatmul.mubr.bf16.gmra.mrb[0].mxu0 %v1661
    %v1700 = vpop.f32.mrb[0].mxu0
    %v1701 = vadd.f32 0.0, %v1700
    %v1702 = vpop.f32.mrb[0].mxu0
    %v1703 = vpop.f32.mrb[0].mxu0
    %v1704 = vpop.f32.mrb[0].mxu0
    %1705 = vdwg.mxu0
    %v1706 = vsel %vm1042, %v1649, -inf
    %1707 = vmax.xlane.f32.xlu0 %v1706
    %v1708 = vpop.xlane.xlu0 %1707
    %v1709 = vsel %vm1042, %v1701, -inf
    %1710 = vmax.xlane.f32.xlu0 %v1709
    %v1711 = vpop.xlane.xlu0 %1710
    %v1712 = vsub.f32 %v1649, %v1708
    %v1713 = vsub.f32 %v1701, %v1711
    %v1714 = vmul.f32 %v1712, 1.442695
    %v1715 = vpow.pop %v1714
    %v1716 = vmul.f32 %v1713, 1.442695
    %v1717 = vpow.pop %v1716
    %v1718 = vsel %vm1042, %v1715, 0.0
    %1719 = vadd.xlane.f32.xlu0 %v1718
    %v1720 = vpop.xlane.xlu0 %1719
    %v1721 = vsel %vm1042, %v1717, 0.0
    %1722 = vadd.xlane.f32.xlu0 %v1721
    %v1723 = vpop.xlane.xlu0 %1722
    %v1724 = vrcp.pop %v1720
    %v1725 = vrcp.pop %v1723
    %v1726 = vmul.f32 %v1715, %v1724
    %v1727 = vmul.f32 %v1717, %v1725
    %v1728 = vpack.c.bf16 %v1726, %v1726
    %v1729 = vpack.c.bf16 %v1727, %v1727
    %1731 = vrot.lane.b32.xlu0 %v1508, 64
    %v1732 = vpop.permute.xlu0 %1731
    %v1734 = vsel %vm1042, %v1728, 0
    %v1737 = vsel %vm1072, %v1732, 0
    %1739 = vmatprep.subr.bf16.mxu0 0
    %1740 = vmatpush1.bf16.msra.mxu0 %v1737
    %1741 = vmatprep.subr.bf16.mxu0 0
    %1742 = vmatpush1.bf16.msra.mxu0 0
    %1743 = vmatprep.subr.bf16.mxu0 0
    %1744 = vmatpush1.bf16.msra.mxu0 0
    %1745 = vmatprep.subr.bf16.mxu0 0
    %1746 = vmatpush1.bf16.msra.mxu0 0
    %1747 = vmatprep.subr.bf16.mxu0 0
    %1748 = vmatpush1.bf16.msra.mxu0 0
    %1749 = vmatprep.subr.bf16.mxu0 0
    %1750 = vmatpush1.bf16.msra.mxu0 0
    %1751 = vmatprep.subr.bf16.mxu0 0
    %1752 = vmatpush1.bf16.msra.mxu0 0
    %1753 = vmatprep.subr.bf16.mxu0 0
    %1754 = vmatpush1.bf16.msra.mxu0 0
    %1755 = vmatprep.subr.bf16.mxu0 0
    %1756 = vmatpush1.bf16.msra.mxu0 0
    %1757 = vmatprep.subr.bf16.mxu0 0
    %1758 = vmatpush1.bf16.msra.mxu0 0
    %1759 = vmatprep.subr.bf16.mxu0 0
    %1760 = vmatpush1.bf16.msra.mxu0 0
    %1761 = vmatprep.subr.bf16.mxu0 0
    %1762 = vmatpush1.bf16.msra.mxu0 0
    %1763 = vmatprep.subr.bf16.mxu0 0
    %1764 = vmatpush1.bf16.msra.mxu0 0
    %1765 = vmatprep.subr.bf16.mxu0 0
    %1766 = vmatpush1.bf16.msra.mxu0 0
    %1767 = vmatprep.subr.bf16.mxu0 0
    %1768 = vmatpush1.bf16.msra.mxu0 0
    %1769 = vmatprep.subr.bf16.mxu0 0
    %1770 = vmatpush1.bf16.msra.mxu0 0
    %1771 = vmatprep.mubr.bf16.mxu0 0
    %1772 = vmatmul.mubr.bf16.gmra.mrb[0].mxu0 %v1734
    %v1773 = vpop.f32.mrb[0].mxu0
    %v1774 = vadd.f32 0.0, %v1773
    %v1775 = vpop.f32.mrb[0].mxu0
    %v1776 = vpop.f32.mrb[0].mxu0
    %v1777 = vpop.f32.mrb[0].mxu0
    %1778 = vdwg.mxu0
    %1780 = vrot.lane.b32.xlu0 %v1509, 64
    %v1781 = vpop.permute.xlu0 %1780
    %v1783 = vsel %vm1042, %v1729, 0
    %v1786 = vsel %vm1072, %v1781, 0
    %1788 = vmatprep.subr.bf16.mxu0 0
    %1789 = vmatpush1.bf16.msra.mxu0 %v1786
    %1790 = vmatprep.subr.bf16.mxu0 0
    %1791 = vmatpush1.bf16.msra.mxu0 0
    %1792 = vmatprep.subr.bf16.mxu0 0
    %1793 = vmatpush1.bf16.msra.mxu0 0
    %1794 = vmatprep.subr.bf16.mxu0 0
    %1795 = vmatpush1.bf16.msra.mxu0 0
    %1796 = vmatprep.subr.bf16.mxu0 0
    %1797 = vmatpush1.bf16.msra.mxu0 0
    %1798 = vmatprep.subr.bf16.mxu0 0
    %1799 = vmatpush1.bf16.msra.mxu0 0
    %1800 = vmatprep.subr.bf16.mxu0 0
    %1801 = vmatpush1.bf16.msra.mxu0 0
    %1802 = vmatprep.subr.bf16.mxu0 0
    %1803 = vmatpush1.bf16.msra.mxu0 0
    %1804 = vmatprep.subr.bf16.mxu0 0
    %1805 = vmatpush1.bf16.msra.mxu0 0
    %1806 = vmatprep.subr.bf16.mxu0 0
    %1807 = vmatpush1.bf16.msra.mxu0 0
    %1808 = vmatprep.subr.bf16.mxu0 0
    %1809 = vmatpush1.bf16.msra.mxu0 0
    %1810 = vmatprep.subr.bf16.mxu0 0
    %1811 = vmatpush1.bf16.msra.mxu0 0
    %1812 = vmatprep.subr.bf16.mxu0 0
    %1813 = vmatpush1.bf16.msra.mxu0 0
    %1814 = vmatprep.subr.bf16.mxu0 0
    %1815 = vmatpush1.bf16.msra.mxu0 0
    %1816 = vmatprep.subr.bf16.mxu0 0
    %1817 = vmatpush1.bf16.msra.mxu0 0
    %1818 = vmatprep.subr.bf16.mxu0 0
    %1819 = vmatpush1.bf16.msra.mxu0 0
    %1820 = vmatprep.mubr.bf16.mxu0 0
    %1821 = vmatmul.mubr.bf16.gmra.mrb[0].mxu0 %v1783
    %v1822 = vpop.f32.mrb[0].mxu0
    %v1823 = vadd.f32 0.0, %v1822
    %v1824 = vpop.f32.mrb[0].mxu0
    %v1825 = vpop.f32.mrb[0].mxu0
    %v1826 = vpop.f32.mrb[0].mxu0
    %1827 = vdwg.mxu0
    %1830 = vrot.lane.b32.xlu0 %v1334, 64
    %v1831 = vpop.permute.xlu0 %1830
    %1832 = vrot.lane.b32.xlu0 %v1383, 64
    %v1833 = vpop.permute.xlu0 %1832
    %1838 = vrot.lane.b32.xlu0 %v1774, 64
    %v1839 = vpop.permute.xlu0 %1838
    %1840 = vrot.lane.b32.xlu0 %v1823, 64
    %v1841 = vpop.permute.xlu0 %1840
    %v1844 = vsel %vm949, %v1111, %v1831
    %v1845 = vsel %vm949, %v1157, %v1833
    %v1846 = vsel %vm949, %v1551, %v1839
    %v1847 = vsel %vm949, %v1597, %v1841
    %v1848 = vpack.c.bf16 %v1845, %v1844
    %v1849 = vpack.c.bf16 %v1847, %v1846
    %v1850 = vld [vmem:[#allocation10] sm:$0xff]
    %v1851 = vld [vmem:[#allocation10 + $0x8] sm:$0xff]
    %v1852 = vld [vmem:[#allocation10 + $0x10] sm:$0xff]
    %v1853 = vld [vmem:[#allocation10 + $0x18] sm:$0xff]
    %v1854 = vld [vmem:[#allocation10 + $0x20] sm:$0xff]
    %v1855 = vld [vmem:[#allocation10 + $0x28] sm:$0xff]
    %v1856 = vld [vmem:[#allocation10 + $0x30] sm:$0xff]
    %v1857 = vld [vmem:[#allocation10 + $0x38] sm:$0xff]
    %v1858 = vld [vmem:[#allocation10 + $0x40] sm:$0xff]
    %v1859 = vld [vmem:[#allocation10 + $0x48] sm:$0xff]
    %v1860 = vld [vmem:[#allocation10 + $0x50] sm:$0xff]
    %v1861 = vld [vmem:[#allocation10 + $0x58] sm:$0xff]
    %v1862 = vld [vmem:[#allocation10 + $0x60] sm:$0xff]
    %v1863 = vld [vmem:[#allocation10 + $0x68] sm:$0xff]
    %v1864 = vld [vmem:[#allocation10 + $0x70] sm:$0xff]
    %v1865 = vld [vmem:[#allocation10 + $0x78] sm:$0xff]
    %v1866 = vld [vmem:[#allocation10 + $0x80] sm:$0xff]
    %v1867 = vld [vmem:[#allocation10 + $0x88] sm:$0xff]
    %v1868 = vld [vmem:[#allocation10 + $0x90] sm:$0xff]
    %v1869 = vld [vmem:[#allocation10 + $0x98] sm:$0xff]
    %v1870 = vld [vmem:[#allocation10 + $0xa0] sm:$0xff]
    %v1871 = vld [vmem:[#allocation10 + $0xa8] sm:$0xff]
    %v1872 = vld [vmem:[#allocation10 + $0xb0] sm:$0xff]
    %v1873 = vld [vmem:[#allocation10 + $0xb8] sm:$0xff]
    %v1874 = vld [vmem:[#allocation10 + $0xc0] sm:$0xff]
    %v1875 = vld [vmem:[#allocation10 + $0xc8] sm:$0xff]
    %v1876 = vld [vmem:[#allocation10 + $0xd0] sm:$0xff]
    %v1877 = vld [vmem:[#allocation10 + $0xd8] sm:$0xff]
    %v1878 = vld [vmem:[#allocation10 + $0xe0] sm:$0xff]
    %v1879 = vld [vmem:[#allocation10 + $0xe8] sm:$0xff]
    %v1880 = vld [vmem:[#allocation10 + $0xf0] sm:$0xff]
    %v1881 = vld [vmem:[#allocation10 + $0xf8] sm:$0xff]
    %v1882 = vld [vmem:[%s6] sm:$0x3]
    %v1884 = vlaneseq
    %v1885 = vshrl.u32 %v1884, 7
    %v1886 = vsub.s32 0, %v1885
    %v1887 = vrot.slane %v1882, %v1886
    %v1888 = vlaneseq
    %v1889 = vshrl.u32 %v1888, 7
    %v1890 = vsub.s32 1, %v1889
    %v1891 = vrot.slane %v1882, %v1890
    %v1926 = vunpack.c.l.b16 %v1850
    %v1927 = vunpack.c.h.b16 %v1850
    %v1928 = vunpack.c.l.b16 %v1851
    %v1929 = vunpack.c.h.b16 %v1851
    %v1930 = vunpack.c.l.b16 %v1852
    %v1931 = vunpack.c.h.b16 %v1852
    %v1932 = vunpack.c.l.b16 %v1853
    %v1933 = vunpack.c.h.b16 %v1853
    %v1934 = vunpack.c.l.b16 %v1854
    %v1935 = vunpack.c.h.b16 %v1854
    %v1936 = vunpack.c.l.b16 %v1855
    %v1937 = vunpack.c.h.b16 %v1855
    %v1938 = vunpack.c.l.b16 %v1856
    %v1939 = vunpack.c.h.b16 %v1856
    %v1940 = vunpack.c.l.b16 %v1857
    %v1941 = vunpack.c.h.b16 %v1857
    %v1942 = vunpack.c.l.b16 %v1858
    %v1943 = vunpack.c.h.b16 %v1858
    %v1944 = vunpack.c.l.b16 %v1859
    %v1945 = vunpack.c.h.b16 %v1859
    %v1946 = vunpack.c.l.b16 %v1860
    %v1947 = vunpack.c.h.b16 %v1860
    %v1948 = vunpack.c.l.b16 %v1861
    %v1949 = vunpack.c.h.b16 %v1861
    %v1950 = vunpack.c.l.b16 %v1862
    %v1951 = vunpack.c.h.b16 %v1862
    %v1952 = vunpack.c.l.b16 %v1863
    %v1953 = vunpack.c.h.b16 %v1863
    %v1954 = vunpack.c.l.b16 %v1864
    %v1955 = vunpack.c.h.b16 %v1864
    %v1956 = vunpack.c.l.b16 %v1865
    %v1957 = vunpack.c.h.b16 %v1865
    %v1958 = vunpack.c.l.b16 %v1866
    %v1959 = vunpack.c.h.b16 %v1866
    %v1960 = vunpack.c.l.b16 %v1867
    %v1961 = vunpack.c.h.b16 %v1867
    %v1962 = vunpack.c.l.b16 %v1868
    %v1963 = vunpack.c.h.b16 %v1868
    %v1964 = vunpack.c.l.b16 %v1869
    %v1965 = vunpack.c.h.b16 %v1869
    %v1966 = vunpack.c.l.b16 %v1870
    %v1967 = vunpack.c.h.b16 %v1870
    %v1968 = vunpack.c.l.b16 %v1871
    %v1969 = vunpack.c.h.b16 %v1871
    %v1970 = vunpack.c.l.b16 %v1872
    %v1971 = vunpack.c.h.b16 %v1872
    %v1972 = vunpack.c.l.b16 %v1873
    %v1973 = vunpack.c.h.b16 %v1873
    %v1974 = vunpack.c.l.b16 %v1874
    %v1975 = vunpack.c.h.b16 %v1874
    %v1976 = vunpack.c.l.b16 %v1875
    %v1977 = vunpack.c.h.b16 %v1875
    %v1978 = vunpack.c.l.b16 %v1876
    %v1979 = vunpack.c.h.b16 %v1876
    %v1980 = vunpack.c.l.b16 %v1877
    %v1981 = vunpack.c.h.b16 %v1877
    %v1982 = vunpack.c.l.b16 %v1878
    %v1983 = vunpack.c.h.b16 %v1878
    %v1984 = vunpack.c.l.b16 %v1879
    %v1985 = vunpack.c.h.b16 %v1879
    %v1986 = vunpack.c.l.b16 %v1880
    %v1987 = vunpack.c.h.b16 %v1880
    %v1988 = vunpack.c.l.b16 %v1881
    %v1989 = vunpack.c.h.b16 %v1881
    %v1990 = vpack.c.b16 %v1928, %v1926
    %v1991 = vpack.c.b16 %v1929, %v1927
    %v1992 = vpack.c.b16 %v1932, %v1930
    %v1993 = vpack.c.b16 %v1933, %v1931
    %v1994 = vpack.c.b16 %v1936, %v1934
    %v1995 = vpack.c.b16 %v1937, %v1935
    %v1996 = vpack.c.b16 %v1940, %v1938
    %v1997 = vpack.c.b16 %v1941, %v1939
    %v1998 = vpack.c.b16 %v1944, %v1942
    %v1999 = vpack.c.b16 %v1945, %v1943
    %v2000 = vpack.c.b16 %v1948, %v1946
    %v2001 = vpack.c.b16 %v1949, %v1947
    %v2002 = vpack.c.b16 %v1952, %v1950
    %v2003 = vpack.c.b16 %v1953, %v1951
    %v2004 = vpack.c.b16 %v1956, %v1954
    %v2005 = vpack.c.b16 %v1957, %v1955
    %v2006 = vpack.c.b16 %v1960, %v1958
    %v2007 = vpack.c.b16 %v1961, %v1959
    %v2008 = vpack.c.b16 %v1964, %v1962
    %v2009 = vpack.c.b16 %v1965, %v1963
    %v2010 = vpack.c.b16 %v1968, %v1966
    %v2011 = vpack.c.b16 %v1969, %v1967
    %v2012 = vpack.c.b16 %v1972, %v1970
    %v2013 = vpack.c.b16 %v1973, %v1971
    %v2014 = vpack.c.b16 %v1976, %v1974
    %v2015 = vpack.c.b16 %v1977, %v1975
    %v2016 = vpack.c.b16 %v1980, %v1978
    %v2017 = vpack.c.b16 %v1981, %v1979
    %v2018 = vpack.c.b16 %v1984, %v1982
    %v2019 = vpack.c.b16 %v1985, %v1983
    %v2020 = vpack.c.b16 %v1988, %v1986
    %v2021 = vpack.c.b16 %v1989, %v1987
    %2054 = vmatprep.subr.bf16.mxu0 %v1991
    %2055 = vmatpush1.bf16.msra.mxu0 %v1990
    %2056 = vmatprep.subr.bf16.mxu0 %v1993
    %2057 = vmatpush1.bf16.msra.mxu0 %v1992
    %2058 = vmatprep.subr.bf16.mxu0 %v1995
    %2059 = vmatpush1.bf16.msra.mxu0 %v1994
    %2060 = vmatprep.subr.bf16.mxu0 %v1997
    %2061 = vmatpush1.bf16.msra.mxu0 %v1996
    %2062 = vmatprep.subr.bf16.mxu0 %v1999
    %2063 = vmatpush1.bf16.msra.mxu0 %v1998
    %2064 = vmatprep.subr.bf16.mxu0 %v2001
    %2065 = vmatpush1.bf16.msra.mxu0 %v2000
    %2066 = vmatprep.subr.bf16.mxu0 %v2003
    %2067 = vmatpush1.bf16.msra.mxu0 %v2002
    %2068 = vmatprep.subr.bf16.mxu0 %v2005
    %2069 = vmatpush1.bf16.msra.mxu0 %v2004
    %2070 = vmatprep.subr.bf16.mxu0 %v2007
    %2071 = vmatpush1.bf16.msra.mxu0 %v2006
    %2072 = vmatprep.subr.bf16.mxu0 %v2009
    %2073 = vmatpush1.bf16.msra.mxu0 %v2008
    %2074 = vmatprep.subr.bf16.mxu0 %v2011
    %2075 = vmatpush1.bf16.msra.mxu0 %v2010
    %2076 = vmatprep.subr.bf16.mxu0 %v2013
    %2077 = vmatpush1.bf16.msra.mxu0 %v2012
    %2078 = vmatprep.subr.bf16.mxu0 %v2015
    %2079 = vmatpush1.bf16.msra.mxu0 %v2014
    %2080 = vmatprep.subr.bf16.mxu0 %v2017
    %2081 = vmatpush1.bf16.msra.mxu0 %v2016
    %2082 = vmatprep.subr.bf16.mxu0 %v2019
    %2083 = vmatpush1.bf16.msra.mxu0 %v2018
    %2084 = vmatprep.subr.bf16.mxu0 %v2021
    %2085 = vmatpush1.bf16.msra.mxu0 %v2020
    %2086 = vmatprep.mubr.bf16.mxu0 %v1849
    %2087 = vmatmul.mubr.bf16.gmra.mrb[0].mxu0 %v1848
    %v2088 = vpop.f32.mrb[0].mxu0
    %v2089 = vadd.f32 %v1887, %v2088
    %v2090 = vpop.f32.mrb[0].mxu0
    %v2091 = vadd.f32 %v1891, %v2090
    %v2092 = vpop.f32.mrb[0].mxu0
    %v2093 = vadd.f32 %v1887, %v2092
    %v2094 = vpop.f32.mrb[0].mxu0
    %v2095 = vadd.f32 %v1891, %v2094
    %2096 = vdwg.mxu0
    %v2097 = vadd.f32 %v137, %v2089
    %v2098 = vadd.f32 %v138, %v2091
    %v2099 = vadd.f32 %v139, %v2093
    %v2100 = vadd.f32 %v140, %v2095
    %v2101 = vld [vmem:[%s7] sm:$0x3]
    %v2102 = vld [vmem:[%s8] sm:$0x3]
    %v2103 = vadd.f32 %v2097, %v2098
    %2104 = vadd.xlane.f32.xlu0 %v2103
    %v2105 = vpop.xlane.xlu0 %2104
    %v2106 = vadd.f32 %v2099, %v2100
    %2107 = vadd.xlane.f32.xlu0 %v2106
    %v2108 = vpop.xlane.xlu0 %2107
    %v2109 = vmul.f32 %v2105, %v149
    %v2110 = vmul.f32 %v2108, %v149
    %v2111 = vsub.f32 %v2097, %v2109
    %v2112 = vsub.f32 %v2098, %v2109
    %v2113 = vsub.f32 %v2099, %v2110
    %v2114 = vsub.f32 %v2100, %v2110
    %v2115 = vmul.f32 %v2111, %v2111
    %v2116 = vmul.f32 %v2112, %v2112
    %v2117 = vmul.f32 %v2113, %v2113
    %v2118 = vmul.f32 %v2114, %v2114
    %v2119 = vadd.f32 %v2115, %v2116
    %2120 = vadd.xlane.f32.xlu0 %v2119
    %v2121 = vpop.xlane.xlu0 %2120
    %v2122 = vadd.f32 %v2117, %v2118
    %2123 = vadd.xlane.f32.xlu0 %v2122
    %v2124 = vpop.xlane.xlu0 %2123
    %v2125 = vmul.f32 %v2121, %v149
    %v2126 = vmul.f32 %v2124, %v149
    %v2127 = vadd.f32 %v2125, 1e-05
    %v2128 = vadd.f32 %v2126, 1e-05
    %v2129 = vrsqrt.pop %v2127
    %v2130 = vrsqrt.pop %v2128
    %v2131 = vmul.f32 %v2111, %v2129
    %v2132 = vmul.f32 %v2112, %v2129
    %v2133 = vmul.f32 %v2113, %v2130
    %v2134 = vmul.f32 %v2114, %v2130
    %v2136 = vlaneseq
    %v2137 = vshrl.u32 %v2136, 7
    %v2138 = vsub.s32 0, %v2137
    %v2139 = vrot.slane %v2101, %v2138
    %v2140 = vlaneseq
    %v2141 = vshrl.u32 %v2140, 7
    %v2142 = vsub.s32 1, %v2141
    %v2143 = vrot.slane %v2101, %v2142
    %v2146 = vmul.f32 %v2131, %v2139
    %v2147 = vmul.f32 %v2132, %v2143
    %v2148 = vmul.f32 %v2133, %v2139
    %v2149 = vmul.f32 %v2134, %v2143
    %v2151 = vlaneseq
    %v2152 = vshrl.u32 %v2151, 7
    %v2153 = vsub.s32 0, %v2152
    %v2154 = vrot.slane %v2102, %v2153
    %v2155 = vlaneseq
    %v2156 = vshrl.u32 %v2155, 7
    %v2157 = vsub.s32 1, %v2156
    %v2158 = vrot.slane %v2102, %v2157
    %v2161 = vadd.f32 %v2146, %v2154
    %v2162 = vadd.f32 %v2147, %v2158
    %v2163 = vadd.f32 %v2148, %v2154
    %v2164 = vadd.f32 %v2149, %v2158
    %v2165 = vpack.c.bf16 %v2163, %v2161
    %v2166 = vpack.c.bf16 %v2164, %v2162
    %v2167 = vld [vmem:[#allocation11] sm:$0xff]
    %v2168 = vld [vmem:[#allocation11 + $0x8] sm:$0xff]
    %v2169 = vld [vmem:[#allocation11 + $0x10] sm:$0xff]
    %v2170 = vld [vmem:[#allocation11 + $0x18] sm:$0xff]
    %v2171 = vld [vmem:[#allocation11 + $0x20] sm:$0xff]
    %v2172 = vld [vmem:[#allocation11 + $0x28] sm:$0xff]
    %v2173 = vld [vmem:[#allocation11 + $0x30] sm:$0xff]
    %v2174 = vld [vmem:[#allocation11 + $0x38] sm:$0xff]
    %v2175 = vld [vmem:[#allocation11 + $0x40] sm:$0xff]
    %v2176 = vld [vmem:[#allocation11 + $0x48] sm:$0xff]
    %v2177 = vld [vmem:[#allocation11 + $0x50] sm:$0xff]
    %v2178 = vld [vmem:[#allocation11 + $0x58] sm:$0xff]
    %v2179 = vld [vmem:[#allocation11 + $0x60] sm:$0xff]
    %v2180 = vld [vmem:[#allocation11 + $0x68] sm:$0xff]
    %v2181 = vld [vmem:[#allocation11 + $0x70] sm:$0xff]
    %v2182 = vld [vmem:[#allocation11 + $0x78] sm:$0xff]
    %v2183 = vld [vmem:[#allocation11 + $0x80] sm:$0xff]
    %v2184 = vld [vmem:[#allocation11 + $0x88] sm:$0xff]
    %v2185 = vld [vmem:[#allocation11 + $0x90] sm:$0xff]
    %v2186 = vld [vmem:[#allocation11 + $0x98] sm:$0xff]
    %v2187 = vld [vmem:[#allocation11 + $0xa0] sm:$0xff]
    %v2188 = vld [vmem:[#allocation11 + $0xa8] sm:$0xff]
    %v2189 = vld [vmem:[#allocation11 + $0xb0] sm:$0xff]
    %v2190 = vld [vmem:[#allocation11 + $0xb8] sm:$0xff]
    %v2191 = vld [vmem:[#allocation11 + $0xc0] sm:$0xff]
    %v2192 = vld [vmem:[#allocation11 + $0xc8] sm:$0xff]
    %v2193 = vld [vmem:[#allocation11 + $0xd0] sm:$0xff]
    %v2194 = vld [vmem:[#allocation11 + $0xd8] sm:$0xff]
    %v2195 = vld [vmem:[#allocation11 + $0xe0] sm:$0xff]
    %v2196 = vld [vmem:[#allocation11 + $0xe8] sm:$0xff]
    %v2197 = vld [vmem:[#allocation11 + $0xf0] sm:$0xff]
    %v2198 = vld [vmem:[#allocation11 + $0xf8] sm:$0xff]
    %v2199 = vld [vmem:[#allocation11 + $0x100] sm:$0xff]
    %v2200 = vld [vmem:[#allocation11 + $0x108] sm:$0xff]
    %v2201 = vld [vmem:[#allocation11 + $0x110] sm:$0xff]
    %v2202 = vld [vmem:[#allocation11 + $0x118] sm:$0xff]
    %v2203 = vld [vmem:[#allocation11 + $0x120] sm:$0xff]
    %v2204 = vld [vmem:[#allocation11 + $0x128] sm:$0xff]
    %v2205 = vld [vmem:[#allocation11 + $0x130] sm:$0xff]
    %v2206 = vld [vmem:[#allocation11 + $0x138] sm:$0xff]
    %v2207 = vld [vmem:[#allocation11 + $0x140] sm:$0xff]
    %v2208 = vld [vmem:[#allocation11 + $0x148] sm:$0xff]
    %v2209 = vld [vmem:[#allocation11 + $0x150] sm:$0xff]
    %v2210 = vld [vmem:[#allocation11 + $0x158] sm:$0xff]
    %v2211 = vld [vmem:[#allocation11 + $0x160] sm:$0xff]
    %v2212 = vld [vmem:[#allocation11 + $0x168] sm:$0xff]
    %v2213 = vld [vmem:[#allocation11 + $0x170] sm:$0xff]
    %v2214 = vld [vmem:[#allocation11 + $0x178] sm:$0xff]
    %v2215 = vld [vmem:[#allocation11 + $0x180] sm:$0xff]
    %v2216 = vld [vmem:[#allocation11 + $0x188] sm:$0xff]
    %v2217 = vld [vmem:[#allocation11 + $0x190] sm:$0xff]
    %v2218 = vld [vmem:[#allocation11 + $0x198] sm:$0xff]
    %v2219 = vld [vmem:[#allocation11 + $0x1a0] sm:$0xff]
    %v2220 = vld [vmem:[#allocation11 + $0x1a8] sm:$0xff]
    %v2221 = vld [vmem:[#allocation11 + $0x1b0] sm:$0xff]
    %v2222 = vld [vmem:[#allocation11 + $0x1b8] sm:$0xff]
    %v2223 = vld [vmem:[#allocation11 + $0x1c0] sm:$0xff]
    %v2224 = vld [vmem:[#allocation11 + $0x1c8] sm:$0xff]
    %v2225 = vld [vmem:[#allocation11 + $0x1d0] sm:$0xff]
    %v2226 = vld [vmem:[#allocation11 + $0x1d8] sm:$0xff]
    %v2227 = vld [vmem:[#allocation11 + $0x1e0] sm:$0xff]
    %v2228 = vld [vmem:[#allocation11 + $0x1e8] sm:$0xff]
    %v2229 = vld [vmem:[#allocation11 + $0x1f0] sm:$0xff]
    %v2230 = vld [vmem:[#allocation11 + $0x1f8] sm:$0xff]
    %v2231 = vld [vmem:[#allocation11 + $0x200] sm:$0xff]
    %v2232 = vld [vmem:[#allocation11 + $0x208] sm:$0xff]
    %v2233 = vld [vmem:[#allocation11 + $0x210] sm:$0xff]
    %v2234 = vld [vmem:[#allocation11 + $0x218] sm:$0xff]
    %v2235 = vld [vmem:[#allocation11 + $0x220] sm:$0xff]
    %v2236 = vld [vmem:[#allocation11 + $0x228] sm:$0xff]
    %v2237 = vld [vmem:[#allocation11 + $0x230] sm:$0xff]
    %v2238 = vld [vmem:[#allocation11 + $0x238] sm:$0xff]
    %v2239 = vld [vmem:[#allocation11 + $0x240] sm:$0xff]
    %v2240 = vld [vmem:[#allocation11 + $0x248] sm:$0xff]
    %v2241 = vld [vmem:[#allocation11 + $0x250] sm:$0xff]
    %v2242 = vld [vmem:[#allocation11 + $0x258] sm:$0xff]
    %v2243 = vld [vmem:[#allocation11 + $0x260] sm:$0xff]
    %v2244 = vld [vmem:[#allocation11 + $0x268] sm:$0xff]
    %v2245 = vld [vmem:[#allocation11 + $0x270] sm:$0xff]
    %v2246 = vld [vmem:[#allocation11 + $0x278] sm:$0xff]
    %v2247 = vld [vmem:[#allocation11 + $0x280] sm:$0xff]
    %v2248 = vld [vmem:[#allocation11 + $0x288] sm:$0xff]
    %v2249 = vld [vmem:[#allocation11 + $0x290] sm:$0xff]
    %v2250 = vld [vmem:[#allocation11 + $0x298] sm:$0xff]
    %v2251 = vld [vmem:[#allocation11 + $0x2a0] sm:$0xff]
    %v2252 = vld [vmem:[#allocation11 + $0x2a8] sm:$0xff]
    %v2253 = vld [vmem:[#allocation11 + $0x2b0] sm:$0xff]
    %v2254 = vld [vmem:[#allocation11 + $0x2b8] sm:$0xff]
    %v2255 = vld [vmem:[#allocation11 + $0x2c0] sm:$0xff]
    %v2256 = vld [vmem:[#allocation11 + $0x2c8] sm:$0xff]
    %v2257 = vld [vmem:[#allocation11 + $0x2d0] sm:$0xff]
    %v2258 = vld [vmem:[#allocation11 + $0x2d8] sm:$0xff]
    %v2259 = vld [vmem:[#allocation11 + $0x2e0] sm:$0xff]
    %v2260 = vld [vmem:[#allocation11 + $0x2e8] sm:$0xff]
    %v2261 = vld [vmem:[#allocation11 + $0x2f0] sm:$0xff]
    %v2262 = vld [vmem:[#allocation11 + $0x2f8] sm:$0xff]
    %v2263 = vld [vmem:[#allocation11 + $0x300] sm:$0xff]
    %v2264 = vld [vmem:[#allocation11 + $0x308] sm:$0xff]
    %v2265 = vld [vmem:[#allocation11 + $0x310] sm:$0xff]
    %v2266 = vld [vmem:[#allocation11 + $0x318] sm:$0xff]
    %v2267 = vld [vmem:[#allocation11 + $0x320] sm:$0xff]
    %v2268 = vld [vmem:[#allocation11 + $0x328] sm:$0xff]
    %v2269 = vld [vmem:[#allocation11 + $0x330] sm:$0xff]
    %v2270 = vld [vmem:[#allocation11 + $0x338] sm:$0xff]
    %v2271 = vld [vmem:[#allocation11 + $0x340] sm:$0xff]
    %v2272 = vld [vmem:[#allocation11 + $0x348] sm:$0xff]
    %v2273 = vld [vmem:[#allocation11 + $0x350] sm:$0xff]
    %v2274 = vld [vmem:[#allocation11 + $0x358] sm:$0xff]
    %v2275 = vld [vmem:[#allocation11 + $0x360] sm:$0xff]
    %v2276 = vld [vmem:[#allocation11 + $0x368] sm:$0xff]
    %v2277 = vld [vmem:[#allocation11 + $0x370] sm:$0xff]
    %v2278 = vld [vmem:[#allocation11 + $0x378] sm:$0xff]
    %v2279 = vld [vmem:[#allocation11 + $0x380] sm:$0xff]
    %v2280 = vld [vmem:[#allocation11 + $0x388] sm:$0xff]
    %v2281 = vld [vmem:[#allocation11 + $0x390] sm:$0xff]
    %v2282 = vld [vmem:[#allocation11 + $0x398] sm:$0xff]
    %v2283 = vld [vmem:[#allocation11 + $0x3a0] sm:$0xff]
    %v2284 = vld [vmem:[#allocation11 + $0x3a8] sm:$0xff]
    %v2285 = vld [vmem:[#allocation11 + $0x3b0] sm:$0xff]
    %v2286 = vld [vmem:[#allocation11 + $0x3b8] sm:$0xff]
    %v2287 = vld [vmem:[#allocation11 + $0x3c0] sm:$0xff]
    %v2288 = vld [vmem:[#allocation11 + $0x3c8] sm:$0xff]
    %v2289 = vld [vmem:[#allocation11 + $0x3d0] sm:$0xff]
    %v2290 = vld [vmem:[#allocation11 + $0x3d8] sm:$0xff]
    %v2291 = vld [vmem:[#allocation11 + $0x3e0] sm:$0xff]
    %v2292 = vld [vmem:[#allocation11 + $0x3e8] sm:$0xff]
    %v2293 = vld [vmem:[#allocation11 + $0x3f0] sm:$0xff]
    %v2294 = vld [vmem:[#allocation11 + $0x3f8] sm:$0xff]
    %v2295 = vld [vmem:[%s10] sm:$0xff]
    %v2297 = vlaneseq
    %v2298 = vshrl.u32 %v2297, 7
    %v2299 = vsub.s32 0, %v2298
    %v2300 = vrot.slane %v2295, %v2299
    %v2301 = vlaneseq
    %v2302 = vshrl.u32 %v2301, 7
    %v2303 = vsub.s32 1, %v2302
    %v2304 = vrot.slane %v2295, %v2303
    %v2305 = vlaneseq
    %v2306 = vshrl.u32 %v2305, 7
    %v2307 = vsub.s32 2, %v2306
    %v2308 = vrot.slane %v2295, %v2307
    %v2309 = vlaneseq
    %v2310 = vshrl.u32 %v2309, 7
    %v2311 = vsub.s32 3, %v2310
    %v2312 = vrot.slane %v2295, %v2311
    %v2313 = vlaneseq
    %v2314 = vshrl.u32 %v2313, 7
    %v2315 = vsub.s32 4, %v2314
    %v2316 = vrot.slane %v2295, %v2315
    %v2317 = vlaneseq
    %v2318 = vshrl.u32 %v2317, 7
    %v2319 = vsub.s32 5, %v2318
    %v2320 = vrot.slane %v2295, %v2319
    %v2321 = vlaneseq
    %v2322 = vshrl.u32 %v2321, 7
    %v2323 = vsub.s32 6, %v2322
    %v2324 = vrot.slane %v2295, %v2323
    %v2325 = vlaneseq
    %v2326 = vshrl.u32 %v2325, 7
    %v2327 = vsub.s32 7, %v2326
    %v2328 = vrot.slane %v2295, %v2327
    %v2465 = vunpack.c.l.b16 %v2167
    %v2466 = vunpack.c.h.b16 %v2167
    %v2467 = vunpack.c.l.b16 %v2168
    %v2468 = vunpack.c.h.b16 %v2168
    %v2469 = vunpack.c.l.b16 %v2169
    %v2470 = vunpack.c.h.b16 %v2169
    %v2471 = vunpack.c.l.b16 %v2170
    %v2472 = vunpack.c.h.b16 %v2170
    %v2473 = vunpack.c.l.b16 %v2171
    %v2474 = vunpack.c.h.b16 %v2171
    %v2475 = vunpack.c.l.b16 %v2172
    %v2476 = vunpack.c.h.b16 %v2172
    %v2477 = vunpack.c.l.b16 %v2173
    %v2478 = vunpack.c.h.b16 %v2173
    %v2479 = vunpack.c.l.b16 %v2174
    %v2480 = vunpack.c.h.b16 %v2174
    %v2481 = vunpack.c.l.b16 %v2175
    %v2482 = vunpack.c.h.b16 %v2175
    %v2483 = vunpack.c.l.b16 %v2176
    %v2484 = vunpack.c.h.b16 %v2176
    %v2485 = vunpack.c.l.b16 %v2177
    %v2486 = vunpack.c.h.b16 %v2177
    %v2487 = vunpack.c.l.b16 %v2178
    %v2488 = vunpack.c.h.b16 %v2178
    %v2489 = vunpack.c.l.b16 %v2179
    %v2490 = vunpack.c.h.b16 %v2179
    %v2491 = vunpack.c.l.b16 %v2180
    %v2492 = vunpack.c.h.b16 %v2180
    %v2493 = vunpack.c.l.b16 %v2181
    %v2494 = vunpack.c.h.b16 %v2181
    %v2495 = vunpack.c.l.b16 %v2182
    %v2496 = vunpack.c.h.b16 %v2182
    %v2497 = vunpack.c.l.b16 %v2183
    %v2498 = vunpack.c.h.b16 %v2183
    %v2499 = vunpack.c.l.b16 %v2184
    %v2500 = vunpack.c.h.b16 %v2184
    %v2501 = vunpack.c.l.b16 %v2185
    %v2502 = vunpack.c.h.b16 %v2185
    %v2503 = vunpack.c.l.b16 %v2186
    %v2504 = vunpack.c.h.b16 %v2186
    %v2505 = vunpack.c.l.b16 %v2187
    %v2506 = vunpack.c.h.b16 %v2187
    %v2507 = vunpack.c.l.b16 %v2188
    %v2508 = vunpack.c.h.b16 %v2188
    %v2509 = vunpack.c.l.b16 %v2189
    %v2510 = vunpack.c.h.b16 %v2189
    %v2511 = vunpack.c.l.b16 %v2190
    %v2512 = vunpack.c.h.b16 %v2190
    %v2513 = vunpack.c.l.b16 %v2191
    %v2514 = vunpack.c.h.b16 %v2191
    %v2515 = vunpack.c.l.b16 %v2192
    %v2516 = vunpack.c.h.b16 %v2192
    %v2517 = vunpack.c.l.b16 %v2193
    %v2518 = vunpack.c.h.b16 %v2193
    %v2519 = vunpack.c.l.b16 %v2194
    %v2520 = vunpack.c.h.b16 %v2194
    %v2521 = vunpack.c.l.b16 %v2195
    %v2522 = vunpack.c.h.b16 %v2195
    %v2523 = vunpack.c.l.b16 %v2196
    %v2524 = vunpack.c.h.b16 %v2196
    %v2525 = vunpack.c.l.b16 %v2197
    %v2526 = vunpack.c.h.b16 %v2197
    %v2527 = vunpack.c.l.b16 %v2198
    %v2528 = vunpack.c.h.b16 %v2198
    %v2529 = vunpack.c.l.b16 %v2199
    %v2530 = vunpack.c.h.b16 %v2199
    %v2531 = vunpack.c.l.b16 %v2200
    %v2532 = vunpack.c.h.b16 %v2200
    %v2533 = vunpack.c.l.b16 %v2201
    %v2534 = vunpack.c.h.b16 %v2201
    %v2535 = vunpack.c.l.b16 %v2202
    %v2536 = vunpack.c.h.b16 %v2202
    %v2537 = vunpack.c.l.b16 %v2203
    %v2538 = vunpack.c.h.b16 %v2203
    %v2539 = vunpack.c.l.b16 %v2204
    %v2540 = vunpack.c.h.b16 %v2204
    %v2541 = vunpack.c.l.b16 %v2205
    %v2542 = vunpack.c.h.b16 %v2205
    %v2543 = vunpack.c.l.b16 %v2206
    %v2544 = vunpack.c.h.b16 %v2206
    %v2545 = vunpack.c.l.b16 %v2207
    %v2546 = vunpack.c.h.b16 %v2207
    %v2547 = vunpack.c.l.b16 %v2208
    %v2548 = vunpack.c.h.b16 %v2208
    %v2549 = vunpack.c.l.b16 %v2209
    %v2550 = vunpack.c.h.b16 %v2209
    %v2551 = vunpack.c.l.b16 %v2210
    %v2552 = vunpack.c.h.b16 %v2210
    %v2553 = vunpack.c.l.b16 %v2211
    %v2554 = vunpack.c.h.b16 %v2211
    %v2555 = vunpack.c.l.b16 %v2212
    %v2556 = vunpack.c.h.b16 %v2212
    %v2557 = vunpack.c.l.b16 %v2213
    %v2558 = vunpack.c.h.b16 %v2213
    %v2559 = vunpack.c.l.b16 %v2214
    %v2560 = vunpack.c.h.b16 %v2214
    %v2561 = vunpack.c.l.b16 %v2215
    %v2562 = vunpack.c.h.b16 %v2215
    %v2563 = vunpack.c.l.b16 %v2216
    %v2564 = vunpack.c.h.b16 %v2216
    %v2565 = vunpack.c.l.b16 %v2217
    %v2566 = vunpack.c.h.b16 %v2217
    %v2567 = vunpack.c.l.b16 %v2218
    %v2568 = vunpack.c.h.b16 %v2218
    %v2569 = vunpack.c.l.b16 %v2219
    %v2570 = vunpack.c.h.b16 %v2219
    %v2571 = vunpack.c.l.b16 %v2220
    %v2572 = vunpack.c.h.b16 %v2220
    %v2573 = vunpack.c.l.b16 %v2221
    %v2574 = vunpack.c.h.b16 %v2221
    %v2575 = vunpack.c.l.b16 %v2222
    %v2576 = vunpack.c.h.b16 %v2222
    %v2577 = vunpack.c.l.b16 %v2223
    %v2578 = vunpack.c.h.b16 %v2223
    %v2579 = vunpack.c.l.b16 %v2224
    %v2580 = vunpack.c.h.b16 %v2224
    %v2581 = vunpack.c.l.b16 %v2225
    %v2582 = vunpack.c.h.b16 %v2225
    %v2583 = vunpack.c.l.b16 %v2226
    %v2584 = vunpack.c.h.b16 %v2226
    %v2585 = vunpack.c.l.b16 %v2227
    %v2586 = vunpack.c.h.b16 %v2227
    %v2587 = vunpack.c.l.b16 %v2228
    %v2588 = vunpack.c.h.b16 %v2228
    %v2589 = vunpack.c.l.b16 %v2229
    %v2590 = vunpack.c.h.b16 %v2229
    %v2591 = vunpack.c.l.b16 %v2230
    %v2592 = vunpack.c.h.b16 %v2230
    %v2593 = vunpack.c.l.b16 %v2231
    %v2594 = vunpack.c.h.b16 %v2231
    %v2595 = vunpack.c.l.b16 %v2232
    %v2596 = vunpack.c.h.b16 %v2232
    %v2597 = vunpack.c.l.b16 %v2233
    %v2598 = vunpack.c.h.b16 %v2233
    %v2599 = vunpack.c.l.b16 %v2234
    %v2600 = vunpack.c.h.b16 %v2234
    %v2601 = vunpack.c.l.b16 %v2235
    %v2602 = vunpack.c.h.b16 %v2235
    %v2603 = vunpack.c.l.b16 %v2236
    %v2604 = vunpack.c.h.b16 %v2236
    %v2605 = vunpack.c.l.b16 %v2237
    %v2606 = vunpack.c.h.b16 %v2237
    %v2607 = vunpack.c.l.b16 %v2238
    %v2608 = vunpack.c.h.b16 %v2238
    %v2609 = vunpack.c.l.b16 %v2239
    %v2610 = vunpack.c.h.b16 %v2239
    %v2611 = vunpack.c.l.b16 %v2240
    %v2612 = vunpack.c.h.b16 %v2240
    %v2613 = vunpack.c.l.b16 %v2241
    %v2614 = vunpack.c.h.b16 %v2241
    %v2615 = vunpack.c.l.b16 %v2242
    %v2616 = vunpack.c.h.b16 %v2242
    %v2617 = vunpack.c.l.b16 %v2243
    %v2618 = vunpack.c.h.b16 %v2243
    %v2619 = vunpack.c.l.b16 %v2244
    %v2620 = vunpack.c.h.b16 %v2244
    %v2621 = vunpack.c.l.b16 %v2245
    %v2622 = vunpack.c.h.b16 %v2245
    %v2623 = vunpack.c.l.b16 %v2246
    %v2624 = vunpack.c.h.b16 %v2246
    %v2625 = vunpack.c.l.b16 %v2247
    %v2626 = vunpack.c.h.b16 %v2247
    %v2627 = vunpack.c.l.b16 %v2248
    %v2628 = vunpack.c.h.b16 %v2248
    %v2629 = vunpack.c.l.b16 %v2249
    %v2630 = vunpack.c.h.b16 %v2249
    %v2631 = vunpack.c.l.b16 %v2250
    %v2632 = vunpack.c.h.b16 %v2250
    %v2633 = vunpack.c.l.b16 %v2251
    %v2634 = vunpack.c.h.b16 %v2251
    %v2635 = vunpack.c.l.b16 %v2252
    %v2636 = vunpack.c.h.b16 %v2252
    %v2637 = vunpack.c.l.b16 %v2253
    %v2638 = vunpack.c.h.b16 %v2253
    %v2639 = vunpack.c.l.b16 %v2254
    %v2640 = vunpack.c.h.b16 %v2254
    %v2641 = vunpack.c.l.b16 %v2255
    %v2642 = vunpack.c.h.b16 %v2255
    %v2643 = vunpack.c.l.b16 %v2256
    %v2644 = vunpack.c.h.b16 %v2256
    %v2645 = vunpack.c.l.b16 %v2257
    %v2646 = vunpack.c.h.b16 %v2257
    %v2647 = vunpack.c.l.b16 %v2258
    %v2648 = vunpack.c.h.b16 %v2258
    %v2649 = vunpack.c.l.b16 %v2259
    %v2650 = vunpack.c.h.b16 %v2259
    %v2651 = vunpack.c.l.b16 %v2260
    %v2652 = vunpack.c.h.b16 %v2260
    %v2653 = vunpack.c.l.b16 %v2261
    %v2654 = vunpack.c.h.b16 %v2261
    %v2655 = vunpack.c.l.b16 %v2262
    %v2656 = vunpack.c.h.b16 %v2262
    %v2657 = vunpack.c.l.b16 %v2263
    %v2658 = vunpack.c.h.b16 %v2263
    %v2659 = vunpack.c.l.b16 %v2264
    %v2660 = vunpack.c.h.b16 %v2264
    %v2661 = vunpack.c.l.b16 %v2265
    %v2662 = vunpack.c.h.b16 %v2265
    %v2663 = vunpack.c.l.b16 %v2266
    %v2664 = vunpack.c.h.b16 %v2266
    %v2665 = vunpack.c.l.b16 %v2267
    %v2666 = vunpack.c.h.b16 %v2267
    %v2667 = vunpack.c.l.b16 %v2268
    %v2668 = vunpack.c.h.b16 %v2268
    %v2669 = vunpack.c.l.b16 %v2269
    %v2670 = vunpack.c.h.b16 %v2269
    %v2671 = vunpack.c.l.b16 %v2270
    %v2672 = vunpack.c.h.b16 %v2270
    %v2673 = vunpack.c.l.b16 %v2271
    %v2674 = vunpack.c.h.b16 %v2271
    %v2675 = vunpack.c.l.b16 %v2272
    %v2676 = vunpack.c.h.b16 %v2272
    %v2677 = vunpack.c.l.b16 %v2273
    %v2678 = vunpack.c.h.b16 %v2273
    %v2679 = vunpack.c.l.b16 %v2274
    %v2680 = vunpack.c.h.b16 %v2274
    %v2681 = vunpack.c.l.b16 %v2275
    %v2682 = vunpack.c.h.b16 %v2275
    %v2683 = vunpack.c.l.b16 %v2276
    %v2684 = vunpack.c.h.b16 %v2276
    %v2685 = vunpack.c.l.b16 %v2277
    %v2686 = vunpack.c.h.b16 %v2277
    %v2687 = vunpack.c.l.b16 %v2278
    %v2688 = vunpack.c.h.b16 %v2278
    %v2689 = vunpack.c.l.b16 %v2279
    %v2690 = vunpack.c.h.b16 %v2279
    %v2691 = vunpack.c.l.b16 %v2280
    %v2692 = vunpack.c.h.b16 %v2280
    %v2693 = vunpack.c.l.b16 %v2281
    %v2694 = vunpack.c.h.b16 %v2281
    %v2695 = vunpack.c.l.b16 %v2282
    %v2696 = vunpack.c.h.b16 %v2282
    %v2697 = vunpack.c.l.b16 %v2283
    %v2698 = vunpack.c.h.b16 %v2283
    %v2699 = vunpack.c.l.b16 %v2284
    %v2700 = vunpack.c.h.b16 %v2284
    %v2701 = vunpack.c.l.b16 %v2285
    %v2702 = vunpack.c.h.b16 %v2285
    %v2703 = vunpack.c.l.b16 %v2286
    %v2704 = vunpack.c.h.b16 %v2286
    %v2705 = vunpack.c.l.b16 %v2287
    %v2706 = vunpack.c.h.b16 %v2287
    %v2707 = vunpack.c.l.b16 %v2288
    %v2708 = vunpack.c.h.b16 %v2288
    %v2709 = vunpack.c.l.b16 %v2289
    %v2710 = vunpack.c.h.b16 %v2289
    %v2711 = vunpack.c.l.b16 %v2290
    %v2712 = vunpack.c.h.b16 %v2290
    %v2713 = vunpack.c.l.b16 %v2291
    %v2714 = vunpack.c.h.b16 %v2291
    %v2715 = vunpack.c.l.b16 %v2292
    %v2716 = vunpack.c.h.b16 %v2292
    %v2717 = vunpack.c.l.b16 %v2293
    %v2718 = vunpack.c.h.b16 %v2293
    %v2719 = vunpack.c.l.b16 %v2294
    %v2720 = vunpack.c.h.b16 %v2294
    %v2721 = vpack.c.b16 %v2473, %v2465
    %v2722 = vpack.c.b16 %v2474, %v2466
    %v2723 = vpack.c.b16 %v2475, %v2467
    %v2724 = vpack.c.b16 %v2476, %v2468
    %v2725 = vpack.c.b16 %v2477, %v2469
    %v2726 = vpack.c.b16 %v2478, %v2470
    %v2727 = vpack.c.b16 %v2479, %v2471
    %v2728 = vpack.c.b16 %v2480, %v2472
    %v2729 = vpack.c.b16 %v2489, %v2481
    %v2730 = vpack.c.b16 %v2490, %v2482
    %v2731 = vpack.c.b16 %v2491, %v2483
    %v2732 = vpack.c.b16 %v2492, %v2484
    %v2733 = vpack.c.b16 %v2493, %v2485
    %v2734 = vpack.c.b16 %v2494, %v2486
    %v2735 = vpack.c.b16 %v2495, %v2487
    %v2736 = vpack.c.b16 %v2496, %v2488
    %v2737 = vpack.c.b16 %v2505, %v2497
    %v2738 = vpack.c.b16 %v2506, %v2498
    %v2739 = vpack.c.b16 %v2507, %v2499
    %v2740 = vpack.c.b16 %v2508, %v2500
    %v2741 = vpack.c.b16 %v2509, %v2501
    %v2742 = vpack.c.b16 %v2510, %v2502
    %v2743 = vpack.c.b16 %v2511, %v2503
    %v2744 = vpack.c.b16 %v2512, %v2504
    %v2745 = vpack.c.b16 %v2521, %v2513
    %v2746 = vpack.c.b16 %v2522, %v2514
    %v2747 = vpack.c.b16 %v2523, %v2515
    %v2748 = vpack.c.b16 %v2524, %v2516
    %v2749 = vpack.c.b16 %v2525, %v2517
    %v2750 = vpack.c.b16 %v2526, %v2518
    %v2751 = vpack.c.b16 %v2527, %v2519
    %v2752 = vpack.c.b16 %v2528, %v2520
    %v2753 = vpack.c.b16 %v2537, %v2529
    %v2754 = vpack.c.b16 %v2538, %v2530
    %v2755 = vpack.c.b16 %v2539, %v2531
    %v2756 = vpack.c.b16 %v2540, %v2532
    %v2757 = vpack.c.b16 %v2541, %v2533
    %v2758 = vpack.c.b16 %v2542, %v2534
    %v2759 = vpack.c.b16 %v2543, %v2535
    %v2760 = vpack.c.b16 %v2544, %v2536
    %v2761 = vpack.c.b16 %v2553, %v2545
    %v2762 = vpack.c.b16 %v2554, %v2546
    %v2763 = vpack.c.b16 %v2555, %v2547
    %v2764 = vpack.c.b16 %v2556, %v2548
    %v2765 = vpack.c.b16 %v2557, %v2549
    %v2766 = vpack.c.b16 %v2558, %v2550
    %v2767 = vpack.c.b16 %v2559, %v2551
    %v2768 = vpack.c.b16 %v2560, %v2552
    %v2769 = vpack.c.b16 %v2569, %v2561
    %v2770 = vpack.c.b16 %v2570, %v2562
    %v2771 = vpack.c.b16 %v2571, %v2563
    %v2772 = vpack.c.b16 %v2572, %v2564
    %v2773 = vpack.c.b16 %v2573, %v2565
    %v2774 = vpack.c.b16 %v2574, %v2566
    %v2775 = vpack.c.b16 %v2575, %v2567
    %v2776 = vpack.c.b16 %v2576, %v2568
    %v2777 = vpack.c.b16 %v2585, %v2577
    %v2778 = vpack.c.b16 %v2586, %v2578
    %v2779 = vpack.c.b16 %v2587, %v2579
    %v2780 = vpack.c.b16 %v2588, %v2580
    %v2781 = vpack.c.b16 %v2589, %v2581
    %v2782 = vpack.c.b16 %v2590, %v2582
    %v2783 = vpack.c.b16 %v2591, %v2583
    %v2784 = vpack.c.b16 %v2592, %v2584
    %v2785 = vpack.c.b16 %v2601, %v2593
    %v2786 = vpack.c.b16 %v2602, %v2594
    %v2787 = vpack.c.b16 %v2603, %v2595
    %v2788 = vpack.c.b16 %v2604, %v2596
    %v2789 = vpack.c.b16 %v2605, %v2597
    %v2790 = vpack.c.b16 %v2606, %v2598
    %v2791 = vpack.c.b16 %v2607, %v2599
    %v2792 = vpack.c.b16 %v2608, %v2600
    %v2793 = vpack.c.b16 %v2617, %v2609
    %v2794 = vpack.c.b16 %v2618, %v2610
    %v2795 = vpack.c.b16 %v2619, %v2611
    %v2796 = vpack.c.b16 %v2620, %v2612
    %v2797 = vpack.c.b16 %v2621, %v2613
    %v2798 = vpack.c.b16 %v2622, %v2614
    %v2799 = vpack.c.b16 %v2623, %v2615
    %v2800 = vpack.c.b16 %v2624, %v2616
    %v2801 = vpack.c.b16 %v2633, %v2625
    %v2802 = vpack.c.b16 %v2634, %v2626
    %v2803 = vpack.c.b16 %v2635, %v2627
    %v2804 = vpack.c.b16 %v2636, %v2628
    %v2805 = vpack.c.b16 %v2637, %v2629
    %v2806 = vpack.c.b16 %v2638, %v2630
    %v2807 = vpack.c.b16 %v2639, %v2631
    %v2808 = vpack.c.b16 %v2640, %v2632
    %v2809 = vpack.c.b16 %v2649, %v2641
    %v2810 = vpack.c.b16 %v2650, %v2642
    %v2811 = vpack.c.b16 %v2651, %v2643
    %v2812 = vpack.c.b16 %v2652, %v2644
    %v2813 = vpack.c.b16 %v2653, %v2645
    %v2814 = vpack.c.b16 %v2654, %v2646
    %v2815 = vpack.c.b16 %v2655, %v2647
    %v2816 = vpack.c.b16 %v2656, %v2648
    %v2817 = vpack.c.b16 %v2665, %v2657
    %v2818 = vpack.c.b16 %v2666, %v2658
    %v2819 = vpack.c.b16 %v2667, %v2659
    %v2820 = vpack.c.b16 %v2668, %v2660
    %v2821 = vpack.c.b16 %v2669, %v2661
    %v2822 = vpack.c.b16 %v2670, %v2662
    %v2823 = vpack.c.b16 %v2671, %v2663
    %v2824 = vpack.c.b16 %v2672, %v2664
    %v2825 = vpack.c.b16 %v2681, %v2673
    %v2826 = vpack.c.b16 %v2682, %v2674
    %v2827 = vpack.c.b16 %v2683, %v2675
    %v2828 = vpack.c.b16 %v2684, %v2676
    %v2829 = vpack.c.b16 %v2685, %v2677
    %v2830 = vpack.c.b16 %v2686, %v2678
    %v2831 = vpack.c.b16 %v2687, %v2679
    %v2832 = vpack.c.b16 %v2688, %v2680
    %v2833 = vpack.c.b16 %v2697, %v2689
    %v2834 = vpack.c.b16 %v2698, %v2690
    %v2835 = vpack.c.b16 %v2699, %v2691
    %v2836 = vpack.c.b16 %v2700, %v2692
    %v2837 = vpack.c.b16 %v2701, %v2693
    %v2838 = vpack.c.b16 %v2702, %v2694
    %v2839 = vpack.c.b16 %v2703, %v2695
    %v2840 = vpack.c.b16 %v2704, %v2696
    %v2841 = vpack.c.b16 %v2713, %v2705
    %v2842 = vpack.c.b16 %v2714, %v2706
    %v2843 = vpack.c.b16 %v2715, %v2707
    %v2844 = vpack.c.b16 %v2716, %v2708
    %v2845 = vpack.c.b16 %v2717, %v2709
    %v2846 = vpack.c.b16 %v2718, %v2710
    %v2847 = vpack.c.b16 %v2719, %v2711
    %v2848 = vpack.c.b16 %v2720, %v2712
    %2977 = vmatprep.subr.bf16.mxu0 %v2722
    %2978 = vmatpush1.bf16.msra.mxu0 %v2721
    %2979 = vmatprep.subr.bf16.mxu0 %v2730
    %2980 = vmatpush1.bf16.msra.mxu0 %v2729
    %2981 = vmatprep.subr.bf16.mxu0 %v2738
    %2982 = vmatpush1.bf16.msra.mxu0 %v2737
    %2983 = vmatprep.subr.bf16.mxu0 %v2746
    %2984 = vmatpush1.bf16.msra.mxu0 %v2745
    %2985 = vmatprep.subr.bf16.mxu0 %v2754
    %2986 = vmatpush1.bf16.msra.mxu0 %v2753
    %2987 = vmatprep.subr.bf16.mxu0 %v2762
    %2988 = vmatpush1.bf16.msra.mxu0 %v2761
    %2989 = vmatprep.subr.bf16.mxu0 %v2770
    %2990 = vmatpush1.bf16.msra.mxu0 %v2769
    %2991 = vmatprep.subr.bf16.mxu0 %v2778
    %2992 = vmatpush1.bf16.msra.mxu0 %v2777
    %2993 = vmatprep.subr.bf16.mxu0 %v2786
    %2994 = vmatpush1.bf16.msra.mxu0 %v2785
    %2995 = vmatprep.subr.bf16.mxu0 %v2794
    %2996 = vmatpush1.bf16.msra.mxu0 %v2793
    %2997 = vmatprep.subr.bf16.mxu0 %v2802
    %2998 = vmatpush1.bf16.msra.mxu0 %v2801
    %2999 = vmatprep.subr.bf16.mxu0 %v2810
    %3000 = vmatpush1.bf16.msra.mxu0 %v2809
    %3001 = vmatprep.subr.bf16.mxu0 %v2818
    %3002 = vmatpush1.bf16.msra.mxu0 %v2817
    %3003 = vmatprep.subr.bf16.mxu0 %v2826
    %3004 = vmatpush1.bf16.msra.mxu0 %v2825
    %3005 = vmatprep.subr.bf16.mxu0 %v2834
    %3006 = vmatpush1.bf16.msra.mxu0 %v2833
    %3007 = vmatprep.subr.bf16.mxu0 %v2842
    %3008 = vmatpush1.bf16.msra.mxu0 %v2841
    %3009 = vmatprep.mubr.bf16.mxu0 %v2166
    %3010 = vmatmul.mubr.bf16.gmra.mrb[0].mxu0 %v2165
    %v3011 = vpop.f32.mrb[0].mxu0
    %v3012 = vadd.f32 %v2300, %v3011
    %v3013 = vpop.f32.mrb[0].mxu0
    %v3014 = vadd.f32 %v2304, %v3013
    %v3015 = vpop.f32.mrb[0].mxu0
    %v3016 = vadd.f32 %v2300, %v3015
    %v3017 = vpop.f32.mrb[0].mxu0
    %v3018 = vadd.f32 %v2304, %v3017
    %3019 = vdwg.mxu0
    %3020 = vmatprep.subr.bf16.mxu0 %v2724
    %3021 = vmatpush1.bf16.msra.mxu0 %v2723
    %3022 = vmatprep.subr.bf16.mxu0 %v2732
    %3023 = vmatpush1.bf16.msra.mxu0 %v2731
    %3024 = vmatprep.subr.bf16.mxu0 %v2740
    %3025 = vmatpush1.bf16.msra.mxu0 %v2739
    %3026 = vmatprep.subr.bf16.mxu0 %v2748
    %3027 = vmatpush1.bf16.msra.mxu0 %v2747
    %3028 = vmatprep.subr.bf16.mxu0 %v2756
    %3029 = vmatpush1.bf16.msra.mxu0 %v2755
    %3030 = vmatprep.subr.bf16.mxu0 %v2764
    %3031 = vmatpush1.bf16.msra.mxu0 %v2763
    %3032 = vmatprep.subr.bf16.mxu0 %v2772
    %3033 = vmatpush1.bf16.msra.mxu0 %v2771
    %3034 = vmatprep.subr.bf16.mxu0 %v2780
    %3035 = vmatpush1.bf16.msra.mxu0 %v2779
    %3036 = vmatprep.subr.bf16.mxu0 %v2788
    %3037 = vmatpush1.bf16.msra.mxu0 %v2787
    %3038 = vmatprep.subr.bf16.mxu0 %v2796
    %3039 = vmatpush1.bf16.msra.mxu0 %v2795
    %3040 = vmatprep.subr.bf16.mxu0 %v2804
    %3041 = vmatpush1.bf16.msra.mxu0 %v2803
    %3042 = vmatprep.subr.bf16.mxu0 %v2812
    %3043 = vmatpush1.bf16.msra.mxu0 %v2811
    %3044 = vmatprep.subr.bf16.mxu0 %v2820
    %3045 = vmatpush1.bf16.msra.mxu0 %v2819
    %3046 = vmatprep.subr.bf16.mxu0 %v2828
    %3047 = vmatpush1.bf16.msra.mxu0 %v2827
    %3048 = vmatprep.subr.bf16.mxu0 %v2836
    %3049 = vmatpush1.bf16.msra.mxu0 %v2835
    %3050 = vmatprep.subr.bf16.mxu0 %v2844
    %3051 = vmatpush1.bf16.msra.mxu0 %v2843
    %3052 = vmatprep.mubr.bf16.mxu0 %v2166
    %3053 = vmatmul.mubr.bf16.gmra.mrb[0].mxu0 %v2165
    %v3054 = vpop.f32.mrb[0].mxu0
    %v3055 = vadd.f32 %v2308, %v3054
    %v3056 = vpop.f32.mrb[0].mxu0
    %v3057 = vadd.f32 %v2312, %v3056
    %v3058 = vpop.f32.mrb[0].mxu0
    %v3059 = vadd.f32 %v2308, %v3058
    %v3060 = vpop.f32.mrb[0].mxu0
    %v3061 = vadd.f32 %v2312, %v3060
    %3062 = vdwg.mxu0
    %3063 = vmatprep.subr.bf16.mxu0 %v2726
    %3064 = vmatpush1.bf16.msra.mxu0 %v2725
    %3065 = vmatprep.subr.bf16.mxu0 %v2734
    %3066 = vmatpush1.bf16.msra.mxu0 %v2733
    %3067 = vmatprep.subr.bf16.mxu0 %v2742
    %3068 = vmatpush1.bf16.msra.mxu0 %v2741
    %3069 = vmatprep.subr.bf16.mxu0 %v2750
    %3070 = vmatpush1.bf16.msra.mxu0 %v2749
    %3071 = vmatprep.subr.bf16.mxu0 %v2758
    %3072 = vmatpush1.bf16.msra.mxu0 %v2757
    %3073 = vmatprep.subr.bf16.mxu0 %v2766
    %3074 = vmatpush1.bf16.msra.mxu0 %v2765
    %3075 = vmatprep.subr.bf16.mxu0 %v2774
    %3076 = vmatpush1.bf16.msra.mxu0 %v2773
    %3077 = vmatprep.subr.bf16.mxu0 %v2782
    %3078 = vmatpush1.bf16.msra.mxu0 %v2781
    %3079 = vmatprep.subr.bf16.mxu0 %v2790
    %3080 = vmatpush1.bf16.msra.mxu0 %v2789
    %3081 = vmatprep.subr.bf16.mxu0 %v2798
    %3082 = vmatpush1.bf16.msra.mxu0 %v2797
    %3083 = vmatprep.subr.bf16.mxu0 %v2806
    %3084 = vmatpush1.bf16.msra.mxu0 %v2805
    %3085 = vmatprep.subr.bf16.mxu0 %v2814
    %3086 = vmatpush1.bf16.msra.mxu0 %v2813
    %3087 = vmatprep.subr.bf16.mxu0 %v2822
    %3088 = vmatpush1.bf16.msra.mxu0 %v2821
    %3089 = vmatprep.subr.bf16.mxu0 %v2830
    %3090 = vmatpush1.bf16.msra.mxu0 %v2829
    %3091 = vmatprep.subr.bf16.mxu0 %v2838
    %3092 = vmatpush1.bf16.msra.mxu0 %v2837
    %3093 = vmatprep.subr.bf16.mxu0 %v2846
    %3094 = vmatpush1.bf16.msra.mxu0 %v2845
    %3095 = vmatprep.mubr.bf16.mxu0 %v2166
    %3096 = vmatmul.mubr.bf16.gmra.mrb[0].mxu0 %v2165
    %v3097 = vpop.f32.mrb[0].mxu0
    %v3098 = vadd.f32 %v2316, %v3097
    %v3099 = vpop.f32.mrb[0].mxu0
    %v3100 = vadd.f32 %v2320, %v3099
    %v3101 = vpop.f32.mrb[0].mxu0
    %v3102 = vadd.f32 %v2316, %v3101
    %v3103 = vpop.f32.mrb[0].mxu0
    %v3104 = vadd.f32 %v2320, %v3103
    %3105 = vdwg.mxu0
    %3106 = vmatprep.subr.bf16.mxu0 %v2728
    %3107 = vmatpush1.bf16.msra.mxu0 %v2727
    %3108 = vmatprep.subr.bf16.mxu0 %v2736
    %3109 = vmatpush1.bf16.msra.mxu0 %v2735
    %3110 = vmatprep.subr.bf16.mxu0 %v2744
    %3111 = vmatpush1.bf16.msra.mxu0 %v2743
    %3112 = vmatprep.subr.bf16.mxu0 %v2752
    %3113 = vmatpush1.bf16.msra.mxu0 %v2751
    %3114 = vmatprep.subr.bf16.mxu0 %v2760
    %3115 = vmatpush1.bf16.msra.mxu0 %v2759
    %3116 = vmatprep.subr.bf16.mxu0 %v2768
    %3117 = vmatpush1.bf16.msra.mxu0 %v2767
    %3118 = vmatprep.subr.bf16.mxu0 %v2776
    %3119 = vmatpush1.bf16.msra.mxu0 %v2775
    %3120 = vmatprep.subr.bf16.mxu0 %v2784
    %3121 = vmatpush1.bf16.msra.mxu0 %v2783
    %3122 = vmatprep.subr.bf16.mxu0 %v2792
    %3123 = vmatpush1.bf16.msra.mxu0 %v2791
    %3124 = vmatprep.subr.bf16.mxu0 %v2800
    %3125 = vmatpush1.bf16.msra.mxu0 %v2799
    %3126 = vmatprep.subr.bf16.mxu0 %v2808
    %3127 = vmatpush1.bf16.msra.mxu0 %v2807
    %3128 = vmatprep.subr.bf16.mxu0 %v2816
    %3129 = vmatpush1.bf16.msra.mxu0 %v2815
    %3130 = vmatprep.subr.bf16.mxu0 %v2824
    %3131 = vmatpush1.bf16.msra.mxu0 %v2823
    %3132 = vmatprep.subr.bf16.mxu0 %v2832
    %3133 = vmatpush1.bf16.msra.mxu0 %v2831
    %3134 = vmatprep.subr.bf16.mxu0 %v2840
    %3135 = vmatpush1.bf16.msra.mxu0 %v2839
    %3136 = vmatprep.subr.bf16.mxu0 %v2848
    %3137 = vmatpush1.bf16.msra.mxu0 %v2847
    %3138 = vmatprep.mubr.bf16.mxu0 %v2166
    %3139 = vmatmul.mubr.bf16.gmra.mrb[0].mxu0 %v2165
    %v3140 = vpop.f32.mrb[0].mxu0
    %v3141 = vadd.f32 %v2324, %v3140
    %v3142 = vpop.f32.mrb[0].mxu0
    %v3143 = vadd.f32 %v2328, %v3142
    %v3144 = vpop.f32.mrb[0].mxu0
    %v3145 = vadd.f32 %v2324, %v3144
    %v3146 = vpop.f32.mrb[0].mxu0
    %v3147 = vadd.f32 %v2328, %v3146
    %3148 = vdwg.mxu0
    %v3149 = vmax.f32 %v3012, 0.0
    %v3150 = vmax.f32 %v3014, 0.0
    %v3151 = vmax.f32 %v3055, 0.0
    %v3152 = vmax.f32 %v3057, 0.0
    %v3153 = vmax.f32 %v3098, 0.0
    %v3154 = vmax.f32 %v3100, 0.0
    %v3155 = vmax.f32 %v3141, 0.0
    %v3156 = vmax.f32 %v3143, 0.0
    %v3157 = vmax.f32 %v3016, 0.0
    %v3158 = vmax.f32 %v3018, 0.0
    %v3159 = vmax.f32 %v3059, 0.0
    %v3160 = vmax.f32 %v3061, 0.0
    %v3161 = vmax.f32 %v3102, 0.0
    %v3162 = vmax.f32 %v3104, 0.0
    %v3163 = vmax.f32 %v3145, 0.0
    %v3164 = vmax.f32 %v3147, 0.0
    %v3165 = vpack.c.bf16 %v3157, %v3149
    %v3166 = vpack.c.bf16 %v3158, %v3150
    %v3167 = vpack.c.bf16 %v3159, %v3151
    %v3168 = vpack.c.bf16 %v3160, %v3152
    %v3169 = vpack.c.bf16 %v3161, %v3153
    %v3170 = vpack.c.bf16 %v3162, %v3154
    %v3171 = vpack.c.bf16 %v3163, %v3155
    %v3172 = vpack.c.bf16 %v3164, %v3156
    %v3173 = vld [vmem:[#allocation13] sm:$0xff]
    %v3174 = vld [vmem:[#allocation13 + $0x8] sm:$0xff]
    %v3175 = vld [vmem:[#allocation13 + $0x10] sm:$0xff]
    %v3176 = vld [vmem:[#allocation13 + $0x18] sm:$0xff]
    %v3177 = vld [vmem:[#allocation13 + $0x20] sm:$0xff]
    %v3178 = vld [vmem:[#allocation13 + $0x28] sm:$0xff]
    %v3179 = vld [vmem:[#allocation13 + $0x30] sm:$0xff]
    %v3180 = vld [vmem:[#allocation13 + $0x38] sm:$0xff]
    %v3181 = vld [vmem:[#allocation13 + $0x40] sm:$0xff]
    %v3182 = vld [vmem:[#allocation13 + $0x48] sm:$0xff]
    %v3183 = vld [vmem:[#allocation13 + $0x50] sm:$0xff]
    %v3184 = vld [vmem:[#allocation13 + $0x58] sm:$0xff]
    %v3185 = vld [vmem:[#allocation13 + $0x60] sm:$0xff]
    %v3186 = vld [vmem:[#allocation13 + $0x68] sm:$0xff]
    %v3187 = vld [vmem:[#allocation13 + $0x70] sm:$0xff]
    %v3188 = vld [vmem:[#allocation13 + $0x78] sm:$0xff]
    %v3189 = vld [vmem:[#allocation13 + $0x80] sm:$0xff]
    %v3190 = vld [vmem:[#allocation13 + $0x88] sm:$0xff]
    %v3191 = vld [vmem:[#allocation13 + $0x90] sm:$0xff]
    %v3192 = vld [vmem:[#allocation13 + $0x98] sm:$0xff]
    %v3193 = vld [vmem:[#allocation13 + $0xa0] sm:$0xff]
    %v3194 = vld [vmem:[#allocation13 + $0xa8] sm:$0xff]
    %v3195 = vld [vmem:[#allocation13 + $0xb0] sm:$0xff]
    %v3196 = vld [vmem:[#allocation13 + $0xb8] sm:$0xff]
    %v3197 = vld [vmem:[#allocation13 + $0xc0] sm:$0xff]
    %v3198 = vld [vmem:[#allocation13 + $0xc8] sm:$0xff]
    %v3199 = vld [vmem:[#allocation13 + $0xd0] sm:$0xff]
    %v3200 = vld [vmem:[#allocation13 + $0xd8] sm:$0xff]
    %v3201 = vld [vmem:[#allocation13 + $0xe0] sm:$0xff]
    %v3202 = vld [vmem:[#allocation13 + $0xe8] sm:$0xff]
    %v3203 = vld [vmem:[#allocation13 + $0xf0] sm:$0xff]
    %v3204 = vld [vmem:[#allocation13 + $0xf8] sm:$0xff]
    %v3205 = vld [vmem:[#allocation13 + $0x100] sm:$0xff]
    %v3206 = vld [vmem:[#allocation13 + $0x108] sm:$0xff]
    %v3207 = vld [vmem:[#allocation13 + $0x110] sm:$0xff]
    %v3208 = vld [vmem:[#allocation13 + $0x118] sm:$0xff]
    %v3209 = vld [vmem:[#allocation13 + $0x120] sm:$0xff]
    %v3210 = vld [vmem:[#allocation13 + $0x128] sm:$0xff]
    %v3211 = vld [vmem:[#allocation13 + $0x130] sm:$0xff]
    %v3212 = vld [vmem:[#allocation13 + $0x138] sm:$0xff]
    %v3213 = vld [vmem:[#allocation13 + $0x140] sm:$0xff]
    %v3214 = vld [vmem:[#allocation13 + $0x148] sm:$0xff]
    %v3215 = vld [vmem:[#allocation13 + $0x150] sm:$0xff]
    %v3216 = vld [vmem:[#allocation13 + $0x158] sm:$0xff]
    %v3217 = vld [vmem:[#allocation13 + $0x160] sm:$0xff]
    %v3218 = vld [vmem:[#allocation13 + $0x168] sm:$0xff]
    %v3219 = vld [vmem:[#allocation13 + $0x170] sm:$0xff]
    %v3220 = vld [vmem:[#allocation13 + $0x178] sm:$0xff]
    %v3221 = vld [vmem:[#allocation13 + $0x180] sm:$0xff]
    %v3222 = vld [vmem:[#allocation13 + $0x188] sm:$0xff]
    %v3223 = vld [vmem:[#allocation13 + $0x190] sm:$0xff]
    %v3224 = vld [vmem:[#allocation13 + $0x198] sm:$0xff]
    %v3225 = vld [vmem:[#allocation13 + $0x1a0] sm:$0xff]
    %v3226 = vld [vmem:[#allocation13 + $0x1a8] sm:$0xff]
    %v3227 = vld [vmem:[#allocation13 + $0x1b0] sm:$0xff]
    %v3228 = vld [vmem:[#allocation13 + $0x1b8] sm:$0xff]
    %v3229 = vld [vmem:[#allocation13 + $0x1c0] sm:$0xff]
    %v3230 = vld [vmem:[#allocation13 + $0x1c8] sm:$0xff]
    %v3231 = vld [vmem:[#allocation13 + $0x1d0] sm:$0xff]
    %v3232 = vld [vmem:[#allocation13 + $0x1d8] sm:$0xff]
    %v3233 = vld [vmem:[#allocation13 + $0x1e0] sm:$0xff]
    %v3234 = vld [vmem:[#allocation13 + $0x1e8] sm:$0xff]
    %v3235 = vld [vmem:[#allocation13 + $0x1f0] sm:$0xff]
    %v3236 = vld [vmem:[#allocation13 + $0x1f8] sm:$0xff]
    %v3237 = vld [vmem:[#allocation13 + $0x200] sm:$0xff]
    %v3238 = vld [vmem:[#allocation13 + $0x208] sm:$0xff]
    %v3239 = vld [vmem:[#allocation13 + $0x210] sm:$0xff]
    %v3240 = vld [vmem:[#allocation13 + $0x218] sm:$0xff]
    %v3241 = vld [vmem:[#allocation13 + $0x220] sm:$0xff]
    %v3242 = vld [vmem:[#allocation13 + $0x228] sm:$0xff]
    %v3243 = vld [vmem:[#allocation13 + $0x230] sm:$0xff]
    %v3244 = vld [vmem:[#allocation13 + $0x238] sm:$0xff]
    %v3245 = vld [vmem:[#allocation13 + $0x240] sm:$0xff]
    %v3246 = vld [vmem:[#allocation13 + $0x248] sm:$0xff]
    %v3247 = vld [vmem:[#allocation13 + $0x250] sm:$0xff]
    %v3248 = vld [vmem:[#allocation13 + $0x258] sm:$0xff]
    %v3249 = vld [vmem:[#allocation13 + $0x260] sm:$0xff]
    %v3250 = vld [vmem:[#allocation13 + $0x268] sm:$0xff]
    %v3251 = vld [vmem:[#allocation13 + $0x270] sm:$0xff]
    %v3252 = vld [vmem:[#allocation13 + $0x278] sm:$0xff]
    %v3253 = vld [vmem:[#allocation13 + $0x280] sm:$0xff]
    %v3254 = vld [vmem:[#allocation13 + $0x288] sm:$0xff]
    %v3255 = vld [vmem:[#allocation13 + $0x290] sm:$0xff]
    %v3256 = vld [vmem:[#allocation13 + $0x298] sm:$0xff]
    %v3257 = vld [vmem:[#allocation13 + $0x2a0] sm:$0xff]
    %v3258 = vld [vmem:[#allocation13 + $0x2a8] sm:$0xff]
    %v3259 = vld [vmem:[#allocation13 + $0x2b0] sm:$0xff]
    %v3260 = vld [vmem:[#allocation13 + $0x2b8] sm:$0xff]
    %v3261 = vld [vmem:[#allocation13 + $0x2c0] sm:$0xff]
    %v3262 = vld [vmem:[#allocation13 + $0x2c8] sm:$0xff]
    %v3263 = vld [vmem:[#allocation13 + $0x2d0] sm:$0xff]
    %v3264 = vld [vmem:[#allocation13 + $0x2d8] sm:$0xff]
    %v3265 = vld [vmem:[#allocation13 + $0x2e0] sm:$0xff]
    %v3266 = vld [vmem:[#allocation13 + $0x2e8] sm:$0xff]
    %v3267 = vld [vmem:[#allocation13 + $0x2f0] sm:$0xff]
    %v3268 = vld [vmem:[#allocation13 + $0x2f8] sm:$0xff]
    %v3269 = vld [vmem:[#allocation13 + $0x300] sm:$0xff]
    %v3270 = vld [vmem:[#allocation13 + $0x308] sm:$0xff]
    %v3271 = vld [vmem:[#allocation13 + $0x310] sm:$0xff]
    %v3272 = vld [vmem:[#allocation13 + $0x318] sm:$0xff]
    %v3273 = vld [vmem:[#allocation13 + $0x320] sm:$0xff]
    %v3274 = vld [vmem:[#allocation13 + $0x328] sm:$0xff]
    %v3275 = vld [vmem:[#allocation13 + $0x330] sm:$0xff]
    %v3276 = vld [vmem:[#allocation13 + $0x338] sm:$0xff]
    %v3277 = vld [vmem:[#allocation13 + $0x340] sm:$0xff]
    %v3278 = vld [vmem:[#allocation13 + $0x348] sm:$0xff]
    %v3279 = vld [vmem:[#allocation13 + $0x350] sm:$0xff]
    %v3280 = vld [vmem:[#allocation13 + $0x358] sm:$0xff]
    %v3281 = vld [vmem:[#allocation13 + $0x360] sm:$0xff]
    %v3282 = vld [vmem:[#allocation13 + $0x368] sm:$0xff]
    %v3283 = vld [vmem:[#allocation13 + $0x370] sm:$0xff]
    %v3284 = vld [vmem:[#allocation13 + $0x378] sm:$0xff]
    %v3285 = vld [vmem:[#allocation13 + $0x380] sm:$0xff]
    %v3286 = vld [vmem:[#allocation13 + $0x388] sm:$0xff]
    %v3287 = vld [vmem:[#allocation13 + $0x390] sm:$0xff]
    %v3288 = vld [vmem:[#allocation13 + $0x398] sm:$0xff]
    %v3289 = vld [vmem:[#allocation13 + $0x3a0] sm:$0xff]
    %v3290 = vld [vmem:[#allocation13 + $0x3a8] sm:$0xff]
    %v3291 = vld [vmem:[#allocation13 + $0x3b0] sm:$0xff]
    %v3292 = vld [vmem:[#allocation13 + $0x3b8] sm:$0xff]
    %v3293 = vld [vmem:[#allocation13 + $0x3c0] sm:$0xff]
    %v3294 = vld [vmem:[#allocation13 + $0x3c8] sm:$0xff]
    %v3295 = vld [vmem:[#allocation13 + $0x3d0] sm:$0xff]
    %v3296 = vld [vmem:[#allocation13 + $0x3d8] sm:$0xff]
    %v3297 = vld [vmem:[#allocation13 + $0x3e0] sm:$0xff]
    %v3298 = vld [vmem:[#allocation13 + $0x3e8] sm:$0xff]
    %v3299 = vld [vmem:[#allocation13 + $0x3f0] sm:$0xff]
    %v3300 = vld [vmem:[#allocation13 + $0x3f8] sm:$0xff]
    %v3301 = vld [vmem:[%s12] sm:$0x3]
    %v3303 = vlaneseq
    %v3304 = vshrl.u32 %v3303, 7
    %v3305 = vsub.s32 0, %v3304
    %v3306 = vrot.slane %v3301, %v3305
    %v3307 = vlaneseq
    %v3308 = vshrl.u32 %v3307, 7
    %v3309 = vsub.s32 1, %v3308
    %v3310 = vrot.slane %v3301, %v3309
    %v3441 = vunpack.c.l.b16 %v3173
    %v3442 = vunpack.c.h.b16 %v3173
    %v3443 = vunpack.c.l.b16 %v3174
    %v3444 = vunpack.c.h.b16 %v3174
    %v3445 = vunpack.c.l.b16 %v3175
    %v3446 = vunpack.c.h.b16 %v3175
    %v3447 = vunpack.c.l.b16 %v3176
    %v3448 = vunpack.c.h.b16 %v3176
    %v3449 = vunpack.c.l.b16 %v3177
    %v3450 = vunpack.c.h.b16 %v3177
    %v3451 = vunpack.c.l.b16 %v3178
    %v3452 = vunpack.c.h.b16 %v3178
    %v3453 = vunpack.c.l.b16 %v3179
    %v3454 = vunpack.c.h.b16 %v3179
    %v3455 = vunpack.c.l.b16 %v3180
    %v3456 = vunpack.c.h.b16 %v3180
    %v3457 = vunpack.c.l.b16 %v3181
    %v3458 = vunpack.c.h.b16 %v3181
    %v3459 = vunpack.c.l.b16 %v3182
    %v3460 = vunpack.c.h.b16 %v3182
    %v3461 = vunpack.c.l.b16 %v3183
    %v3462 = vunpack.c.h.b16 %v3183
    %v3463 = vunpack.c.l.b16 %v3184
    %v3464 = vunpack.c.h.b16 %v3184
    %v3465 = vunpack.c.l.b16 %v3185
    %v3466 = vunpack.c.h.b16 %v3185
    %v3467 = vunpack.c.l.b16 %v3186
    %v3468 = vunpack.c.h.b16 %v3186
    %v3469 = vunpack.c.l.b16 %v3187
    %v3470 = vunpack.c.h.b16 %v3187
    %v3471 = vunpack.c.l.b16 %v3188
    %v3472 = vunpack.c.h.b16 %v3188
    %v3473 = vunpack.c.l.b16 %v3189
    %v3474 = vunpack.c.h.b16 %v3189
    %v3475 = vunpack.c.l.b16 %v3190
    %v3476 = vunpack.c.h.b16 %v3190
    %v3477 = vunpack.c.l.b16 %v3191
    %v3478 = vunpack.c.h.b16 %v3191
    %v3479 = vunpack.c.l.b16 %v3192
    %v3480 = vunpack.c.h.b16 %v3192
    %v3481 = vunpack.c.l.b16 %v3193
    %v3482 = vunpack.c.h.b16 %v3193
    %v3483 = vunpack.c.l.b16 %v3194
    %v3484 = vunpack.c.h.b16 %v3194
    %v3485 = vunpack.c.l.b16 %v3195
    %v3486 = vunpack.c.h.b16 %v3195
    %v3487 = vunpack.c.l.b16 %v3196
    %v3488 = vunpack.c.h.b16 %v3196
    %v3489 = vunpack.c.l.b16 %v3197
    %v3490 = vunpack.c.h.b16 %v3197
    %v3491 = vunpack.c.l.b16 %v3198
    %v3492 = vunpack.c.h.b16 %v3198
    %v3493 = vunpack.c.l.b16 %v3199
    %v3494 = vunpack.c.h.b16 %v3199
    %v3495 = vunpack.c.l.b16 %v3200
    %v3496 = vunpack.c.h.b16 %v3200
    %v3497 = vunpack.c.l.b16 %v3201
    %v3498 = vunpack.c.h.b16 %v3201
    %v3499 = vunpack.c.l.b16 %v3202
    %v3500 = vunpack.c.h.b16 %v3202
    %v3501 = vunpack.c.l.b16 %v3203
    %v3502 = vunpack.c.h.b16 %v3203
    %v3503 = vunpack.c.l.b16 %v3204
    %v3504 = vunpack.c.h.b16 %v3204
    %v3505 = vunpack.c.l.b16 %v3205
    %v3506 = vunpack.c.h.b16 %v3205
    %v3507 = vunpack.c.l.b16 %v3206
    %v3508 = vunpack.c.h.b16 %v3206
    %v3509 = vunpack.c.l.b16 %v3207
    %v3510 = vunpack.c.h.b16 %v3207
    %v3511 = vunpack.c.l.b16 %v3208
    %v3512 = vunpack.c.h.b16 %v3208
    %v3513 = vunpack.c.l.b16 %v3209
    %v3514 = vunpack.c.h.b16 %v3209
    %v3515 = vunpack.c.l.b16 %v3210
    %v3516 = vunpack.c.h.b16 %v3210
    %v3517 = vunpack.c.l.b16 %v3211
    %v3518 = vunpack.c.h.b16 %v3211
    %v3519 = vunpack.c.l.b16 %v3212
    %v3520 = vunpack.c.h.b16 %v3212
    %v3521 = vunpack.c.l.b16 %v3213
    %v3522 = vunpack.c.h.b16 %v3213
    %v3523 = vunpack.c.l.b16 %v3214
    %v3524 = vunpack.c.h.b16 %v3214
    %v3525 = vunpack.c.l.b16 %v3215
    %v3526 = vunpack.c.h.b16 %v3215
    %v3527 = vunpack.c.l.b16 %v3216
    %v3528 = vunpack.c.h.b16 %v3216
    %v3529 = vunpack.c.l.b16 %v3217
    %v3530 = vunpack.c.h.b16 %v3217
    %v3531 = vunpack.c.l.b16 %v3218
    %v3532 = vunpack.c.h.b16 %v3218
    %v3533 = vunpack.c.l.b16 %v3219
    %v3534 = vunpack.c.h.b16 %v3219
    %v3535 = vunpack.c.l.b16 %v3220
    %v3536 = vunpack.c.h.b16 %v3220
    %v3537 = vunpack.c.l.b16 %v3221
    %v3538 = vunpack.c.h.b16 %v3221
    %v3539 = vunpack.c.l.b16 %v3222
    %v3540 = vunpack.c.h.b16 %v3222
    %v3541 = vunpack.c.l.b16 %v3223
    %v3542 = vunpack.c.h.b16 %v3223
    %v3543 = vunpack.c.l.b16 %v3224
    %v3544 = vunpack.c.h.b16 %v3224
    %v3545 = vunpack.c.l.b16 %v3225
    %v3546 = vunpack.c.h.b16 %v3225
    %v3547 = vunpack.c.l.b16 %v3226
    %v3548 = vunpack.c.h.b16 %v3226
    %v3549 = vunpack.c.l.b16 %v3227
    %v3550 = vunpack.c.h.b16 %v3227
    %v3551 = vunpack.c.l.b16 %v3228
    %v3552 = vunpack.c.h.b16 %v3228
    %v3553 = vunpack.c.l.b16 %v3229
    %v3554 = vunpack.c.h.b16 %v3229
    %v3555 = vunpack.c.l.b16 %v3230
    %v3556 = vunpack.c.h.b16 %v3230
    %v3557 = vunpack.c.l.b16 %v3231
    %v3558 = vunpack.c.h.b16 %v3231
    %v3559 = vunpack.c.l.b16 %v3232
    %v3560 = vunpack.c.h.b16 %v3232
    %v3561 = vunpack.c.l.b16 %v3233
    %v3562 = vunpack.c.h.b16 %v3233
    %v3563 = vunpack.c.l.b16 %v3234
    %v3564 = vunpack.c.h.b16 %v3234
    %v3565 = vunpack.c.l.b16 %v3235
    %v3566 = vunpack.c.h.b16 %v3235
    %v3567 = vunpack.c.l.b16 %v3236
    %v3568 = vunpack.c.h.b16 %v3236
    %v3569 = vunpack.c.l.b16 %v3237
    %v3570 = vunpack.c.h.b16 %v3237
    %v3571 = vunpack.c.l.b16 %v3238
    %v3572 = vunpack.c.h.b16 %v3238
    %v3573 = vunpack.c.l.b16 %v3239
    %v3574 = vunpack.c.h.b16 %v3239
    %v3575 = vunpack.c.l.b16 %v3240
    %v3576 = vunpack.c.h.b16 %v3240
    %v3577 = vunpack.c.l.b16 %v3241
    %v3578 = vunpack.c.h.b16 %v3241
    %v3579 = vunpack.c.l.b16 %v3242
    %v3580 = vunpack.c.h.b16 %v3242
    %v3581 = vunpack.c.l.b16 %v3243
    %v3582 = vunpack.c.h.b16 %v3243
    %v3583 = vunpack.c.l.b16 %v3244
    %v3584 = vunpack.c.h.b16 %v3244
    %v3585 = vunpack.c.l.b16 %v3245
    %v3586 = vunpack.c.h.b16 %v3245
    %v3587 = vunpack.c.l.b16 %v3246
    %v3588 = vunpack.c.h.b16 %v3246
    %v3589 = vunpack.c.l.b16 %v3247
    %v3590 = vunpack.c.h.b16 %v3247
    %v3591 = vunpack.c.l.b16 %v3248
    %v3592 = vunpack.c.h.b16 %v3248
    %v3593 = vunpack.c.l.b16 %v3249
    %v3594 = vunpack.c.h.b16 %v3249
    %v3595 = vunpack.c.l.b16 %v3250
    %v3596 = vunpack.c.h.b16 %v3250
    %v3597 = vunpack.c.l.b16 %v3251
    %v3598 = vunpack.c.h.b16 %v3251
    %v3599 = vunpack.c.l.b16 %v3252
    %v3600 = vunpack.c.h.b16 %v3252
    %v3601 = vunpack.c.l.b16 %v3253
    %v3602 = vunpack.c.h.b16 %v3253
    %v3603 = vunpack.c.l.b16 %v3254
    %v3604 = vunpack.c.h.b16 %v3254
    %v3605 = vunpack.c.l.b16 %v3255
    %v3606 = vunpack.c.h.b16 %v3255
    %v3607 = vunpack.c.l.b16 %v3256
    %v3608 = vunpack.c.h.b16 %v3256
    %v3609 = vunpack.c.l.b16 %v3257
    %v3610 = vunpack.c.h.b16 %v3257
    %v3611 = vunpack.c.l.b16 %v3258
    %v3612 = vunpack.c.h.b16 %v3258
    %v3613 = vunpack.c.l.b16 %v3259
    %v3614 = vunpack.c.h.b16 %v3259
    %v3615 = vunpack.c.l.b16 %v3260
    %v3616 = vunpack.c.h.b16 %v3260
    %v3617 = vunpack.c.l.b16 %v3261
    %v3618 = vunpack.c.h.b16 %v3261
    %v3619 = vunpack.c.l.b16 %v3262
    %v3620 = vunpack.c.h.b16 %v3262
    %v3621 = vunpack.c.l.b16 %v3263
    %v3622 = vunpack.c.h.b16 %v3263
    %v3623 = vunpack.c.l.b16 %v3264
    %v3624 = vunpack.c.h.b16 %v3264
    %v3625 = vunpack.c.l.b16 %v3265
    %v3626 = vunpack.c.h.b16 %v3265
    %v3627 = vunpack.c.l.b16 %v3266
    %v3628 = vunpack.c.h.b16 %v3266
    %v3629 = vunpack.c.l.b16 %v3267
    %v3630 = vunpack.c.h.b16 %v3267
    %v3631 = vunpack.c.l.b16 %v3268
    %v3632 = vunpack.c.h.b16 %v3268
    %v3633 = vunpack.c.l.b16 %v3269
    %v3634 = vunpack.c.h.b16 %v3269
    %v3635 = vunpack.c.l.b16 %v3270
    %v3636 = vunpack.c.h.b16 %v3270
    %v3637 = vunpack.c.l.b16 %v3271
    %v3638 = vunpack.c.h.b16 %v3271
    %v3639 = vunpack.c.l.b16 %v3272
    %v3640 = vunpack.c.h.b16 %v3272
    %v3641 = vunpack.c.l.b16 %v3273
    %v3642 = vunpack.c.h.b16 %v3273
    %v3643 = vunpack.c.l.b16 %v3274
    %v3644 = vunpack.c.h.b16 %v3274
    %v3645 = vunpack.c.l.b16 %v3275
    %v3646 = vunpack.c.h.b16 %v3275
    %v3647 = vunpack.c.l.b16 %v3276
    %v3648 = vunpack.c.h.b16 %v3276
    %v3649 = vunpack.c.l.b16 %v3277
    %v3650 = vunpack.c.h.b16 %v3277
    %v3651 = vunpack.c.l.b16 %v3278
    %v3652 = vunpack.c.h.b16 %v3278
    %v3653 = vunpack.c.l.b16 %v3279
    %v3654 = vunpack.c.h.b16 %v3279
    %v3655 = vunpack.c.l.b16 %v3280
    %v3656 = vunpack.c.h.b16 %v3280
    %v3657 = vunpack.c.l.b16 %v3281
    %v3658 = vunpack.c.h.b16 %v3281
    %v3659 = vunpack.c.l.b16 %v3282
    %v3660 = vunpack.c.h.b16 %v3282
    %v3661 = vunpack.c.l.b16 %v3283
    %v3662 = vunpack.c.h.b16 %v3283
    %v3663 = vunpack.c.l.b16 %v3284
    %v3664 = vunpack.c.h.b16 %v3284
    %v3665 = vunpack.c.l.b16 %v3285
    %v3666 = vunpack.c.h.b16 %v3285
    %v3667 = vunpack.c.l.b16 %v3286
    %v3668 = vunpack.c.h.b16 %v3286
    %v3669 = vunpack.c.l.b16 %v3287
    %v3670 = vunpack.c.h.b16 %v3287
    %v3671 = vunpack.c.l.b16 %v3288
    %v3672 = vunpack.c.h.b16 %v3288
    %v3673 = vunpack.c.l.b16 %v3289
    %v3674 = vunpack.c.h.b16 %v3289
    %v3675 = vunpack.c.l.b16 %v3290
    %v3676 = vunpack.c.h.b16 %v3290
    %v3677 = vunpack.c.l.b16 %v3291
    %v3678 = vunpack.c.h.b16 %v3291
    %v3679 = vunpack.c.l.b16 %v3292
    %v3680 = vunpack.c.h.b16 %v3292
    %v3681 = vunpack.c.l.b16 %v3293
    %v3682 = vunpack.c.h.b16 %v3293
    %v3683 = vunpack.c.l.b16 %v3294
    %v3684 = vunpack.c.h.b16 %v3294
    %v3685 = vunpack.c.l.b16 %v3295
    %v3686 = vunpack.c.h.b16 %v3295
    %v3687 = vunpack.c.l.b16 %v3296
    %v3688 = vunpack.c.h.b16 %v3296
    %v3689 = vunpack.c.l.b16 %v3297
    %v3690 = vunpack.c.h.b16 %v3297
    %v3691 = vunpack.c.l.b16 %v3298
    %v3692 = vunpack.c.h.b16 %v3298
    %v3693 = vunpack.c.l.b16 %v3299
    %v3694 = vunpack.c.h.b16 %v3299
    %v3695 = vunpack.c.l.b16 %v3300
    %v3696 = vunpack.c.h.b16 %v3300
    %v3697 = vpack.c.b16 %v3443, %v3441
    %v3698 = vpack.c.b16 %v3444, %v3442
    %v3699 = vpack.c.b16 %v3447, %v3445
    %v3700 = vpack.c.b16 %v3448, %v3446
    %v3701 = vpack.c.b16 %v3451, %v3449
    %v3702 = vpack.c.b16 %v3452, %v3450
    %v3703 = vpack.c.b16 %v3455, %v3453
    %v3704 = vpack.c.b16 %v3456, %v3454
    %v3705 = vpack.c.b16 %v3459, %v3457
    %v3706 = vpack.c.b16 %v3460, %v3458
    %v3707 = vpack.c.b16 %v3463, %v3461
    %v3708 = vpack.c.b16 %v3464, %v3462
    %v3709 = vpack.c.b16 %v3467, %v3465
    %v3710 = vpack.c.b16 %v3468, %v3466
    %v3711 = vpack.c.b16 %v3471, %v3469
    %v3712 = vpack.c.b16 %v3472, %v3470
    %v3713 = vpack.c.b16 %v3475, %v3473
    %v3714 = vpack.c.b16 %v3476, %v3474
    %v3715 = vpack.c.b16 %v3479, %v3477
    %v3716 = vpack.c.b16 %v3480, %v3478
    %v3717 = vpack.c.b16 %v3483, %v3481
    %v3718 = vpack.c.b16 %v3484, %v3482
    %v3719 = vpack.c.b16 %v3487, %v3485
    %v3720 = vpack.c.b16 %v3488, %v3486
    %v3721 = vpack.c.b16 %v3491, %v3489
    %v3722 = vpack.c.b16 %v3492, %v3490
    %v3723 = vpack.c.b16 %v3495, %v3493
    %v3724 = vpack.c.b16 %v3496, %v3494
    %v3725 = vpack.c.b16 %v3499, %v3497
    %v3726 = vpack.c.b16 %v3500, %v3498
    %v3727 = vpack.c.b16 %v3503, %v3501
    %v3728 = vpack.c.b16 %v3504, %v3502
    %v3729 = vpack.c.b16 %v3507, %v3505
    %v3730 = vpack.c.b16 %v3508, %v3506
    %v3731 = vpack.c.b16 %v3511, %v3509
    %v3732 = vpack.c.b16 %v3512, %v3510
    %v3733 = vpack.c.b16 %v3515, %v3513
    %v3734 = vpack.c.b16 %v3516, %v3514
    %v3735 = vpack.c.b16 %v3519, %v3517
    %v3736 = vpack.c.b16 %v3520, %v3518
    %v3737 = vpack.c.b16 %v3523, %v3521
    %v3738 = vpack.c.b16 %v3524, %v3522
    %v3739 = vpack.c.b16 %v3527, %v3525
    %v3740 = vpack.c.b16 %v3528, %v3526
    %v3741 = vpack.c.b16 %v3531, %v3529
    %v3742 = vpack.c.b16 %v3532, %v3530
    %v3743 = vpack.c.b16 %v3535, %v3533
    %v3744 = vpack.c.b16 %v3536, %v3534
    %v3745 = vpack.c.b16 %v3539, %v3537
    %v3746 = vpack.c.b16 %v3540, %v3538
    %v3747 = vpack.c.b16 %v3543, %v3541
    %v3748 = vpack.c.b16 %v3544, %v3542
    %v3749 = vpack.c.b16 %v3547, %v3545
    %v3750 = vpack.c.b16 %v3548, %v3546
    %v3751 = vpack.c.b16 %v3551, %v3549
    %v3752 = vpack.c.b16 %v3552, %v3550
    %v3753 = vpack.c.b16 %v3555, %v3553
    %v3754 = vpack.c.b16 %v3556, %v3554
    %v3755 = vpack.c.b16 %v3559, %v3557
    %v3756 = vpack.c.b16 %v3560, %v3558
    %v3757 = vpack.c.b16 %v3563, %v3561
    %v3758 = vpack.c.b16 %v3564, %v3562
    %v3759 = vpack.c.b16 %v3567, %v3565
    %v3760 = vpack.c.b16 %v3568, %v3566
    %v3761 = vpack.c.b16 %v3571, %v3569
    %v3762 = vpack.c.b16 %v3572, %v3570
    %v3763 = vpack.c.b16 %v3575, %v3573
    %v3764 = vpack.c.b16 %v3576, %v3574
    %v3765 = vpack.c.b16 %v3579, %v3577
    %v3766 = vpack.c.b16 %v3580, %v3578
    %v3767 = vpack.c.b16 %v3583, %v3581
    %v3768 = vpack.c.b16 %v3584, %v3582
    %v3769 = vpack.c.b16 %v3587, %v3585
    %v3770 = vpack.c.b16 %v3588, %v3586
    %v3771 = vpack.c.b16 %v3591, %v3589
    %v3772 = vpack.c.b16 %v3592, %v3590
    %v3773 = vpack.c.b16 %v3595, %v3593
    %v3774 = vpack.c.b16 %v3596, %v3594
    %v3775 = vpack.c.b16 %v3599, %v3597
    %v3776 = vpack.c.b16 %v3600, %v3598
    %v3777 = vpack.c.b16 %v3603, %v3601
    %v3778 = vpack.c.b16 %v3604, %v3602
    %v3779 = vpack.c.b16 %v3607, %v3605
    %v3780 = vpack.c.b16 %v3608, %v3606
    %v3781 = vpack.c.b16 %v3611, %v3609
    %v3782 = vpack.c.b16 %v3612, %v3610
    %v3783 = vpack.c.b16 %v3615, %v3613
    %v3784 = vpack.c.b16 %v3616, %v3614
    %v3785 = vpack.c.b16 %v3619, %v3617
    %v3786 = vpack.c.b16 %v3620, %v3618
    %v3787 = vpack.c.b16 %v3623, %v3621
    %v3788 = vpack.c.b16 %v3624, %v3622
    %v3789 = vpack.c.b16 %v3627, %v3625
    %v3790 = vpack.c.b16 %v3628, %v3626
    %v3791 = vpack.c.b16 %v3631, %v3629
    %v3792 = vpack.c.b16 %v3632, %v3630
    %v3793 = vpack.c.b16 %v3635, %v3633
    %v3794 = vpack.c.b16 %v3636, %v3634
    %v3795 = vpack.c.b16 %v3639, %v3637
    %v3796 = vpack.c.b16 %v3640, %v3638
    %v3797 = vpack.c.b16 %v3643, %v3641
    %v3798 = vpack.c.b16 %v3644, %v3642
    %v3799 = vpack.c.b16 %v3647, %v3645
    %v3800 = vpack.c.b16 %v3648, %v3646
    %v3801 = vpack.c.b16 %v3651, %v3649
    %v3802 = vpack.c.b16 %v3652, %v3650
    %v3803 = vpack.c.b16 %v3655, %v3653
    %v3804 = vpack.c.b16 %v3656, %v3654
    %v3805 = vpack.c.b16 %v3659, %v3657
    %v3806 = vpack.c.b16 %v3660, %v3658
    %v3807 = vpack.c.b16 %v3663, %v3661
    %v3808 = vpack.c.b16 %v3664, %v3662
    %v3809 = vpack.c.b16 %v3667, %v3665
    %v3810 = vpack.c.b16 %v3668, %v3666
    %v3811 = vpack.c.b16 %v3671, %v3669
    %v3812 = vpack.c.b16 %v3672, %v3670
    %v3813 = vpack.c.b16 %v3675, %v3673
    %v3814 = vpack.c.b16 %v3676, %v3674
    %v3815 = vpack.c.b16 %v3679, %v3677
    %v3816 = vpack.c.b16 %v3680, %v3678
    %v3817 = vpack.c.b16 %v3683, %v3681
    %v3818 = vpack.c.b16 %v3684, %v3682
    %v3819 = vpack.c.b16 %v3687, %v3685
    %v3820 = vpack.c.b16 %v3688, %v3686
    %v3821 = vpack.c.b16 %v3691, %v3689
    %v3822 = vpack.c.b16 %v3692, %v3690
    %v3823 = vpack.c.b16 %v3695, %v3693
    %v3824 = vpack.c.b16 %v3696, %v3694
    %3953 = vmatprep.subr.bf16.mxu0 %v3698
    %3954 = vmatpush1.bf16.msra.mxu0 %v3697
    %3955 = vmatprep.subr.bf16.mxu0 %v3700
    %3956 = vmatpush1.bf16.msra.mxu0 %v3699
    %3957 = vmatprep.subr.bf16.mxu0 %v3702
    %3958 = vmatpush1.bf16.msra.mxu0 %v3701
    %3959 = vmatprep.subr.bf16.mxu0 %v3704
    %3960 = vmatpush1.bf16.msra.mxu0 %v3703
    %3961 = vmatprep.subr.bf16.mxu0 %v3706
    %3962 = vmatpush1.bf16.msra.mxu0 %v3705
    %3963 = vmatprep.subr.bf16.mxu0 %v3708
    %3964 = vmatpush1.bf16.msra.mxu0 %v3707
    %3965 = vmatprep.subr.bf16.mxu0 %v3710
    %3966 = vmatpush1.bf16.msra.mxu0 %v3709
    %3967 = vmatprep.subr.bf16.mxu0 %v3712
    %3968 = vmatpush1.bf16.msra.mxu0 %v3711
    %3969 = vmatprep.subr.bf16.mxu0 %v3714
    %3970 = vmatpush1.bf16.msra.mxu0 %v3713
    %3971 = vmatprep.subr.bf16.mxu0 %v3716
    %3972 = vmatpush1.bf16.msra.mxu0 %v3715
    %3973 = vmatprep.subr.bf16.mxu0 %v3718
    %3974 = vmatpush1.bf16.msra.mxu0 %v3717
    %3975 = vmatprep.subr.bf16.mxu0 %v3720
    %3976 = vmatpush1.bf16.msra.mxu0 %v3719
    %3977 = vmatprep.subr.bf16.mxu0 %v3722
    %3978 = vmatpush1.bf16.msra.mxu0 %v3721
    %3979 = vmatprep.subr.bf16.mxu0 %v3724
    %3980 = vmatpush1.bf16.msra.mxu0 %v3723
    %3981 = vmatprep.subr.bf16.mxu0 %v3726
    %3982 = vmatpush1.bf16.msra.mxu0 %v3725
    %3983 = vmatprep.subr.bf16.mxu0 %v3728
    %3984 = vmatpush1.bf16.msra.mxu0 %v3727
    %3985 = vmatprep.mubr.bf16.mxu0 %v3166
    %3986 = vmatmul.mubr.bf16.gmra.mrb[0].mxu0 %v3165
    %v3987 = vpop.f32.mrb[0].mxu0
    %v3988 = vadd.f32 %v3306, %v3987
    %v3989 = vpop.f32.mrb[0].mxu0
    %v3990 = vadd.f32 %v3310, %v3989
    %v3991 = vpop.f32.mrb[0].mxu0
    %v3992 = vadd.f32 %v3306, %v3991
    %v3993 = vpop.f32.mrb[0].mxu0
    %v3994 = vadd.f32 %v3310, %v3993
    %3995 = vdwg.mxu0
    %3996 = vmatprep.subr.bf16.mxu0 %v3730
    %3997 = vmatpush1.bf16.msra.mxu0 %v3729
    %3998 = vmatprep.subr.bf16.mxu0 %v3732
    %3999 = vmatpush1.bf16.msra.mxu0 %v3731
    %4000 = vmatprep.subr.bf16.mxu0 %v3734
    %4001 = vmatpush1.bf16.msra.mxu0 %v3733
    %4002 = vmatprep.subr.bf16.mxu0 %v3736
    %4003 = vmatpush1.bf16.msra.mxu0 %v3735
    %4004 = vmatprep.subr.bf16.mxu0 %v3738
    %4005 = vmatpush1.bf16.msra.mxu0 %v3737
    %4006 = vmatprep.subr.bf16.mxu0 %v3740
    %4007 = vmatpush1.bf16.msra.mxu0 %v3739
    %4008 = vmatprep.subr.bf16.mxu0 %v3742
    %4009 = vmatpush1.bf16.msra.mxu0 %v3741
    %4010 = vmatprep.subr.bf16.mxu0 %v3744
    %4011 = vmatpush1.bf16.msra.mxu0 %v3743
    %4012 = vmatprep.subr.bf16.mxu0 %v3746
    %4013 = vmatpush1.bf16.msra.mxu0 %v3745
    %4014 = vmatprep.subr.bf16.mxu0 %v3748
    %4015 = vmatpush1.bf16.msra.mxu0 %v3747
    %4016 = vmatprep.subr.bf16.mxu0 %v3750
    %4017 = vmatpush1.bf16.msra.mxu0 %v3749
    %4018 = vmatprep.subr.bf16.mxu0 %v3752
    %4019 = vmatpush1.bf16.msra.mxu0 %v3751
    %4020 = vmatprep.subr.bf16.mxu0 %v3754
    %4021 = vmatpush1.bf16.msra.mxu0 %v3753
    %4022 = vmatprep.subr.bf16.mxu0 %v3756
    %4023 = vmatpush1.bf16.msra.mxu0 %v3755
    %4024 = vmatprep.subr.bf16.mxu0 %v3758
    %4025 = vmatpush1.bf16.msra.mxu0 %v3757
    %4026 = vmatprep.subr.bf16.mxu0 %v3760
    %4027 = vmatpush1.bf16.msra.mxu0 %v3759
    %4028 = vmatprep.mubr.bf16.mxu0 %v3168
    %4029 = vmatmul.mubr.bf16.gmra.mrb[0].mxu0 %v3167
    %v4030 = vpop.f32.mrb[0].mxu0
    %v4031 = vadd.f32 %v3988, %v4030
    %v4032 = vpop.f32.mrb[0].mxu0
    %v4033 = vadd.f32 %v3990, %v4032
    %v4034 = vpop.f32.mrb[0].mxu0
    %v4035 = vadd.f32 %v3992, %v4034
    %v4036 = vpop.f32.mrb[0].mxu0
    %v4037 = vadd.f32 %v3994, %v4036
    %4038 = vdwg.mxu0
    %4039 = vmatprep.subr.bf16.mxu0 %v3762
    %4040 = vmatpush1.bf16.msra.mxu0 %v3761
    %4041 = vmatprep.subr.bf16.mxu0 %v3764
    %4042 = vmatpush1.bf16.msra.mxu0 %v3763
    %4043 = vmatprep.subr.bf16.mxu0 %v3766
    %4044 = vmatpush1.bf16.msra.mxu0 %v3765
    %4045 = vmatprep.subr.bf16.mxu0 %v3768
    %4046 = vmatpush1.bf16.msra.mxu0 %v3767
    %4047 = vmatprep.subr.bf16.mxu0 %v3770
    %4048 = vmatpush1.bf16.msra.mxu0 %v3769
    %4049 = vmatprep.subr.bf16.mxu0 %v3772
    %4050 = vmatpush1.bf16.msra.mxu0 %v3771
    %4051 = vmatprep.subr.bf16.mxu0 %v3774
    %4052 = vmatpush1.bf16.msra.mxu0 %v3773
    %4053 = vmatprep.subr.bf16.mxu0 %v3776
    %4054 = vmatpush1.bf16.msra.mxu0 %v3775
    %4055 = vmatprep.subr.bf16.mxu0 %v3778
    %4056 = vmatpush1.bf16.msra.mxu0 %v3777
    %4057 = vmatprep.subr.bf16.mxu0 %v3780
    %4058 = vmatpush1.bf16.msra.mxu0 %v3779
    %4059 = vmatprep.subr.bf16.mxu0 %v3782
    %4060 = vmatpush1.bf16.msra.mxu0 %v3781
    %4061 = vmatprep.subr.bf16.mxu0 %v3784
    %4062 = vmatpush1.bf16.msra.mxu0 %v3783
    %4063 = vmatprep.subr.bf16.mxu0 %v3786
    %4064 = vmatpush1.bf16.msra.mxu0 %v3785
    %4065 = vmatprep.subr.bf16.mxu0 %v3788
    %4066 = vmatpush1.bf16.msra.mxu0 %v3787
    %4067 = vmatprep.subr.bf16.mxu0 %v3790
    %4068 = vmatpush1.bf16.msra.mxu0 %v3789
    %4069 = vmatprep.subr.bf16.mxu0 %v3792
    %4070 = vmatpush1.bf16.msra.mxu0 %v3791
    %4071 = vmatprep.mubr.bf16.mxu0 %v3170
    %4072 = vmatmul.mubr.bf16.gmra.mrb[0].mxu0 %v3169
    %v4073 = vpop.f32.mrb[0].mxu0
    %v4074 = vadd.f32 %v4031, %v4073
    %v4075 = vpop.f32.mrb[0].mxu0
    %v4076 = vadd.f32 %v4033, %v4075
    %v4077 = vpop.f32.mrb[0].mxu0
    %v4078 = vadd.f32 %v4035, %v4077
    %v4079 = vpop.f32.mrb[0].mxu0
    %v4080 = vadd.f32 %v4037, %v4079
    %4081 = vdwg.mxu0
    %4082 = vmatprep.subr.bf16.mxu0 %v3794
    %4083 = vmatpush1.bf16.msra.mxu0 %v3793
    %4084 = vmatprep.subr.bf16.mxu0 %v3796
    %4085 = vmatpush1.bf16.msra.mxu0 %v3795
    %4086 = vmatprep.subr.bf16.mxu0 %v3798
    %4087 = vmatpush1.bf16.msra.mxu0 %v3797
    %4088 = vmatprep.subr.bf16.mxu0 %v3800
    %4089 = vmatpush1.bf16.msra.mxu0 %v3799
    %4090 = vmatprep.subr.bf16.mxu0 %v3802
    %4091 = vmatpush1.bf16.msra.mxu0 %v3801
    %4092 = vmatprep.subr.bf16.mxu0 %v3804
    %4093 = vmatpush1.bf16.msra.mxu0 %v3803
    %4094 = vmatprep.subr.bf16.mxu0 %v3806
    %4095 = vmatpush1.bf16.msra.mxu0 %v3805
    %4096 = vmatprep.subr.bf16.mxu0 %v3808
    %4097 = vmatpush1.bf16.msra.mxu0 %v3807
    %4098 = vmatprep.subr.bf16.mxu0 %v3810
    %4099 = vmatpush1.bf16.msra.mxu0 %v3809
    %4100 = vmatprep.subr.bf16.mxu0 %v3812
    %4101 = vmatpush1.bf16.msra.mxu0 %v3811
    %4102 = vmatprep.subr.bf16.mxu0 %v3814
    %4103 = vmatpush1.bf16.msra.mxu0 %v3813
    %4104 = vmatprep.subr.bf16.mxu0 %v3816
    %4105 = vmatpush1.bf16.msra.mxu0 %v3815
    %4106 = vmatprep.subr.bf16.mxu0 %v3818
    %4107 = vmatpush1.bf16.msra.mxu0 %v3817
    %4108 = vmatprep.subr.bf16.mxu0 %v3820
    %4109 = vmatpush1.bf16.msra.mxu0 %v3819
    %4110 = vmatprep.subr.bf16.mxu0 %v3822
    %4111 = vmatpush1.bf16.msra.mxu0 %v3821
    %4112 = vmatprep.subr.bf16.mxu0 %v3824
    %4113 = vmatpush1.bf16.msra.mxu0 %v3823
    %4114 = vmatprep.mubr.bf16.mxu0 %v3172
    %4115 = vmatmul.mubr.bf16.gmra.mrb[0].mxu0 %v3171
    %v4116 = vpop.f32.mrb[0].mxu0
    %v4117 = vadd.f32 %v4074, %v4116
    %v4118 = vpop.f32.mrb[0].mxu0
    %v4119 = vadd.f32 %v4076, %v4118
    %v4120 = vpop.f32.mrb[0].mxu0
    %v4121 = vadd.f32 %v4078, %v4120
    %v4122 = vpop.f32.mrb[0].mxu0
    %v4123 = vadd.f32 %v4080, %v4122
    %4124 = vdwg.mxu0
    %v4125 = vadd.f32 %v2097, %v4117
    %v4126 = vadd.f32 %v2098, %v4119
    %v4127 = vadd.f32 %v2099, %v4121
    %v4128 = vadd.f32 %v2100, %v4123
    %4129 = vst [vmem:[#allocation14] sm:$0xff] %v4125
    %4130 = vst [vmem:[#allocation14 + $0x8] sm:$0xff] %v4126
    %4131 = vst [vmem:[#allocation14 + $0x10] sm:$0xff] %v4127
    %4132 = vst [vmem:[#allocation14 + $0x18] sm:$0xff] %v4128
    // Predicated region
    $region82: #{tpu_custom_call.1} parent=1 // pred_check
      _
    $region83: #{tpu_custom_call.1} parent=1 // pred_check_branch
      %4134 = sbr.rel (0) target = $region85
    $region84: #{tpu_custom_call.1} parent=1 // pred_region
      %s4136 = ssub.s32 512, 512
      %4137 = vsyncadd [#allocation4], %s4136
      %s4138 = sshll.u32 [#allocation14], 4
      %s4139 = int_to_ptr.vmem [resolvable:$true] %s4138
      %4144 = dma.vmem_to_hbm [thread:$0]  %s4139, 512, %s13, [#allocation4], 256, 256, 16
    $region85: #{tpu_custom_call.1} parent=1 // pred_fallthru
      _
    // Predicated region
    $region86: #{tpu_custom_call.1} parent=1 // pred_check
      _
    $region87: #{tpu_custom_call.1} parent=1 // pred_check_branch
      %4146 = sbr.rel (0) target = $region89
    $region88: #{tpu_custom_call.1} parent=1 // pred_region
      %4147 = dma.done [#allocation4], 512
    $region89: #{tpu_custom_call.1} parent=1 // pred_fallthru
      _
    %4148 = vsyncpa [#allocation3], 1
    %4149 = vsyncpa [#allocation6], 1
    %4150 = vsyncpa [#allocation9], 1
    %4151 = vsyncpa [#allocation12], 1
    %4152 = vsyncpa [#allocation4], 1

</llo_original>
